<compile_context>
chip_gen: v7x
topology: tpu7x:2x2x1
jax: 0.10.0
libtpu: 0.0.40
codegen_flags: <defaults>
</compile_context>

<pallas_src>
import functools

import jax
import jax.numpy as jnp
from jax import lax
from jax.experimental import pallas as pl
from jax.experimental.pallas import tpu as pltpu


# Explicit scoped-VMEM budget: safe headroom on v5e/v6e (128 MiB) and v7x (64 MiB).
_VMEM_LIMIT = 32 * 1024 * 1024


def _pad_to(n, m):
    return ((n + m - 1) // m) * m


def _pick_tile(n, candidates):
    for c in candidates:
        if n % c == 0:
            return c
    return n


# ----------------------------- Pallas kernels ------------------------------

def _feat_kernel(x_ref, w_ref, o_ref):
    # One row tile of X @ W_cat.  W_cat packs the GCN weights, every GAT head
    # weight, and the folded per-head attention projection columns, so the
    # whole per-layer feature transform (and the attention scores) run in one
    # wide MXU matmul.  Output stored in bf16 (MXU-ready for the encoder).
    o_ref[...] = jnp.dot(x_ref[...], w_ref[...],
                         preferred_element_type=jnp.float32).astype(jnp.bfloat16)


def _feat_matmul(x, w, *, tm):
    n, d = x.shape
    wout = w.shape[1]
    return pl.pallas_call(
        _feat_kernel,
        out_shape=jax.ShapeDtypeStruct((n, wout), jnp.bfloat16),
        grid=(n // tm,),
        in_specs=[pl.BlockSpec((tm, d), lambda i: (i, 0)),
                  pl.BlockSpec((d, wout), lambda i: (0, 0))],
        out_specs=pl.BlockSpec((tm, wout), lambda i: (i, 0)),
        compiler_params=pltpu.CompilerParams(
            dimension_semantics=("parallel",),
            vmem_limit_bytes=_VMEM_LIMIT),
    )(x, w)


def _encode_kernel(an_ref, xw_ref, src_ref, b_ref, o_ref, *,
                   heads, f, h_gcn, mean_heads, tm, pad_cols):
    """Fused GCN + multi-head GAT for one row tile of nodes.

    an_ref  : (tm, Np) bf16  GCN-normalized adjacency row tile (mask derived
                             from it: a_norm > 0  <=>  edge or self loop)
    xw_ref  : (Np, W)  bf16  pre-transformed features, all nodes (resident).
                             cols [0:h_gcn] = GCN, [h_gcn+h*f : h_gcn+(h+1)*f]
                             = GAT head h, then 2*heads folded score columns.
    src_ref : (heads, Np) f32  precomputed per-node src attention scores
    b_ref   : (1, out_w_pad) f32  packed, zero-padded bias [gcn | gat | 0...]
    o_ref   : (tm, out_w_pad) f32 packed [GCN | GAT | 0-pad] row tile
    """
    a_norm = an_ref[...]                                   # (tm, Np) bf16
    mask = a_norm > 0                                      # same sparsity as A_hat
    xw_all = xw_ref[...]                                   # (Np, W)  bf16

    row0 = pl.multiple_of(pl.program_id(0) * tm, tm)
    xw_q = xw_ref[pl.ds(row0, tm), :]                      # (tm, W) query rows

    # -------- GCN branch: A_norm_tile @ XW_gcn (bf16 MXU, f32 accumulate) ---
    gcn_out = jnp.dot(a_norm, xw_all[:, :h_gcn],
                      preferred_element_type=jnp.float32)  # (tm, h_gcn)

    # -------- GAT branch: masked per-head softmax attention -----------------
    score_off = h_gcn + heads * f
    neg = jnp.float32(-1e30)
    head_outs = []
    for h in range(heads):                                 # static unroll
        lo = h_gcn + h * f
        xh_all = xw_all[:, lo:lo + f]                      # (Np, f) bf16
        a_src = src_ref[h:h + 1, :]                        # (1, Np) f32
        a_dst = xw_q[:, score_off + heads + h:
                        score_off + heads + h + 1].astype(jnp.float32)  # (tm,1)

        # e[i, j] = LeakyReLU(a_dst[i] + a_src[j]), slope 0.2 (PyG default)
        e = a_dst + a_src                                  # (tm, Np) f32
        e = jnp.where(e > 0, e, 0.2 * e)
        e = jnp.where(mask, e, neg)
        e = e - jnp.max(e, axis=1, keepdims=True)
        p = jnp.exp(e)                                     # masked -> exact 0.0
        denom = jnp.maximum(jnp.sum(p, axis=1, keepdims=True), 1e-20)
        attn = p * pl.reciprocal(denom, approx=True)       # EUP, not VPU div

        head_outs.append(
            jnp.dot(attn.astype(jnp.bfloat16), xh_all,
                    preferred_element_type=jnp.float32))   # (tm, f)

    if mean_heads:
        gat_out = sum(head_outs) * jnp.float32(1.0 / heads)   # (tm, f)
    else:
        gat_out = jnp.concatenate(head_outs, axis=1)          # (tm, heads*f)

    # Single lane-dense store of the 128-lane-padded [GCN | GAT | 0] tile.
    parts = [gcn_out, gat_out]
    if pad_cols:
        parts.append(jnp.zeros((tm, pad_cols), jnp.float32))
    o_ref[...] = jnp.concatenate(parts, axis=1) + b_ref[...]


def _encode_layer(a_norm, xw, src_scores, bias_p, *, heads, f, h_gcn,
                  mean_heads, tm, pad_cols):
    n_pad, w_tot = xw.shape
    out_w_pad = bias_p.shape[1]
    kernel = functools.partial(_encode_kernel, heads=heads, f=f, h_gcn=h_gcn,
                               mean_heads=mean_heads, tm=tm, pad_cols=pad_cols)
    return pl.pallas_call(
        kernel,
        out_shape=jax.ShapeDtypeStruct((n_pad, out_w_pad), jnp.float32),
        grid=(n_pad // tm,),
        in_specs=[
            pl.BlockSpec((tm, n_pad), lambda i: (i, 0)),       # A_norm row tile
            pl.BlockSpec((n_pad, w_tot), lambda i: (0, 0)),    # XW all nodes (bf16)
            pl.BlockSpec((heads, n_pad), lambda i: (0, 0)),    # src scores
            pl.BlockSpec((1, out_w_pad), lambda i: (0, 0)),    # packed bias
        ],
        out_specs=pl.BlockSpec((tm, out_w_pad), lambda i: (i, 0)),
        compiler_params=pltpu.CompilerParams(
            dimension_semantics=("parallel",),
            vmem_limit_bytes=_VMEM_LIMIT),
    )(a_norm, xw, src_scores, bias_p)


def _decoder_kernel(zi_ref, zj_ref, o_ref):
    # out[i, j] = sigmoid(<z_i, z_j>) — contract the feature dim directly.
    g = lax.dot_general(zi_ref[...], zj_ref[...],
                        dimension_numbers=(((1,), (1,)), ((), ())),
                        preferred_element_type=jnp.float32)
    o_ref[...] = jax.nn.sigmoid(g)


def inner_product_decoder(z, *, tile):
    n, h = z.shape
    return pl.pallas_call(
        _decoder_kernel,
        out_shape=jax.ShapeDtypeStruct((n, n), jnp.float32),
        grid=(n // tile, n // tile),
        in_specs=[pl.BlockSpec((tile, h), lambda i, j: (i, 0)),
                  pl.BlockSpec((tile, h), lambda i, j: (j, 0))],
        out_specs=pl.BlockSpec((tile, tile), lambda i, j: (i, j)),
        compiler_params=pltpu.CompilerParams(
            dimension_semantics=("parallel", "parallel"),
            vmem_limit_bytes=_VMEM_LIMIT),
    )(z, z)


# ------------------------------ glue / model -------------------------------

def build_graph_mats(edge_index, n_pad):
    """Dense bf16 symmetric-GCN-normalized adjacency (self loops included)."""
    # TODO(synk): true sparse per-edge message passing (scatter-add / segment
    # softmax over edge_index) has no clean dense-Pallas equivalent; the graph
    # is densified to an n_pad x n_pad matrix here (exact, but O(N^2) memory).
    src, dst = edge_index[0], edge_index[1]
    a = jnp.zeros((n_pad, n_pad), jnp.float32).at[dst, src].set(1.0)  # j -> i
    a_hat = jnp.maximum(a, jnp.eye(n_pad, dtype=jnp.float32))         # + self loops
    deg = jnp.sum(a_hat, axis=1)                                      # >= 1
    dinv = lax.rsqrt(deg)
    a_norm = dinv[:, None] * a_hat * dinv[None, :]
    # bf16 halves HBM / VMEM traffic; MXU accumulates in f32.  Since deg >= 1,
    # a_norm > 0 exactly where a_hat == 1, so it doubles as the GAT mask.
    return a_norm.astype(jnp.bfloat16)


def _pack_layer(gcn_w, gat_w, asrc, adst):
    """[W_gcn | W_head0..H-1 | W_h@asrc_h cols | W_h@adst_h cols]."""
    d = gcn_w.shape[0]
    heads, _, f = gat_w.shape
    w_gat = jnp.transpose(gat_w, (1, 0, 2)).reshape(d, heads * f)
    w_src = jnp.einsum("hdf,hf->dh", gat_w, asrc)   # (d, heads)
    w_dst = jnp.einsum("hdf,hf->dh", gat_w, adst)   # (d, heads)
    return jnp.concatenate([gcn_w, w_gat, w_src, w_dst], axis=1)


def init_params(key, in_dim, h1, h2, heads):
    ks = jax.random.split(key, 8)
    s = 0.2
    mul = (h1 + heads * h1) // h1              # == heads + 1
    cat_dim = mul * h1
    return {
        # GCNConv(in_dim, h1)
        "gcn1_w": s * jax.random.normal(ks[0], (in_dim, h1), jnp.float32),
        "gcn1_b": jnp.zeros((h1,), jnp.float32),
        # GATConv(in_dim, h1, heads, concat=True)
        "gat1_w": s * jax.random.normal(ks[1], (heads, in_dim, h1), jnp.float32),
        "gat1_asrc": s * jax.random.normal(ks[2], (heads, h1), jnp.float32),
        "gat1_adst": s * jax.random.normal(ks[3], (heads, h1), jnp.float32),
        "gat1_b": jnp.zeros((heads * h1,), jnp.float32),
        # GCNConv(cat_dim, h2)
        "mu_w": s * jax.random.normal(ks[4], (cat_dim, h2), jnp.float32),
        "mu_b": jnp.zeros((h2,), jnp.float32),
        # GATConv(cat_dim, h2, heads, concat=False)
        "lv_w": s * jax.random.normal(ks[5], (heads, cat_dim, h2), jnp.float32),
        "lv_asrc": s * jax.random.normal(ks[6], (heads, h2), jnp.float32),
        "lv_adst": s * jax.random.normal(ks[7], (heads, h2), jnp.float32),
        "lv_b": jnp.zeros((h2,), jnp.float32),
    }


@functools.partial(jax.jit, static_argnames=("training",))
def gcn_merge_forward(params, x, edge_index, noise_key, training=True):
    n, in_dim = x.shape
    heads, _, h1 = params["gat1_w"].shape
    h2 = params["mu_w"].shape[1]

    n_pad = max(_pad_to(n, 128), 128)               # zero-pad nodes, never tm=N
    tm = 128                                        # encoder row tile
    tm_feat = _pick_tile(n_pad, (1024, 512, 256, 128))
    t_dec = _pick_tile(n_pad, (512, 256, 128))

    x_p = jnp.pad(x, ((0, n_pad - n), (0, 0)))
    a_norm = build_graph_mats(edge_index, n_pad)

    # ---- encoder layer 1: h_cat = [GCN(x) | GAT(x, concat heads)] ----
    w1 = _pack_layer(params["gcn1_w"], params["gat1_w"],
                     params["gat1_asrc"], params["gat1_adst"])
    xw1 = _feat_matmul(x_p, w1, tm=tm_feat)                     # bf16 (Np, W1)
    off1 = h1 + heads * h1
    src1 = xw1[:, off1:off1 + heads].astype(jnp.float32).T      # (heads, Np)
    out_w1 = h1 + heads * h1
    out_w1_pad = _pad_to(out_w1, 128)
    b1 = jnp.pad(jnp.concatenate([params["gcn1_b"], params["gat1_b"]]),
                 (0, out_w1_pad - out_w1)).reshape(1, out_w1_pad)
    h_cat_p = _encode_layer(a_norm, xw1, src1, b1,
                            heads=heads, f=h1, h_gcn=h1, mean_heads=False,
                            tm=tm, pad_cols=out_w1_pad - out_w1)
    h_cat = h_cat_p[:, :out_w1]                                 # (Np, (heads+1)*h1)

    # ---- encoder layer 2: mu = GCN(h_cat), logvar = GAT(h_cat, mean) ----
    w2 = _pack_layer(params["mu_w"], params["lv_w"],
                     params["lv_asrc"], params["lv_adst"])
    xw2 = _feat_matmul(h_cat, w2, tm=tm_feat)                   # bf16 (Np, W2)
    off2 = h2 + heads * h2
    src2 = xw2[:, off2:off2 + heads].astype(jnp.float32).T      # (heads, Np)
    out_w2 = 2 * h2
    out_w2_pad = _pad_to(out_w2, 128)
    b2 = jnp.pad(jnp.concatenate([params["mu_b"], params["lv_b"]]),
                 (0, out_w2_pad - out_w2)).reshape(1, out_w2_pad)
    out2 = _encode_layer(a_norm, xw2, src2, b2,
                         heads=heads, f=h2, h_gcn=h2, mean_heads=True,
                         tm=tm, pad_cols=out_w2_pad - out_w2)
    mu_p = out2[:, :h2]
    logvar_p = out2[:, h2:2 * h2]

    # reparametrize (module passes logvar as log-std)
    if training:
        eps = jax.random.normal(noise_key, logvar_p.shape, jnp.float32)
        z = mu_p + eps * jnp.exp(logvar_p)
    else:
        z = mu_p

    adj_rec = inner_product_decoder(z, tile=t_dec)              # (Np, Np)
    return adj_rec[:n, :n], mu_p[:n], logvar_p[:n]


# --------------------------------- main -------------------------------------

if __name__ == "__main__":
    N = 256             # number of nodes (2 row tiles of 128)
    IN_DIM = 8          # input_feat_dim
    H1 = 16             # hidden_dim1
    H2 = 8              # hidden_dim2
    HEADS = 2           # num_heads

    root = jax.random.PRNGKey(0)
    k_x, k_p, k_n = jax.random.split(root, 3)

    x = jax.random.normal(k_x, (N, IN_DIM), jnp.float32)

    # simple bidirectional ring graph: (2, 2N) edge_index
    idx = jnp.arange(N, dtype=jnp.int32)
    nxt = (idx + 1) % N
    edge_index = jnp.stack([jnp.concatenate([idx, nxt]),
                            jnp.concatenate([nxt, idx])], axis=0)

    params = init_params(k_p, IN_DIM, H1, H2, HEADS)

    adj_rec, mu, logvar = gcn_merge_forward(params, x, edge_index, k_n,
                                            training=True)
    jax.block_until_ready((adj_rec, mu, logvar))

    assert adj_rec.shape == (N, N)
    assert mu.shape == (N, H2)
    assert logvar.shape == (N, H2)
    assert bool(jnp.all(jnp.isfinite(adj_rec)))
    assert bool(jnp.all(jnp.isfinite(mu)))
    assert bool(jnp.all(jnp.isfinite(logvar)))
    print("KERNEL_OK")
</pallas_src>

<mosaic_0001>
module attributes {stable_mosaic.version = 11 : i64} {
  func.func @_feat_kernel(%arg0: i32, %arg1: memref<256x8xf32, #tpu.memory_space<vmem>>, %arg2: memref<8x52xf32, #tpu.memory_space<vmem>>, %arg3: memref<256x52xbf16, #tpu.memory_space<vmem>>) attributes {dimension_semantics = [#tpu.dimension_semantics<parallel>], iteration_bounds = array<i64: 1>, scalar_prefetch = 0 : i64, scratch_operands = 0 : i64, tpu.core_type = #tpu.core_type<tc>, window_params = [{transform_indices = @transform_0, window_bounds = array<i64: 256, 8>}, {pipeline_mode = #tpu.pipeline_mode<synchronous>, transform_indices = @transform_1, window_bounds = array<i64: 8, 52>}, {transform_indices = @transform_2, window_bounds = array<i64: 256, 52>}]} {
    %c0 = arith.constant 0 : index
    %c0_0 = arith.constant 0 : index
    %0 = vector.load %arg1[%c0, %c0_0] : memref<256x8xf32, #tpu.memory_space<vmem>>, vector<256x8xf32>
    %c0_1 = arith.constant 0 : index
    %c0_2 = arith.constant 0 : index
    %1 = vector.load %arg2[%c0_1, %c0_2] : memref<8x52xf32, #tpu.memory_space<vmem>>, vector<8x52xf32>
    %cst = arith.constant dense<0.000000e+00> : vector<256x52xf32>
    %2 = tpu.matmul %0, %1, %cst {dimension_numbers = #tpu.dot_dimension_numbers<[1], [0], [0], [1], [0, 0, 1, 1], [], []>} : vector<256x8xf32>, vector<8x52xf32>, vector<256x52xf32> -> vector<256x52xf32>
    %3 = arith.truncf %2 : vector<256x52xf32> to vector<256x52xbf16>
    %c0_3 = arith.constant 0 : index
    %c0_4 = arith.constant 0 : index
    %4 = vector.load %arg3[%c0_3, %c0_4] : memref<256x52xbf16, #tpu.memory_space<vmem>>, vector<256x52xbf16>
    tpu.vector_store %arg3[%c0_3, %c0_4], %3 {strides = array<i32>} : memref<256x52xbf16, #tpu.memory_space<vmem>>, vector<256x52xbf16>,
    return
  }
  func.func @transform_0(%arg0: i32) -> (i32, i32) {
    %c0_i32 = arith.constant 0 : i32
    %c0_i32_0 = arith.constant 0 : i32
    return %arg0, %c0_i32 : i32, i32
  }
  func.func @transform_1(%arg0: i32) -> (i32, i32) {
    %c0_i32 = arith.constant 0 : i32
    %c0_i32_0 = arith.constant 0 : i32
    %c0_i32_1 = arith.constant 0 : i32
    return %c0_i32, %c0_i32_0 : i32, i32
  }
  func.func @transform_2(%arg0: i32) -> (i32, i32) {
    %c0_i32 = arith.constant 0 : i32
    %c0_i32_0 = arith.constant 0 : i32
    return %arg0, %c0_i32 : i32, i32
  }
}

module attributes {stable_mosaic.version = 11 : i64} {
  func.func @_encode_kernel(%arg0: i32, %arg1: memref<128x256xbf16, #tpu.memory_space<vmem>>, %arg2: memref<256x52xbf16, #tpu.memory_space<vmem>>, %arg3: memref<2x256xf32, #tpu.memory_space<vmem>>, %arg4: memref<1x128xf32, #tpu.memory_space<vmem>>, %arg5: memref<128x128xf32, #tpu.memory_space<vmem>>) attributes {dimension_semantics = [#tpu.dimension_semantics<parallel>], iteration_bounds = array<i64: 2>, scalar_prefetch = 0 : i64, scratch_operands = 0 : i64, tpu.core_type = #tpu.core_type<tc>, window_params = [{transform_indices = @transform_0, window_bounds = array<i64: 128, 256>}, {pipeline_mode = #tpu.pipeline_mode<synchronous>, transform_indices = @transform_1, window_bounds = array<i64: 256, 52>}, {pipeline_mode = #tpu.pipeline_mode<synchronous>, transform_indices = @transform_2, window_bounds = array<i64: 2, 256>}, {pipeline_mode = #tpu.pipeline_mode<synchronous>, transform_indices = @transform_3, window_bounds = array<i64: 1, 128>}, {transform_indices = @transform_4, window_bounds = array<i64: 128, 128>}]} {
    %c0 = arith.constant 0 : index
    %c0_0 = arith.constant 0 : index
    %0 = vector.load %arg1[%c0, %c0_0] : memref<128x256xbf16, #tpu.memory_space<vmem>>, vector<128x256xbf16>
    %cst = arith.constant 0.000000e+00 : bf16
    %1 = vector.broadcast %cst : bf16 to vector<128x256xbf16>
    %2 = arith.cmpf ogt, %0, %1 : vector<128x256xbf16>
    %c0_1 = arith.constant 0 : index
    %c0_2 = arith.constant 0 : index
    %3 = vector.load %arg2[%c0_1, %c0_2] : memref<256x52xbf16, #tpu.memory_space<vmem>>, vector<256x52xbf16>
    %c128_i32 = arith.constant 128 : i32
    %4 = arith.muli %arg0, %c128_i32 : i32
    %5 = tpu.assume_multiple %4, 128 : i32
    %6 = arith.index_cast %5 : i32 to index
    %c0_3 = arith.constant 0 : index
    %7 = vector.load %arg2[%6, %c0_3] : memref<256x52xbf16, #tpu.memory_space<vmem>>, vector<128x52xbf16>
    %8 = vector.extract_strided_slice %3 {offsets = [0, 0], sizes = [256, 16], strides = [1, 1]} : vector<256x52xbf16> to vector<256x16xbf16>
    %cst_4 = arith.constant dense<0.000000e+00> : vector<128x16xf32>
    %9 = tpu.matmul %0, %8, %cst_4 {dimension_numbers = #tpu.dot_dimension_numbers<[1], [0], [0], [1], [0, 0, 1, 1], [], []>} : vector<128x256xbf16>, vector<256x16xbf16>, vector<128x16xf32> -> vector<128x16xf32>
    %10 = vector.extract_strided_slice %3 {offsets = [0, 16], sizes = [256, 16], strides = [1, 1]} : vector<256x52xbf16> to vector<256x16xbf16>
    %c0_5 = arith.constant 0 : index
    %c0_6 = arith.constant 0 : index
    %11 = vector.load %arg3[%c0_5, %c0_6] : memref<2x256xf32, #tpu.memory_space<vmem>>, vector<1x256xf32>
    %12 = vector.extract_strided_slice %7 {offsets = [0, 50], sizes = [128, 1], strides = [1, 1]} : vector<128x52xbf16> to vector<128x1xbf16>
    %13 = arith.extf %12 : vector<128x1xbf16> to vector<128x1xf32>
    %14 = vector.broadcast %13 : vector<128x1xf32> to vector<128x256xf32>
    %15 = vector.broadcast %11 : vector<1x256xf32> to vector<128x256xf32>
    %16 = arith.addf %14, %15 : vector<128x256xf32>
    %cst_7 = arith.constant 0.000000e+00 : f32
    %17 = vector.broadcast %cst_7 : f32 to vector<128x256xf32>
    %18 = arith.cmpf ogt, %16, %17 : vector<128x256xf32>
    %cst_8 = arith.constant 2.000000e-01 : f32
    %19 = vector.broadcast %cst_8 : f32 to vector<128x256xf32>
    %20 = arith.mulf %19, %16 : vector<128x256xf32>
    %21 = arith.select %18, %16, %20 : vector<128x256xi1>, vector<128x256xf32>
    %cst_9 = arith.constant -1.000000e+30 : f32
    %22 = vector.broadcast %cst_9 : f32 to vector<128x256xf32>
    %23 = arith.select %2, %21, %22 : vector<128x256xi1>, vector<128x256xf32>
    %cst_10 = arith.constant dense<0xFF800000> : vector<128xf32>
    %24 = vector.multi_reduction <maximumf>, %23, %cst_10 [1] : vector<128x256xf32> to vector<128xf32>
    %25 = vector.shape_cast %24 : vector<128xf32> to vector<128x1xf32>
    %26 = vector.broadcast %25 : vector<128x1xf32> to vector<128x256xf32>
    %27 = arith.subf %23, %26 : vector<128x256xf32>
    %28 = math.exp %27 : vector<128x256xf32>
    %cst_11 = arith.constant dense<0.000000e+00> : vector<128xf32>
    %29 = vector.multi_reduction <add>, %28, %cst_11 [1] : vector<128x256xf32> to vector<128xf32>
    %30 = vector.shape_cast %29 : vector<128xf32> to vector<128x1xf32>
    %cst_12 = arith.constant 9.99999968E-21 : f32
    %31 = vector.broadcast %cst_12 : f32 to vector<128x1xf32>
    %32 = arith.maximumf %30, %31 : vector<128x1xf32>
    %33 = tpu.reciprocal %32 {approx = true} : vector<128x1xf32> -> vector<128x1xf32>
    %34 = vector.broadcast %33 : vector<128x1xf32> to vector<128x256xf32>
    %35 = arith.mulf %28, %34 : vector<128x256xf32>
    %36 = arith.truncf %35 : vector<128x256xf32> to vector<128x256xbf16>
    %cst_13 = arith.constant dense<0.000000e+00> : vector<128x16xf32>
    %37 = tpu.matmul %36, %10, %cst_13 {dimension_numbers = #tpu.dot_dimension_numbers<[1], [0], [0], [1], [0, 0, 1, 1], [], []>} : vector<128x256xbf16>, vector<256x16xbf16>, vector<128x16xf32> -> vector<128x16xf32>
    %38 = vector.extract_strided_slice %3 {offsets = [0, 32], sizes = [256, 16], strides = [1, 1]} : vector<256x52xbf16> to vector<256x16xbf16>
    %c1 = arith.constant 1 : index
    %c0_14 = arith.constant 0 : index
    %39 = vector.load %arg3[%c1, %c0_14] : memref<2x256xf32, #tpu.memory_space<vmem>>, vector<1x256xf32>
    %40 = vector.extract_strided_slice %7 {offsets = [0, 51], sizes = [128, 1], strides = [1, 1]} : vector<128x52xbf16> to vector<128x1xbf16>
    %41 = arith.extf %40 : vector<128x1xbf16> to vector<128x1xf32>
    %42 = vector.broadcast %41 : vector<128x1xf32> to vector<128x256xf32>
    %43 = vector.broadcast %39 : vector<1x256xf32> to vector<128x256xf32>
    %44 = arith.addf %42, %43 : vector<128x256xf32>
    %cst_15 = arith.constant 0.000000e+00 : f32
    %45 = vector.broadcast %cst_15 : f32 to vector<128x256xf32>
    %46 = arith.cmpf ogt, %44, %45 : vector<128x256xf32>
    %cst_16 = arith.constant 2.000000e-01 : f32
    %47 = vector.broadcast %cst_16 : f32 to vector<128x256xf32>
    %48 = arith.mulf %47, %44 : vector<128x256xf32>
    %49 = arith.select %46, %44, %48 : vector<128x256xi1>, vector<128x256xf32>
    %cst_17 = arith.constant -1.000000e+30 : f32
    %50 = vector.broadcast %cst_17 : f32 to vector<128x256xf32>
    %51 = arith.select %2, %49, %50 : vector<128x256xi1>, vector<128x256xf32>
    %cst_18 = arith.constant dense<0xFF800000> : vector<128xf32>
    %52 = vector.multi_reduction <maximumf>, %51, %cst_18 [1] : vector<128x256xf32> to vector<128xf32>
    %53 = vector.shape_cast %52 : vector<128xf32> to vector<128x1xf32>
    %54 = vector.broadcast %53 : vector<128x1xf32> to vector<128x256xf32>
    %55 = arith.subf %51, %54 : vector<128x256xf32>
    %56 = math.exp %55 : vector<128x256xf32>
    %cst_19 = arith.constant dense<0.000000e+00> : vector<128xf32>
    %57 = vector.multi_reduction <add>, %56, %cst_19 [1] : vector<128x256xf32> to vector<128xf32>
    %58 = vector.shape_cast %57 : vector<128xf32> to vector<128x1xf32>
    %cst_20 = arith.constant 9.99999968E-21 : f32
    %59 = vector.broadcast %cst_20 : f32 to vector<128x1xf32>
    %60 = arith.maximumf %58, %59 : vector<128x1xf32>
    %61 = tpu.reciprocal %60 {approx = true} : vector<128x1xf32> -> vector<128x1xf32>
    %62 = vector.broadcast %61 : vector<128x1xf32> to vector<128x256xf32>
    %63 = arith.mulf %56, %62 : vector<128x256xf32>
    %64 = arith.truncf %63 : vector<128x256xf32> to vector<128x256xbf16>
    %cst_21 = arith.constant dense<0.000000e+00> : vector<128x16xf32>
    %65 = tpu.matmul %64, %38, %cst_21 {dimension_numbers = #tpu.dot_dimension_numbers<[1], [0], [0], [1], [0, 0, 1, 1], [], []>} : vector<128x256xbf16>, vector<256x16xbf16>, vector<128x16xf32> -> vector<128x16xf32>
    %66 = tpu.concatenate %37, %65 in 1 : vector<128x16xf32>, vector<128x16xf32> -> vector<128x32xf32>
    %cst_22 = arith.constant 0.000000e+00 : f32
    %67 = vector.broadcast %cst_22 : f32 to vector<128x80xf32>
    %68 = tpu.concatenate %9, %66, %67 in 1 : vector<128x16xf32>, vector<128x32xf32>, vector<128x80xf32> -> vector<128x128xf32>
    %c0_23 = arith.constant 0 : index
    %c0_24 = arith.constant 0 : index
    %69 = vector.load %arg4[%c0_23, %c0_24] : memref<1x128xf32, #tpu.memory_space<vmem>>, vector<1x128xf32>
    %70 = vector.broadcast %69 : vector<1x128xf32> to vector<128x128xf32>
    %71 = arith.addf %68, %70 : vector<128x128xf32>
    %c0_25 = arith.constant 0 : index
    %c0_26 = arith.constant 0 : index
    %72 = vector.load %arg5[%c0_25, %c0_26] : memref<128x128xf32, #tpu.memory_space<vmem>>, vector<128x128xf32>
    tpu.vector_store %arg5[%c0_25, %c0_26], %71 {strides = array<i32>} : memref<128x128xf32, #tpu.memory_space<vmem>>, vector<128x128xf32>,
    return
  }
  func.func @transform_0(%arg0: i32) -> (i32, i32) {
    %c0_i32 = arith.constant 0 : i32
    %c0_i32_0 = arith.constant 0 : i32
    return %arg0, %c0_i32 : i32, i32
  }
  func.func @transform_1(%arg0: i32) -> (i32, i32) {
    %c0_i32 = arith.constant 0 : i32
    %c0_i32_0 = arith.constant 0 : i32
    %c0_i32_1 = arith.constant 0 : i32
    return %c0_i32, %c0_i32_0 : i32, i32
  }
  func.func @transform_2(%arg0: i32) -> (i32, i32) {
    %c0_i32 = arith.constant 0 : i32
    %c0_i32_0 = arith.constant 0 : i32
    %c0_i32_1 = arith.constant 0 : i32
    return %c0_i32, %c0_i32_0 : i32, i32
  }
  func.func @transform_3(%arg0: i32) -> (i32, i32) {
    %c0_i32 = arith.constant 0 : i32
    %c0_i32_0 = arith.constant 0 : i32
    %c0_i32_1 = arith.constant 0 : i32
    return %c0_i32, %c0_i32_0 : i32, i32
  }
  func.func @transform_4(%arg0: i32) -> (i32, i32) {
    %c0_i32 = arith.constant 0 : i32
    %c0_i32_0 = arith.constant 0 : i32
    return %arg0, %c0_i32 : i32, i32
  }
}

module attributes {stable_mosaic.version = 11 : i64} {
  func.func @_feat_kernel(%arg0: i32, %arg1: memref<256x48xf32, #tpu.memory_space<vmem>>, %arg2: memref<48x28xf32, #tpu.memory_space<vmem>>, %arg3: memref<256x28xbf16, #tpu.memory_space<vmem>>) attributes {dimension_semantics = [#tpu.dimension_semantics<parallel>], iteration_bounds = array<i64: 1>, scalar_prefetch = 0 : i64, scratch_operands = 0 : i64, tpu.core_type = #tpu.core_type<tc>, window_params = [{transform_indices = @transform_0, window_bounds = array<i64: 256, 48>}, {pipeline_mode = #tpu.pipeline_mode<synchronous>, transform_indices = @transform_1, window_bounds = array<i64: 48, 28>}, {transform_indices = @transform_2, window_bounds = array<i64: 256, 28>}]} {
    %c0 = arith.constant 0 : index
    %c0_0 = arith.constant 0 : index
    %0 = vector.load %arg1[%c0, %c0_0] : memref<256x48xf32, #tpu.memory_space<vmem>>, vector<256x48xf32>
    %c0_1 = arith.constant 0 : index
    %c0_2 = arith.constant 0 : index
    %1 = vector.load %arg2[%c0_1, %c0_2] : memref<48x28xf32, #tpu.memory_space<vmem>>, vector<48x28xf32>
    %cst = arith.constant dense<0.000000e+00> : vector<256x28xf32>
    %2 = tpu.matmul %0, %1, %cst {dimension_numbers = #tpu.dot_dimension_numbers<[1], [0], [0], [1], [0, 0, 1, 1], [], []>} : vector<256x48xf32>, vector<48x28xf32>, vector<256x28xf32> -> vector<256x28xf32>
    %3 = arith.truncf %2 : vector<256x28xf32> to vector<256x28xbf16>
    %c0_3 = arith.constant 0 : index
    %c0_4 = arith.constant 0 : index
    %4 = vector.load %arg3[%c0_3, %c0_4] : memref<256x28xbf16, #tpu.memory_space<vmem>>, vector<256x28xbf16>
    tpu.vector_store %arg3[%c0_3, %c0_4], %3 {strides = array<i32>} : memref<256x28xbf16, #tpu.memory_space<vmem>>, vector<256x28xbf16>,
    return
  }
  func.func @transform_0(%arg0: i32) -> (i32, i32) {
    %c0_i32 = arith.constant 0 : i32
    %c0_i32_0 = arith.constant 0 : i32
    return %arg0, %c0_i32 : i32, i32
  }
  func.func @transform_1(%arg0: i32) -> (i32, i32) {
    %c0_i32 = arith.constant 0 : i32
    %c0_i32_0 = arith.constant 0 : i32
    %c0_i32_1 = arith.constant 0 : i32
    return %c0_i32, %c0_i32_0 : i32, i32
  }
  func.func @transform_2(%arg0: i32) -> (i32, i32) {
    %c0_i32 = arith.constant 0 : i32
    %c0_i32_0 = arith.constant 0 : i32
    return %arg0, %c0_i32 : i32, i32
  }
}

module attributes {stable_mosaic.version = 11 : i64} {
  func.func @_encode_kernel(%arg0: i32, %arg1: memref<128x256xbf16, #tpu.memory_space<vmem>>, %arg2: memref<256x28xbf16, #tpu.memory_space<vmem>>, %arg3: memref<2x256xf32, #tpu.memory_space<vmem>>, %arg4: memref<1x128xf32, #tpu.memory_space<vmem>>, %arg5: memref<128x128xf32, #tpu.memory_space<vmem>>) attributes {dimension_semantics = [#tpu.dimension_semantics<parallel>], iteration_bounds = array<i64: 2>, scalar_prefetch = 0 : i64, scratch_operands = 0 : i64, tpu.core_type = #tpu.core_type<tc>, window_params = [{transform_indices = @transform_0, window_bounds = array<i64: 128, 256>}, {pipeline_mode = #tpu.pipeline_mode<synchronous>, transform_indices = @transform_1, window_bounds = array<i64: 256, 28>}, {pipeline_mode = #tpu.pipeline_mode<synchronous>, transform_indices = @transform_2, window_bounds = array<i64: 2, 256>}, {pipeline_mode = #tpu.pipeline_mode<synchronous>, transform_indices = @transform_3, window_bounds = array<i64: 1, 128>}, {transform_indices = @transform_4, window_bounds = array<i64: 128, 128>}]} {
    %c0 = arith.constant 0 : index
    %c0_0 = arith.constant 0 : index
    %0 = vector.load %arg1[%c0, %c0_0] : memref<128x256xbf16, #tpu.memory_space<vmem>>, vector<128x256xbf16>
    %cst = arith.constant 0.000000e+00 : bf16
    %1 = vector.broadcast %cst : bf16 to vector<128x256xbf16>
    %2 = arith.cmpf ogt, %0, %1 : vector<128x256xbf16>
    %c0_1 = arith.constant 0 : index
    %c0_2 = arith.constant 0 : index
    %3 = vector.load %arg2[%c0_1, %c0_2] : memref<256x28xbf16, #tpu.memory_space<vmem>>, vector<256x28xbf16>
    %c128_i32 = arith.constant 128 : i32
    %4 = arith.muli %arg0, %c128_i32 : i32
    %5 = tpu.assume_multiple %4, 128 : i32
    %6 = arith.index_cast %5 : i32 to index
    %c0_3 = arith.constant 0 : index
    %7 = vector.load %arg2[%6, %c0_3] : memref<256x28xbf16, #tpu.memory_space<vmem>>, vector<128x28xbf16>
    %8 = vector.extract_strided_slice %3 {offsets = [0, 0], sizes = [256, 8], strides = [1, 1]} : vector<256x28xbf16> to vector<256x8xbf16>
    %cst_4 = arith.constant dense<0.000000e+00> : vector<128x8xf32>
    %9 = tpu.matmul %0, %8, %cst_4 {dimension_numbers = #tpu.dot_dimension_numbers<[1], [0], [0], [1], [0, 0, 1, 1], [], []>} : vector<128x256xbf16>, vector<256x8xbf16>, vector<128x8xf32> -> vector<128x8xf32>
    %10 = vector.extract_strided_slice %3 {offsets = [0, 8], sizes = [256, 8], strides = [1, 1]} : vector<256x28xbf16> to vector<256x8xbf16>
    %c0_5 = arith.constant 0 : index
    %c0_6 = arith.constant 0 : index
    %11 = vector.load %arg3[%c0_5, %c0_6] : memref<2x256xf32, #tpu.memory_space<vmem>>, vector<1x256xf32>
    %12 = vector.extract_strided_slice %7 {offsets = [0, 26], sizes = [128, 1], strides = [1, 1]} : vector<128x28xbf16> to vector<128x1xbf16>
    %13 = arith.extf %12 : vector<128x1xbf16> to vector<128x1xf32>
    %14 = vector.broadcast %13 : vector<128x1xf32> to vector<128x256xf32>
    %15 = vector.broadcast %11 : vector<1x256xf32> to vector<128x256xf32>
    %16 = arith.addf %14, %15 : vector<128x256xf32>
    %cst_7 = arith.constant 0.000000e+00 : f32
    %17 = vector.broadcast %cst_7 : f32 to vector<128x256xf32>
    %18 = arith.cmpf ogt, %16, %17 : vector<128x256xf32>
    %cst_8 = arith.constant 2.000000e-01 : f32
    %19 = vector.broadcast %cst_8 : f32 to vector<128x256xf32>
    %20 = arith.mulf %19, %16 : vector<128x256xf32>
    %21 = arith.select %18, %16, %20 : vector<128x256xi1>, vector<128x256xf32>
    %cst_9 = arith.constant -1.000000e+30 : f32
    %22 = vector.broadcast %cst_9 : f32 to vector<128x256xf32>
    %23 = arith.select %2, %21, %22 : vector<128x256xi1>, vector<128x256xf32>
    %cst_10 = arith.constant dense<0xFF800000> : vector<128xf32>
    %24 = vector.multi_reduction <maximumf>, %23, %cst_10 [1] : vector<128x256xf32> to vector<128xf32>
    %25 = vector.shape_cast %24 : vector<128xf32> to vector<128x1xf32>
    %26 = vector.broadcast %25 : vector<128x1xf32> to vector<128x256xf32>
    %27 = arith.subf %23, %26 : vector<128x256xf32>
    %28 = math.exp %27 : vector<128x256xf32>
    %cst_11 = arith.constant dense<0.000000e+00> : vector<128xf32>
    %29 = vector.multi_reduction <add>, %28, %cst_11 [1] : vector<128x256xf32> to vector<128xf32>
    %30 = vector.shape_cast %29 : vector<128xf32> to vector<128x1xf32>
    %cst_12 = arith.constant 9.99999968E-21 : f32
    %31 = vector.broadcast %cst_12 : f32 to vector<128x1xf32>
    %32 = arith.maximumf %30, %31 : vector<128x1xf32>
    %33 = tpu.reciprocal %32 {approx = true} : vector<128x1xf32> -> vector<128x1xf32>
    %34 = vector.broadcast %33 : vector<128x1xf32> to vector<128x256xf32>
    %35 = arith.mulf %28, %34 : vector<128x256xf32>
    %36 = arith.truncf %35 : vector<128x256xf32> to vector<128x256xbf16>
    %cst_13 = arith.constant dense<0.000000e+00> : vector<128x8xf32>
    %37 = tpu.matmul %36, %10, %cst_13 {dimension_numbers = #tpu.dot_dimension_numbers<[1], [0], [0], [1], [0, 0, 1, 1], [], []>} : vector<128x256xbf16>, vector<256x8xbf16>, vector<128x8xf32> -> vector<128x8xf32>
    %38 = vector.extract_strided_slice %3 {offsets = [0, 16], sizes = [256, 8], strides = [1, 1]} : vector<256x28xbf16> to vector<256x8xbf16>
    %c1 = arith.constant 1 : index
    %c0_14 = arith.constant 0 : index
    %39 = vector.load %arg3[%c1, %c0_14] : memref<2x256xf32, #tpu.memory_space<vmem>>, vector<1x256xf32>
    %40 = vector.extract_strided_slice %7 {offsets = [0, 27], sizes = [128, 1], strides = [1, 1]} : vector<128x28xbf16> to vector<128x1xbf16>
    %41 = arith.extf %40 : vector<128x1xbf16> to vector<128x1xf32>
    %42 = vector.broadcast %41 : vector<128x1xf32> to vector<128x256xf32>
    %43 = vector.broadcast %39 : vector<1x256xf32> to vector<128x256xf32>
    %44 = arith.addf %42, %43 : vector<128x256xf32>
    %cst_15 = arith.constant 0.000000e+00 : f32
    %45 = vector.broadcast %cst_15 : f32 to vector<128x256xf32>
    %46 = arith.cmpf ogt, %44, %45 : vector<128x256xf32>
    %cst_16 = arith.constant 2.000000e-01 : f32
    %47 = vector.broadcast %cst_16 : f32 to vector<128x256xf32>
    %48 = arith.mulf %47, %44 : vector<128x256xf32>
    %49 = arith.select %46, %44, %48 : vector<128x256xi1>, vector<128x256xf32>
    %cst_17 = arith.constant -1.000000e+30 : f32
    %50 = vector.broadcast %cst_17 : f32 to vector<128x256xf32>
    %51 = arith.select %2, %49, %50 : vector<128x256xi1>, vector<128x256xf32>
    %cst_18 = arith.constant dense<0xFF800000> : vector<128xf32>
    %52 = vector.multi_reduction <maximumf>, %51, %cst_18 [1] : vector<128x256xf32> to vector<128xf32>
    %53 = vector.shape_cast %52 : vector<128xf32> to vector<128x1xf32>
    %54 = vector.broadcast %53 : vector<128x1xf32> to vector<128x256xf32>
    %55 = arith.subf %51, %54 : vector<128x256xf32>
    %56 = math.exp %55 : vector<128x256xf32>
    %cst_19 = arith.constant dense<0.000000e+00> : vector<128xf32>
    %57 = vector.multi_reduction <add>, %56, %cst_19 [1] : vector<128x256xf32> to vector<128xf32>
    %58 = vector.shape_cast %57 : vector<128xf32> to vector<128x1xf32>
    %cst_20 = arith.constant 9.99999968E-21 : f32
    %59 = vector.broadcast %cst_20 : f32 to vector<128x1xf32>
    %60 = arith.maximumf %58, %59 : vector<128x1xf32>
    %61 = tpu.reciprocal %60 {approx = true} : vector<128x1xf32> -> vector<128x1xf32>
    %62 = vector.broadcast %61 : vector<128x1xf32> to vector<128x256xf32>
    %63 = arith.mulf %56, %62 : vector<128x256xf32>
    %64 = arith.truncf %63 : vector<128x256xf32> to vector<128x256xbf16>
    %cst_21 = arith.constant dense<0.000000e+00> : vector<128x8xf32>
    %65 = tpu.matmul %64, %38, %cst_21 {dimension_numbers = #tpu.dot_dimension_numbers<[1], [0], [0], [1], [0, 0, 1, 1], [], []>} : vector<128x256xbf16>, vector<256x8xbf16>, vector<128x8xf32> -> vector<128x8xf32>
    %cst_22 = arith.constant 0.000000e+00 : f32
    %66 = vector.broadcast %cst_22 : f32 to vector<128x8xf32>
    %67 = arith.addf %66, %37 : vector<128x8xf32>
    %68 = arith.addf %67, %65 : vector<128x8xf32>
    %cst_23 = arith.constant 5.000000e-01 : f32
    %69 = vector.broadcast %cst_23 : f32 to vector<128x8xf32>
    %70 = arith.mulf %68, %69 : vector<128x8xf32>
    %cst_24 = arith.constant 0.000000e+00 : f32
    %71 = vector.broadcast %cst_24 : f32 to vector<128x112xf32>
    %72 = tpu.concatenate %9, %70, %71 in 1 : vector<128x8xf32>, vector<128x8xf32>, vector<128x112xf32> -> vector<128x128xf32>
    %c0_25 = arith.constant 0 : index
    %c0_26 = arith.constant 0 : index
    %73 = vector.load %arg4[%c0_25, %c0_26] : memref<1x128xf32, #tpu.memory_space<vmem>>, vector<1x128xf32>
    %74 = vector.broadcast %73 : vector<1x128xf32> to vector<128x128xf32>
    %75 = arith.addf %72, %74 : vector<128x128xf32>
    %c0_27 = arith.constant 0 : index
    %c0_28 = arith.constant 0 : index
    %76 = vector.load %arg5[%c0_27, %c0_28] : memref<128x128xf32, #tpu.memory_space<vmem>>, vector<128x128xf32>
    tpu.vector_store %arg5[%c0_27, %c0_28], %75 {strides = array<i32>} : memref<128x128xf32, #tpu.memory_space<vmem>>, vector<128x128xf32>,
    return
  }
  func.func @transform_0(%arg0: i32) -> (i32, i32) {
    %c0_i32 = arith.constant 0 : i32
    %c0_i32_0 = arith.constant 0 : i32
    return %arg0, %c0_i32 : i32, i32
  }
  func.func @transform_1(%arg0: i32) -> (i32, i32) {
    %c0_i32 = arith.constant 0 : i32
    %c0_i32_0 = arith.constant 0 : i32
    %c0_i32_1 = arith.constant 0 : i32
    return %c0_i32, %c0_i32_0 : i32, i32
  }
  func.func @transform_2(%arg0: i32) -> (i32, i32) {
    %c0_i32 = arith.constant 0 : i32
    %c0_i32_0 = arith.constant 0 : i32
    %c0_i32_1 = arith.constant 0 : i32
    return %c0_i32, %c0_i32_0 : i32, i32
  }
  func.func @transform_3(%arg0: i32) -> (i32, i32) {
    %c0_i32 = arith.constant 0 : i32
    %c0_i32_0 = arith.constant 0 : i32
    %c0_i32_1 = arith.constant 0 : i32
    return %c0_i32, %c0_i32_0 : i32, i32
  }
  func.func @transform_4(%arg0: i32) -> (i32, i32) {
    %c0_i32 = arith.constant 0 : i32
    %c0_i32_0 = arith.constant 0 : i32
    return %arg0, %c0_i32 : i32, i32
  }
}

module attributes {stable_mosaic.version = 11 : i64} {
  func.func @_decoder_kernel(%arg0: i32, %arg1: i32, %arg2: memref<256x8xf32, #tpu.memory_space<vmem>>, %arg3: memref<256x8xf32, #tpu.memory_space<vmem>>, %arg4: memref<256x256xf32, #tpu.memory_space<vmem>>) attributes {dimension_semantics = [#tpu.dimension_semantics<parallel>, #tpu.dimension_semantics<parallel>], iteration_bounds = array<i64: 1, 1>, scalar_prefetch = 0 : i64, scratch_operands = 0 : i64, tpu.core_type = #tpu.core_type<tc>, window_params = [{transform_indices = @transform_0, window_bounds = array<i64: 256, 8>}, {transform_indices = @transform_1, window_bounds = array<i64: 256, 8>}, {transform_indices = @transform_2, window_bounds = array<i64: 256, 256>}]} {
    %c0 = arith.constant 0 : index
    %c0_0 = arith.constant 0 : index
    %0 = vector.load %arg2[%c0, %c0_0] : memref<256x8xf32, #tpu.memory_space<vmem>>, vector<256x8xf32>
    %c0_1 = arith.constant 0 : index
    %c0_2 = arith.constant 0 : index
    %1 = vector.load %arg3[%c0_1, %c0_2] : memref<256x8xf32, #tpu.memory_space<vmem>>, vector<256x8xf32>
    %cst = arith.constant dense<0.000000e+00> : vector<256x256xf32>
    %2 = tpu.matmul %0, %1, %cst {dimension_numbers = #tpu.dot_dimension_numbers<[1], [1], [0], [0], [0, 0, 1, 0], [], []>} : vector<256x8xf32>, vector<256x8xf32>, vector<256x256xf32> -> vector<256x256xf32>
    %3 = arith.negf %2 : vector<256x256xf32>
    %4 = math.exp %3 : vector<256x256xf32>
    %cst_3 = arith.constant 1.000000e+00 : f32
    %5 = vector.broadcast %cst_3 : f32 to vector<256x256xf32>
    %6 = arith.addf %5, %4 : vector<256x256xf32>
    %7 = arith.divf %5, %6 : vector<256x256xf32>
    %c0_4 = arith.constant 0 : index
    %c0_5 = arith.constant 0 : index
    %8 = vector.load %arg4[%c0_4, %c0_5] : memref<256x256xf32, #tpu.memory_space<vmem>>, vector<256x256xf32>
    tpu.vector_store %arg4[%c0_4, %c0_5], %7 {strides = array<i32>} : memref<256x256xf32, #tpu.memory_space<vmem>>, vector<256x256xf32>,
    return
  }
  func.func @transform_0(%arg0: i32, %arg1: i32) -> (i32, i32) {
    %c0_i32 = arith.constant 0 : i32
    %c0_i32_0 = arith.constant 0 : i32
    return %arg0, %c0_i32 : i32, i32
  }
  func.func @transform_1(%arg0: i32, %arg1: i32) -> (i32, i32) {
    %c0_i32 = arith.constant 0 : i32
    %c0_i32_0 = arith.constant 0 : i32
    return %arg1, %c0_i32 : i32, i32
  }
  func.func @transform_2(%arg0: i32, %arg1: i32) -> (i32, i32) {
    %c0_i32 = arith.constant 0 : i32
    return %arg0, %arg1 : i32, i32
  }
}

</mosaic_0001>

<llo_original>
// kernel: gcn_merge_forward.5
$region0: #{gcn_merge_forward.5}
  #allocation0 [shape = 'u32[]', space=smem, size = 0x4, offset = 0x4, fixed_abs, tag = 'smem constant byte address 0x4 - core index']
  #allocation1 [shape = 'u32[144,128]{1,0:T(1,128)}', space=vmem, size = 0x12000, scoped, tag = 'internal scratch']
  %s0 = inlined_call_operand.vmem [shape: f32[256,8], index: 0, kind: input, shape index: {}]
  %s1 = inlined_call_operand.vmem [shape: f32[8,52], index: 1, kind: input, shape index: {}]
  %s2 = inlined_call_operand.vmem [shape: bf16[256,52], index: 2, kind: output, shape index: {}]
  %s3 = sld [smem:[#allocation0]]
  $region18: #{gcn_merge_forward.5} parent=0
    _
  %s5 = ssub.s32 1, %s3
  %s6 = scalar_select 0, %s5, %s3
  // Predicated region
  $region2: #{gcn_merge_forward.5} parent=0 // pred_check
    _
  $region3: #{gcn_merge_forward.5} parent=0 // pred_check_branch
    %8 = sbr.rel (0) target = $region5
  $region4: #{gcn_merge_forward.5} parent=0 // pred_region
    _
  $region5: #{gcn_merge_forward.5} parent=0 // pred_fallthru
    _
  // Predicated region
  $region6: #{gcn_merge_forward.5} parent=0 // pred_check
    _
  $region7: #{gcn_merge_forward.5} parent=0 // pred_check_branch
    %10 = sbr.rel (0) target = $region9
  $region8: #{gcn_merge_forward.5} parent=0 // pred_region
    _
  $region9: #{gcn_merge_forward.5} parent=0 // pred_fallthru
    _
  %v11 = vld [vmem:[%s0] sm:$0xff]
  %v12 = vld [vmem:[%s0 + $0x8] sm:$0xff]
  %v13 = vld [vmem:[%s0 + $0x10] sm:$0xff]
  %v14 = vld [vmem:[%s0 + $0x18] sm:$0xff]
  %v15 = vld [vmem:[%s0 + $0x20] sm:$0xff]
  %v16 = vld [vmem:[%s0 + $0x28] sm:$0xff]
  %v17 = vld [vmem:[%s0 + $0x30] sm:$0xff]
  %v18 = vld [vmem:[%s0 + $0x38] sm:$0xff]
  %v19 = vld [vmem:[%s0 + $0x40] sm:$0xff]
  %v20 = vld [vmem:[%s0 + $0x48] sm:$0xff]
  %v21 = vld [vmem:[%s0 + $0x50] sm:$0xff]
  %v22 = vld [vmem:[%s0 + $0x58] sm:$0xff]
  %v23 = vld [vmem:[%s0 + $0x60] sm:$0xff]
  %v24 = vld [vmem:[%s0 + $0x68] sm:$0xff]
  %v25 = vld [vmem:[%s0 + $0x70] sm:$0xff]
  %v26 = vld [vmem:[%s0 + $0x78] sm:$0xff]
  %v27 = vld [vmem:[%s0 + $0x80] sm:$0xff]
  %v28 = vld [vmem:[%s0 + $0x88] sm:$0xff]
  %v29 = vld [vmem:[%s0 + $0x90] sm:$0xff]
  %v30 = vld [vmem:[%s0 + $0x98] sm:$0xff]
  %v31 = vld [vmem:[%s0 + $0xa0] sm:$0xff]
  %v32 = vld [vmem:[%s0 + $0xa8] sm:$0xff]
  %v33 = vld [vmem:[%s0 + $0xb0] sm:$0xff]
  %v34 = vld [vmem:[%s0 + $0xb8] sm:$0xff]
  %v35 = vld [vmem:[%s0 + $0xc0] sm:$0xff]
  %v36 = vld [vmem:[%s0 + $0xc8] sm:$0xff]
  %v37 = vld [vmem:[%s0 + $0xd0] sm:$0xff]
  %v38 = vld [vmem:[%s0 + $0xd8] sm:$0xff]
  %v39 = vld [vmem:[%s0 + $0xe0] sm:$0xff]
  %v40 = vld [vmem:[%s0 + $0xe8] sm:$0xff]
  %v41 = vld [vmem:[%s0 + $0xf0] sm:$0xff]
  %v42 = vld [vmem:[%s0 + $0xf8] sm:$0xff]
  %v43 = vld [vmem:[%s1] sm:$0xff]
  %vm44 = vcmask 64512
  %v46 = vsel %vm44, %v11, 0
  %v49 = vsel %vm44, %v12, 0
  %v52 = vsel %vm44, %v13, 0
  %v55 = vsel %vm44, %v14, 0
  %v58 = vsel %vm44, %v15, 0
  %v61 = vsel %vm44, %v16, 0
  %v64 = vsel %vm44, %v17, 0
  %v67 = vsel %vm44, %v18, 0
  %v70 = vsel %vm44, %v19, 0
  %v73 = vsel %vm44, %v20, 0
  %v76 = vsel %vm44, %v21, 0
  %v79 = vsel %vm44, %v22, 0
  %v82 = vsel %vm44, %v23, 0
  %v85 = vsel %vm44, %v24, 0
  %v88 = vsel %vm44, %v25, 0
  %v91 = vsel %vm44, %v26, 0
  %v94 = vsel %vm44, %v27, 0
  %v97 = vsel %vm44, %v28, 0
  %v100 = vsel %vm44, %v29, 0
  %v103 = vsel %vm44, %v30, 0
  %v106 = vsel %vm44, %v31, 0
  %v109 = vsel %vm44, %v32, 0
  %v112 = vsel %vm44, %v33, 0
  %v115 = vsel %vm44, %v34, 0
  %v118 = vsel %vm44, %v35, 0
  %v121 = vsel %vm44, %v36, 0
  %v124 = vsel %vm44, %v37, 0
  %v127 = vsel %vm44, %v38, 0
  %v130 = vsel %vm44, %v39, 0
  %v133 = vsel %vm44, %v40, 0
  %v136 = vsel %vm44, %v41, 0
  %v139 = vsel %vm44, %v42, 0
  %141 = vmatprep.subr.mxu0 0.0
  %142 = vmatpush1.msra.mxu0 %v43
  %143 = vmatprep.subr.mxu0 0.0
  %144 = vmatpush1.msra.mxu0 0.0
  %145 = vmatprep.subr.mxu0 0.0
  %146 = vmatpush1.msra.mxu0 0.0
  %147 = vmatprep.subr.mxu0 0.0
  %148 = vmatpush1.msra.mxu0 0.0
  %149 = vmatprep.subr.mxu0 0.0
  %150 = vmatpush1.msra.mxu0 0.0
  %151 = vmatprep.subr.mxu0 0.0
  %152 = vmatpush1.msra.mxu0 0.0
  %153 = vmatprep.subr.mxu0 0.0
  %154 = vmatpush1.msra.mxu0 0.0
  %155 = vmatprep.subr.mxu0 0.0
  %156 = vmatpush1.msra.mxu0 0.0
  %157 = vmatprep.subr.mxu0 0.0
  %158 = vmatpush1.msra.mxu0 0.0
  %159 = vmatprep.subr.mxu0 0.0
  %160 = vmatpush1.msra.mxu0 0.0
  %161 = vmatprep.subr.mxu0 0.0
  %162 = vmatpush1.msra.mxu0 0.0
  %163 = vmatprep.subr.mxu0 0.0
  %164 = vmatpush1.msra.mxu0 0.0
  %165 = vmatprep.subr.mxu0 0.0
  %166 = vmatpush1.msra.mxu0 0.0
  %167 = vmatprep.subr.mxu0 0.0
  %168 = vmatpush1.msra.mxu0 0.0
  %169 = vmatprep.subr.mxu0 0.0
  %170 = vmatpush1.msra.mxu0 0.0
  %171 = vmatprep.subr.mxu0 0.0
  %172 = vmatpush1.msra.mxu0 0.0
  %173 = vmatprep.subr.mxu0 0.0
  %174 = vmatpush1.msra.mxu0 0.0
  %175 = vmatprep.subr.mxu0 0.0
  %176 = vmatpush1.msra.mxu0 0.0
  %177 = vmatprep.subr.mxu0 0.0
  %178 = vmatpush1.msra.mxu0 0.0
  %179 = vmatprep.subr.mxu0 0.0
  %180 = vmatpush1.msra.mxu0 0.0
  %181 = vmatprep.subr.mxu0 0.0
  %182 = vmatpush1.msra.mxu0 0.0
  %183 = vmatprep.subr.mxu0 0.0
  %184 = vmatpush1.msra.mxu0 0.0
  %185 = vmatprep.subr.mxu0 0.0
  %186 = vmatpush1.msra.mxu0 0.0
  %187 = vmatprep.subr.mxu0 0.0
  %188 = vmatpush1.msra.mxu0 0.0
  %189 = vmatprep.subr.mxu0 0.0
  %190 = vmatpush1.msra.mxu0 0.0
  %191 = vmatprep.subr.mxu0 0.0
  %192 = vmatpush1.msra.mxu0 0.0
  %193 = vmatprep.subr.mxu0 0.0
  %194 = vmatpush1.msra.mxu0 0.0
  %195 = vmatprep.subr.mxu0 0.0
  %196 = vmatpush1.msra.mxu0 0.0
  %197 = vmatprep.subr.mxu0 0.0
  %198 = vmatpush1.msra.mxu0 0.0
  %199 = vmatprep.subr.mxu0 0.0
  %200 = vmatpush1.msra.mxu0 0.0
  %201 = vmatprep.subr.mxu0 0.0
  %202 = vmatpush1.msra.mxu0 0.0
  %203 = vmatprep.subr.mxu0 0.0
  %204 = vmatpush1.msra.mxu0 0.0
  %205 = vmatprep.mubr.f32.mxu0 0.0
  %206 = vmatmul.mubr.f32.gmra.mrb[0].mxu0 %v46
  %v207 = vpop.f32.mrb[0].mxu0
  %v208 = vadd.f32 0.0, %v207
  %v209 = vpop.f32.mrb[0].mxu0
  %210 = vmatprep.mubr.f32.mxu0 0.0
  %211 = vmatmul.mubr.f32.gmra.mrb[0].mxu0 %v49
  %v212 = vpop.f32.mrb[0].mxu0
  %v213 = vadd.f32 0.0, %v212
  %v214 = vpop.f32.mrb[0].mxu0
  %215 = vmatprep.mubr.f32.mxu0 0.0
  %216 = vmatmul.mubr.f32.gmra.mrb[0].mxu0 %v52
  %v217 = vpop.f32.mrb[0].mxu0
  %v218 = vadd.f32 0.0, %v217
  %v219 = vpop.f32.mrb[0].mxu0
  %220 = vmatprep.mubr.f32.mxu0 0.0
  %221 = vmatmul.mubr.f32.gmra.mrb[0].mxu0 %v55
  %v222 = vpop.f32.mrb[0].mxu0
  %v223 = vadd.f32 0.0, %v222
  %v224 = vpop.f32.mrb[0].mxu0
  %225 = vmatprep.mubr.f32.mxu0 0.0
  %226 = vmatmul.mubr.f32.gmra.mrb[0].mxu0 %v58
  %v227 = vpop.f32.mrb[0].mxu0
  %v228 = vadd.f32 0.0, %v227
  %v229 = vpop.f32.mrb[0].mxu0
  %230 = vmatprep.mubr.f32.mxu0 0.0
  %231 = vmatmul.mubr.f32.gmra.mrb[0].mxu0 %v61
  %v232 = vpop.f32.mrb[0].mxu0
  %v233 = vadd.f32 0.0, %v232
  %v234 = vpop.f32.mrb[0].mxu0
  %235 = vmatprep.mubr.f32.mxu0 0.0
  %236 = vmatmul.mubr.f32.gmra.mrb[0].mxu0 %v64
  %v237 = vpop.f32.mrb[0].mxu0
  %v238 = vadd.f32 0.0, %v237
  %v239 = vpop.f32.mrb[0].mxu0
  %240 = vmatprep.mubr.f32.mxu0 0.0
  %241 = vmatmul.mubr.f32.gmra.mrb[0].mxu0 %v67
  %v242 = vpop.f32.mrb[0].mxu0
  %v243 = vadd.f32 0.0, %v242
  %v244 = vpop.f32.mrb[0].mxu0
  %245 = vmatprep.mubr.f32.mxu0 0.0
  %246 = vmatmul.mubr.f32.gmra.mrb[0].mxu0 %v70
  %v247 = vpop.f32.mrb[0].mxu0
  %v248 = vadd.f32 0.0, %v247
  %v249 = vpop.f32.mrb[0].mxu0
  %250 = vmatprep.mubr.f32.mxu0 0.0
  %251 = vmatmul.mubr.f32.gmra.mrb[0].mxu0 %v73
  %v252 = vpop.f32.mrb[0].mxu0
  %v253 = vadd.f32 0.0, %v252
  %v254 = vpop.f32.mrb[0].mxu0
  %255 = vmatprep.mubr.f32.mxu0 0.0
  %256 = vmatmul.mubr.f32.gmra.mrb[0].mxu0 %v76
  %v257 = vpop.f32.mrb[0].mxu0
  %v258 = vadd.f32 0.0, %v257
  %v259 = vpop.f32.mrb[0].mxu0
  %260 = vmatprep.mubr.f32.mxu0 0.0
  %261 = vmatmul.mubr.f32.gmra.mrb[0].mxu0 %v79
  %v262 = vpop.f32.mrb[0].mxu0
  %v263 = vadd.f32 0.0, %v262
  %v264 = vpop.f32.mrb[0].mxu0
  %265 = vmatprep.mubr.f32.mxu0 0.0
  %266 = vmatmul.mubr.f32.gmra.mrb[0].mxu0 %v82
  %v267 = vpop.f32.mrb[0].mxu0
  %v268 = vadd.f32 0.0, %v267
  %v269 = vpop.f32.mrb[0].mxu0
  %270 = vmatprep.mubr.f32.mxu0 0.0
  %271 = vmatmul.mubr.f32.gmra.mrb[0].mxu0 %v85
  %v272 = vpop.f32.mrb[0].mxu0
  %v273 = vadd.f32 0.0, %v272
  %v274 = vpop.f32.mrb[0].mxu0
  %275 = vmatprep.mubr.f32.mxu0 0.0
  %276 = vmatmul.mubr.f32.gmra.mrb[0].mxu0 %v88
  %v277 = vpop.f32.mrb[0].mxu0
  %v278 = vadd.f32 0.0, %v277
  %v279 = vpop.f32.mrb[0].mxu0
  %280 = vmatprep.mubr.f32.mxu0 0.0
  %281 = vmatmul.mubr.f32.gmra.mrb[0].mxu0 %v91
  %v282 = vpop.f32.mrb[0].mxu0
  %v283 = vadd.f32 0.0, %v282
  %v284 = vpop.f32.mrb[0].mxu0
  %285 = vmatprep.mubr.f32.mxu0 0.0
  %286 = vmatmul.mubr.f32.gmra.mrb[0].mxu0 %v94
  %v287 = vpop.f32.mrb[0].mxu0
  %v288 = vadd.f32 0.0, %v287
  %v289 = vpop.f32.mrb[0].mxu0
  %290 = vmatprep.mubr.f32.mxu0 0.0
  %291 = vmatmul.mubr.f32.gmra.mrb[0].mxu0 %v97
  %v292 = vpop.f32.mrb[0].mxu0
  %v293 = vadd.f32 0.0, %v292
  %v294 = vpop.f32.mrb[0].mxu0
  %295 = vmatprep.mubr.f32.mxu0 0.0
  %296 = vmatmul.mubr.f32.gmra.mrb[0].mxu0 %v100
  %v297 = vpop.f32.mrb[0].mxu0
  %v298 = vadd.f32 0.0, %v297
  %v299 = vpop.f32.mrb[0].mxu0
  %300 = vmatprep.mubr.f32.mxu0 0.0
  %301 = vmatmul.mubr.f32.gmra.mrb[0].mxu0 %v103
  %v302 = vpop.f32.mrb[0].mxu0
  %v303 = vadd.f32 0.0, %v302
  %v304 = vpop.f32.mrb[0].mxu0
  %305 = vmatprep.mubr.f32.mxu0 0.0
  %306 = vmatmul.mubr.f32.gmra.mrb[0].mxu0 %v106
  %v307 = vpop.f32.mrb[0].mxu0
  %v308 = vadd.f32 0.0, %v307
  %v309 = vpop.f32.mrb[0].mxu0
  %310 = vmatprep.mubr.f32.mxu0 0.0
  %311 = vmatmul.mubr.f32.gmra.mrb[0].mxu0 %v109
  %v312 = vpop.f32.mrb[0].mxu0
  %v313 = vadd.f32 0.0, %v312
  %v314 = vpop.f32.mrb[0].mxu0
  %315 = vmatprep.mubr.f32.mxu0 0.0
  %316 = vmatmul.mubr.f32.gmra.mrb[0].mxu0 %v112
  %v317 = vpop.f32.mrb[0].mxu0
  %v318 = vadd.f32 0.0, %v317
  %v319 = vpop.f32.mrb[0].mxu0
  %320 = vmatprep.mubr.f32.mxu0 0.0
  %321 = vmatmul.mubr.f32.gmra.mrb[0].mxu0 %v115
  %v322 = vpop.f32.mrb[0].mxu0
  %v323 = vadd.f32 0.0, %v322
  %v324 = vpop.f32.mrb[0].mxu0
  %325 = vmatprep.mubr.f32.mxu0 0.0
  %326 = vmatmul.mubr.f32.gmra.mrb[0].mxu0 %v118
  %v327 = vpop.f32.mrb[0].mxu0
  %v328 = vadd.f32 0.0, %v327
  %v329 = vpop.f32.mrb[0].mxu0
  %330 = vmatprep.mubr.f32.mxu0 0.0
  %331 = vmatmul.mubr.f32.gmra.mrb[0].mxu0 %v121
  %v332 = vpop.f32.mrb[0].mxu0
  %v333 = vadd.f32 0.0, %v332
  %v334 = vpop.f32.mrb[0].mxu0
  %335 = vmatprep.mubr.f32.mxu0 0.0
  %336 = vmatmul.mubr.f32.gmra.mrb[0].mxu0 %v124
  %v337 = vpop.f32.mrb[0].mxu0
  %v338 = vadd.f32 0.0, %v337
  %v339 = vpop.f32.mrb[0].mxu0
  %340 = vmatprep.mubr.f32.mxu0 0.0
  %341 = vmatmul.mubr.f32.gmra.mrb[0].mxu0 %v127
  %v342 = vpop.f32.mrb[0].mxu0
  %v343 = vadd.f32 0.0, %v342
  %v344 = vpop.f32.mrb[0].mxu0
  %345 = vmatprep.mubr.f32.mxu0 0.0
  %346 = vmatmul.mubr.f32.gmra.mrb[0].mxu0 %v130
  %v347 = vpop.f32.mrb[0].mxu0
  %v348 = vadd.f32 0.0, %v347
  %v349 = vpop.f32.mrb[0].mxu0
  %350 = vmatprep.mubr.f32.mxu0 0.0
  %351 = vmatmul.mubr.f32.gmra.mrb[0].mxu0 %v133
  %v352 = vpop.f32.mrb[0].mxu0
  %v353 = vadd.f32 0.0, %v352
  %v354 = vpop.f32.mrb[0].mxu0
  %355 = vmatprep.mubr.f32.mxu0 0.0
  %356 = vmatmul.mubr.f32.gmra.mrb[0].mxu0 %v136
  %v357 = vpop.f32.mrb[0].mxu0
  %v358 = vadd.f32 0.0, %v357
  %v359 = vpop.f32.mrb[0].mxu0
  %360 = vmatprep.mubr.f32.mxu0 0.0
  %361 = vmatmul.mubr.f32.gmra.mrb[0].mxu0 %v139
  %v362 = vpop.f32.mrb[0].mxu0
  %v363 = vadd.f32 0.0, %v362
  %v364 = vpop.f32.mrb[0].mxu0
  %365 = vdwg.mxu0
  %v366 = vpack.c.bf16 %v213, %v208
  %v367 = vpack.c.bf16 %v223, %v218
  %v368 = vpack.c.bf16 %v233, %v228
  %v369 = vpack.c.bf16 %v243, %v238
  %v370 = vpack.c.bf16 %v253, %v248
  %v371 = vpack.c.bf16 %v263, %v258
  %v372 = vpack.c.bf16 %v273, %v268
  %v373 = vpack.c.bf16 %v283, %v278
  %v374 = vpack.c.bf16 %v293, %v288
  %v375 = vpack.c.bf16 %v303, %v298
  %v376 = vpack.c.bf16 %v313, %v308
  %v377 = vpack.c.bf16 %v323, %v318
  %v378 = vpack.c.bf16 %v333, %v328
  %v379 = vpack.c.bf16 %v343, %v338
  %v380 = vpack.c.bf16 %v353, %v348
  %v381 = vpack.c.bf16 %v363, %v358
  %v398 = vunpack.c.l.b16 %v366
  %v399 = vunpack.c.h.b16 %v366
  %v400 = vunpack.c.l.b16 %v367
  %v401 = vunpack.c.h.b16 %v367
  %v402 = vunpack.c.l.b16 %v368
  %v403 = vunpack.c.h.b16 %v368
  %v404 = vunpack.c.l.b16 %v369
  %v405 = vunpack.c.h.b16 %v369
  %v406 = vunpack.c.l.b16 %v370
  %v407 = vunpack.c.h.b16 %v370
  %v408 = vunpack.c.l.b16 %v371
  %v409 = vunpack.c.h.b16 %v371
  %v410 = vunpack.c.l.b16 %v372
  %v411 = vunpack.c.h.b16 %v372
  %v412 = vunpack.c.l.b16 %v373
  %v413 = vunpack.c.h.b16 %v373
  %v414 = vunpack.c.l.b16 %v374
  %v415 = vunpack.c.h.b16 %v374
  %v416 = vunpack.c.l.b16 %v375
  %v417 = vunpack.c.h.b16 %v375
  %v418 = vunpack.c.l.b16 %v376
  %v419 = vunpack.c.h.b16 %v376
  %v420 = vunpack.c.l.b16 %v377
  %v421 = vunpack.c.h.b16 %v377
  %v422 = vunpack.c.l.b16 %v378
  %v423 = vunpack.c.h.b16 %v378
  %v424 = vunpack.c.l.b16 %v379
  %v425 = vunpack.c.h.b16 %v379
  %v426 = vunpack.c.l.b16 %v380
  %v427 = vunpack.c.h.b16 %v380
  %v428 = vunpack.c.l.b16 %v381
  %v429 = vunpack.c.h.b16 %v381
  %v430 = vpack.c.b16 %v398, %v398
  %v431 = vpack.c.b16 %v399, %v399
  %v432 = vpack.c.b16 %v400, %v400
  %v433 = vpack.c.b16 %v401, %v401
  %v434 = vpack.c.b16 %v402, %v402
  %v435 = vpack.c.b16 %v403, %v403
  %v436 = vpack.c.b16 %v404, %v404
  %v437 = vpack.c.b16 %v405, %v405
  %v438 = vpack.c.b16 %v406, %v406
  %v439 = vpack.c.b16 %v407, %v407
  %v440 = vpack.c.b16 %v408, %v408
  %v441 = vpack.c.b16 %v409, %v409
  %v442 = vpack.c.b16 %v410, %v410
  %v443 = vpack.c.b16 %v411, %v411
  %v444 = vpack.c.b16 %v412, %v412
  %v445 = vpack.c.b16 %v413, %v413
  %v446 = vpack.c.b16 %v414, %v414
  %v447 = vpack.c.b16 %v415, %v415
  %v448 = vpack.c.b16 %v416, %v416
  %v449 = vpack.c.b16 %v417, %v417
  %v450 = vpack.c.b16 %v418, %v418
  %v451 = vpack.c.b16 %v419, %v419
  %v452 = vpack.c.b16 %v420, %v420
  %v453 = vpack.c.b16 %v421, %v421
  %v454 = vpack.c.b16 %v422, %v422
  %v455 = vpack.c.b16 %v423, %v423
  %v456 = vpack.c.b16 %v424, %v424
  %v457 = vpack.c.b16 %v425, %v425
  %v458 = vpack.c.b16 %v426, %v426
  %v459 = vpack.c.b16 %v427, %v427
  %v460 = vpack.c.b16 %v428, %v428
  %v461 = vpack.c.b16 %v429, %v429
  %vm494 = vcmask 420864
  %495 = vst.msk [vmem:[%s2] sm:$0xf] %vm494, %v430
  %496 = vst.msk [vmem:[%s2 + $0x4] sm:$0xf] %vm494, %v431
  %497 = vst.msk [vmem:[%s2 + $0x8] sm:$0xf] %vm494, %v432
  %498 = vst.msk [vmem:[%s2 + $0xc] sm:$0xf] %vm494, %v433
  %499 = vst.msk [vmem:[%s2 + $0x10] sm:$0xf] %vm494, %v434
  %500 = vst.msk [vmem:[%s2 + $0x14] sm:$0xf] %vm494, %v435
  %501 = vst.msk [vmem:[%s2 + $0x18] sm:$0xf] %vm494, %v436
  %502 = vst.msk [vmem:[%s2 + $0x1c] sm:$0xf] %vm494, %v437
  %503 = vst.msk [vmem:[%s2 + $0x20] sm:$0xf] %vm494, %v438
  %504 = vst.msk [vmem:[%s2 + $0x24] sm:$0xf] %vm494, %v439
  %505 = vst.msk [vmem:[%s2 + $0x28] sm:$0xf] %vm494, %v440
  %506 = vst.msk [vmem:[%s2 + $0x2c] sm:$0xf] %vm494, %v441
  %507 = vst.msk [vmem:[%s2 + $0x30] sm:$0xf] %vm494, %v442
  %508 = vst.msk [vmem:[%s2 + $0x34] sm:$0xf] %vm494, %v443
  %509 = vst.msk [vmem:[%s2 + $0x38] sm:$0xf] %vm494, %v444
  %510 = vst.msk [vmem:[%s2 + $0x3c] sm:$0xf] %vm494, %v445
  %511 = vst.msk [vmem:[%s2 + $0x40] sm:$0xf] %vm494, %v446
  %512 = vst.msk [vmem:[%s2 + $0x44] sm:$0xf] %vm494, %v447
  %513 = vst.msk [vmem:[%s2 + $0x48] sm:$0xf] %vm494, %v448
  %514 = vst.msk [vmem:[%s2 + $0x4c] sm:$0xf] %vm494, %v449
  %515 = vst.msk [vmem:[%s2 + $0x50] sm:$0xf] %vm494, %v450
  %516 = vst.msk [vmem:[%s2 + $0x54] sm:$0xf] %vm494, %v451
  %517 = vst.msk [vmem:[%s2 + $0x58] sm:$0xf] %vm494, %v452
  %518 = vst.msk [vmem:[%s2 + $0x5c] sm:$0xf] %vm494, %v453
  %519 = vst.msk [vmem:[%s2 + $0x60] sm:$0xf] %vm494, %v454
  %520 = vst.msk [vmem:[%s2 + $0x64] sm:$0xf] %vm494, %v455
  %521 = vst.msk [vmem:[%s2 + $0x68] sm:$0xf] %vm494, %v456
  %522 = vst.msk [vmem:[%s2 + $0x6c] sm:$0xf] %vm494, %v457
  %523 = vst.msk [vmem:[%s2 + $0x70] sm:$0xf] %vm494, %v458
  %524 = vst.msk [vmem:[%s2 + $0x74] sm:$0xf] %vm494, %v459
  %525 = vst.msk [vmem:[%s2 + $0x78] sm:$0xf] %vm494, %v460
  %526 = vst.msk [vmem:[%s2 + $0x7c] sm:$0xf] %vm494, %v461
  // Predicated region
  $region10: #{gcn_merge_forward.5} parent=0 // pred_check
    _
  $region11: #{gcn_merge_forward.5} parent=0 // pred_check_branch
    %528 = sbr.rel (0) target = $region13
  $region12: #{gcn_merge_forward.5} parent=0 // pred_region
    _
  $region13: #{gcn_merge_forward.5} parent=0 // pred_fallthru
    _
  // Predicated region
  $region14: #{gcn_merge_forward.5} parent=0 // pred_check
    _
  $region15: #{gcn_merge_forward.5} parent=0 // pred_check_branch
    %530 = sbr.rel (0) target = $region17
  $region16: #{gcn_merge_forward.5} parent=0 // pred_region
    _
  $region17: #{gcn_merge_forward.5} parent=0 // pred_fallthru
    _

// kernel: gcn_merge_forward.7
$region0: #{gcn_merge_forward.7}
  #allocation0 [shape = 'u32[]', space=smem, size = 0x4, offset = 0x4, fixed_abs, tag = 'smem constant byte address 0x4 - core index']
  #allocation1 [shape = 'u32[144,128]{1,0:T(1,128)}', space=vmem, size = 0x12000, scoped, tag = 'internal scratch']
  %s0 = inlined_call_operand.vmem [shape: f32[256,48], index: 0, kind: input, shape index: {}]
  %s1 = inlined_call_operand.vmem [shape: f32[48,28], index: 1, kind: input, shape index: {}]
  %s2 = inlined_call_operand.vmem [shape: bf16[256,28], index: 2, kind: output, shape index: {}]
  %s3 = sld [smem:[#allocation0]]
  $region18: #{gcn_merge_forward.7} parent=0
    _
  %s5 = ssub.s32 1, %s3
  %s6 = scalar_select 0, %s5, %s3
  // Predicated region
  $region2: #{gcn_merge_forward.7} parent=0 // pred_check
    _
  $region3: #{gcn_merge_forward.7} parent=0 // pred_check_branch
    %8 = sbr.rel (0) target = $region5
  $region4: #{gcn_merge_forward.7} parent=0 // pred_region
    _
  $region5: #{gcn_merge_forward.7} parent=0 // pred_fallthru
    _
  // Predicated region
  $region6: #{gcn_merge_forward.7} parent=0 // pred_check
    _
  $region7: #{gcn_merge_forward.7} parent=0 // pred_check_branch
    %10 = sbr.rel (0) target = $region9
  $region8: #{gcn_merge_forward.7} parent=0 // pred_region
    _
  $region9: #{gcn_merge_forward.7} parent=0 // pred_fallthru
    _
  %v11 = vld [vmem:[%s0] sm:$0xff]
  %v12 = vld [vmem:[%s0 + $0x8] sm:$0xff]
  %v13 = vld [vmem:[%s0 + $0x10] sm:$0xff]
  %v14 = vld [vmem:[%s0 + $0x18] sm:$0xff]
  %v15 = vld [vmem:[%s0 + $0x20] sm:$0xff]
  %v16 = vld [vmem:[%s0 + $0x28] sm:$0xff]
  %v17 = vld [vmem:[%s0 + $0x30] sm:$0xff]
  %v18 = vld [vmem:[%s0 + $0x38] sm:$0xff]
  %v19 = vld [vmem:[%s0 + $0x40] sm:$0xff]
  %v20 = vld [vmem:[%s0 + $0x48] sm:$0xff]
  %v21 = vld [vmem:[%s0 + $0x50] sm:$0xff]
  %v22 = vld [vmem:[%s0 + $0x58] sm:$0xff]
  %v23 = vld [vmem:[%s0 + $0x60] sm:$0xff]
  %v24 = vld [vmem:[%s0 + $0x68] sm:$0xff]
  %v25 = vld [vmem:[%s0 + $0x70] sm:$0xff]
  %v26 = vld [vmem:[%s0 + $0x78] sm:$0xff]
  %v27 = vld [vmem:[%s0 + $0x80] sm:$0xff]
  %v28 = vld [vmem:[%s0 + $0x88] sm:$0xff]
  %v29 = vld [vmem:[%s0 + $0x90] sm:$0xff]
  %v30 = vld [vmem:[%s0 + $0x98] sm:$0xff]
  %v31 = vld [vmem:[%s0 + $0xa0] sm:$0xff]
  %v32 = vld [vmem:[%s0 + $0xa8] sm:$0xff]
  %v33 = vld [vmem:[%s0 + $0xb0] sm:$0xff]
  %v34 = vld [vmem:[%s0 + $0xb8] sm:$0xff]
  %v35 = vld [vmem:[%s0 + $0xc0] sm:$0xff]
  %v36 = vld [vmem:[%s0 + $0xc8] sm:$0xff]
  %v37 = vld [vmem:[%s0 + $0xd0] sm:$0xff]
  %v38 = vld [vmem:[%s0 + $0xd8] sm:$0xff]
  %v39 = vld [vmem:[%s0 + $0xe0] sm:$0xff]
  %v40 = vld [vmem:[%s0 + $0xe8] sm:$0xff]
  %v41 = vld [vmem:[%s0 + $0xf0] sm:$0xff]
  %v42 = vld [vmem:[%s0 + $0xf8] sm:$0xff]
  %v43 = vld [vmem:[%s1] sm:$0xff]
  %v44 = vld [vmem:[%s1 + $0x8] sm:$0xff]
  %v45 = vld [vmem:[%s1 + $0x10] sm:$0xff]
  %v46 = vld [vmem:[%s1 + $0x18] sm:$0xff]
  %v47 = vld [vmem:[%s1 + $0x20] sm:$0xff]
  %v48 = vld [vmem:[%s1 + $0x28] sm:$0xff]
  %vm49 = vcmask 392192
  %v51 = vsel %vm49, %v11, 0
  %v54 = vsel %vm49, %v12, 0
  %v57 = vsel %vm49, %v13, 0
  %v60 = vsel %vm49, %v14, 0
  %v63 = vsel %vm49, %v15, 0
  %v66 = vsel %vm49, %v16, 0
  %v69 = vsel %vm49, %v17, 0
  %v72 = vsel %vm49, %v18, 0
  %v75 = vsel %vm49, %v19, 0
  %v78 = vsel %vm49, %v20, 0
  %v81 = vsel %vm49, %v21, 0
  %v84 = vsel %vm49, %v22, 0
  %v87 = vsel %vm49, %v23, 0
  %v90 = vsel %vm49, %v24, 0
  %v93 = vsel %vm49, %v25, 0
  %v96 = vsel %vm49, %v26, 0
  %v99 = vsel %vm49, %v27, 0
  %v102 = vsel %vm49, %v28, 0
  %v105 = vsel %vm49, %v29, 0
  %v108 = vsel %vm49, %v30, 0
  %v111 = vsel %vm49, %v31, 0
  %v114 = vsel %vm49, %v32, 0
  %v117 = vsel %vm49, %v33, 0
  %v120 = vsel %vm49, %v34, 0
  %v123 = vsel %vm49, %v35, 0
  %v126 = vsel %vm49, %v36, 0
  %v129 = vsel %vm49, %v37, 0
  %v132 = vsel %vm49, %v38, 0
  %v135 = vsel %vm49, %v39, 0
  %v138 = vsel %vm49, %v40, 0
  %v141 = vsel %vm49, %v41, 0
  %v144 = vsel %vm49, %v42, 0
  %146 = vmatprep.subr.mxu0 0.0
  %147 = vmatpush1.msra.mxu0 %v43
  %148 = vmatprep.subr.mxu0 0.0
  %149 = vmatpush1.msra.mxu0 %v44
  %150 = vmatprep.subr.mxu0 0.0
  %151 = vmatpush1.msra.mxu0 %v45
  %152 = vmatprep.subr.mxu0 0.0
  %153 = vmatpush1.msra.mxu0 %v46
  %154 = vmatprep.subr.mxu0 0.0
  %155 = vmatpush1.msra.mxu0 %v47
  %156 = vmatprep.subr.mxu0 0.0
  %157 = vmatpush1.msra.mxu0 %v48
  %158 = vmatprep.subr.mxu0 0.0
  %159 = vmatpush1.msra.mxu0 0.0
  %160 = vmatprep.subr.mxu0 0.0
  %161 = vmatpush1.msra.mxu0 0.0
  %162 = vmatprep.subr.mxu0 0.0
  %163 = vmatpush1.msra.mxu0 0.0
  %164 = vmatprep.subr.mxu0 0.0
  %165 = vmatpush1.msra.mxu0 0.0
  %166 = vmatprep.subr.mxu0 0.0
  %167 = vmatpush1.msra.mxu0 0.0
  %168 = vmatprep.subr.mxu0 0.0
  %169 = vmatpush1.msra.mxu0 0.0
  %170 = vmatprep.subr.mxu0 0.0
  %171 = vmatpush1.msra.mxu0 0.0
  %172 = vmatprep.subr.mxu0 0.0
  %173 = vmatpush1.msra.mxu0 0.0
  %174 = vmatprep.subr.mxu0 0.0
  %175 = vmatpush1.msra.mxu0 0.0
  %176 = vmatprep.subr.mxu0 0.0
  %177 = vmatpush1.msra.mxu0 0.0
  %178 = vmatprep.subr.mxu0 0.0
  %179 = vmatpush1.msra.mxu0 0.0
  %180 = vmatprep.subr.mxu0 0.0
  %181 = vmatpush1.msra.mxu0 0.0
  %182 = vmatprep.subr.mxu0 0.0
  %183 = vmatpush1.msra.mxu0 0.0
  %184 = vmatprep.subr.mxu0 0.0
  %185 = vmatpush1.msra.mxu0 0.0
  %186 = vmatprep.subr.mxu0 0.0
  %187 = vmatpush1.msra.mxu0 0.0
  %188 = vmatprep.subr.mxu0 0.0
  %189 = vmatpush1.msra.mxu0 0.0
  %190 = vmatprep.subr.mxu0 0.0
  %191 = vmatpush1.msra.mxu0 0.0
  %192 = vmatprep.subr.mxu0 0.0
  %193 = vmatpush1.msra.mxu0 0.0
  %194 = vmatprep.subr.mxu0 0.0
  %195 = vmatpush1.msra.mxu0 0.0
  %196 = vmatprep.subr.mxu0 0.0
  %197 = vmatpush1.msra.mxu0 0.0
  %198 = vmatprep.subr.mxu0 0.0
  %199 = vmatpush1.msra.mxu0 0.0
  %200 = vmatprep.subr.mxu0 0.0
  %201 = vmatpush1.msra.mxu0 0.0
  %202 = vmatprep.subr.mxu0 0.0
  %203 = vmatpush1.msra.mxu0 0.0
  %204 = vmatprep.subr.mxu0 0.0
  %205 = vmatpush1.msra.mxu0 0.0
  %206 = vmatprep.subr.mxu0 0.0
  %207 = vmatpush1.msra.mxu0 0.0
  %208 = vmatprep.subr.mxu0 0.0
  %209 = vmatpush1.msra.mxu0 0.0
  %210 = vmatprep.mubr.f32.mxu0 0.0
  %211 = vmatmul.mubr.f32.gmra.mrb[0].mxu0 %v51
  %v212 = vpop.f32.mrb[0].mxu0
  %v213 = vadd.f32 0.0, %v212
  %v214 = vpop.f32.mrb[0].mxu0
  %215 = vmatprep.mubr.f32.mxu0 0.0
  %216 = vmatmul.mubr.f32.gmra.mrb[0].mxu0 %v54
  %v217 = vpop.f32.mrb[0].mxu0
  %v218 = vadd.f32 0.0, %v217
  %v219 = vpop.f32.mrb[0].mxu0
  %220 = vmatprep.mubr.f32.mxu0 0.0
  %221 = vmatmul.mubr.f32.gmra.mrb[0].mxu0 %v57
  %v222 = vpop.f32.mrb[0].mxu0
  %v223 = vadd.f32 0.0, %v222
  %v224 = vpop.f32.mrb[0].mxu0
  %225 = vmatprep.mubr.f32.mxu0 0.0
  %226 = vmatmul.mubr.f32.gmra.mrb[0].mxu0 %v60
  %v227 = vpop.f32.mrb[0].mxu0
  %v228 = vadd.f32 0.0, %v227
  %v229 = vpop.f32.mrb[0].mxu0
  %230 = vmatprep.mubr.f32.mxu0 0.0
  %231 = vmatmul.mubr.f32.gmra.mrb[0].mxu0 %v63
  %v232 = vpop.f32.mrb[0].mxu0
  %v233 = vadd.f32 0.0, %v232
  %v234 = vpop.f32.mrb[0].mxu0
  %235 = vmatprep.mubr.f32.mxu0 0.0
  %236 = vmatmul.mubr.f32.gmra.mrb[0].mxu0 %v66
  %v237 = vpop.f32.mrb[0].mxu0
  %v238 = vadd.f32 0.0, %v237
  %v239 = vpop.f32.mrb[0].mxu0
  %240 = vmatprep.mubr.f32.mxu0 0.0
  %241 = vmatmul.mubr.f32.gmra.mrb[0].mxu0 %v69
  %v242 = vpop.f32.mrb[0].mxu0
  %v243 = vadd.f32 0.0, %v242
  %v244 = vpop.f32.mrb[0].mxu0
  %245 = vmatprep.mubr.f32.mxu0 0.0
  %246 = vmatmul.mubr.f32.gmra.mrb[0].mxu0 %v72
  %v247 = vpop.f32.mrb[0].mxu0
  %v248 = vadd.f32 0.0, %v247
  %v249 = vpop.f32.mrb[0].mxu0
  %250 = vmatprep.mubr.f32.mxu0 0.0
  %251 = vmatmul.mubr.f32.gmra.mrb[0].mxu0 %v75
  %v252 = vpop.f32.mrb[0].mxu0
  %v253 = vadd.f32 0.0, %v252
  %v254 = vpop.f32.mrb[0].mxu0
  %255 = vmatprep.mubr.f32.mxu0 0.0
  %256 = vmatmul.mubr.f32.gmra.mrb[0].mxu0 %v78
  %v257 = vpop.f32.mrb[0].mxu0
  %v258 = vadd.f32 0.0, %v257
  %v259 = vpop.f32.mrb[0].mxu0
  %260 = vmatprep.mubr.f32.mxu0 0.0
  %261 = vmatmul.mubr.f32.gmra.mrb[0].mxu0 %v81
  %v262 = vpop.f32.mrb[0].mxu0
  %v263 = vadd.f32 0.0, %v262
  %v264 = vpop.f32.mrb[0].mxu0
  %265 = vmatprep.mubr.f32.mxu0 0.0
  %266 = vmatmul.mubr.f32.gmra.mrb[0].mxu0 %v84
  %v267 = vpop.f32.mrb[0].mxu0
  %v268 = vadd.f32 0.0, %v267
  %v269 = vpop.f32.mrb[0].mxu0
  %270 = vmatprep.mubr.f32.mxu0 0.0
  %271 = vmatmul.mubr.f32.gmra.mrb[0].mxu0 %v87
  %v272 = vpop.f32.mrb[0].mxu0
  %v273 = vadd.f32 0.0, %v272
  %v274 = vpop.f32.mrb[0].mxu0
  %275 = vmatprep.mubr.f32.mxu0 0.0
  %276 = vmatmul.mubr.f32.gmra.mrb[0].mxu0 %v90
  %v277 = vpop.f32.mrb[0].mxu0
  %v278 = vadd.f32 0.0, %v277
  %v279 = vpop.f32.mrb[0].mxu0
  %280 = vmatprep.mubr.f32.mxu0 0.0
  %281 = vmatmul.mubr.f32.gmra.mrb[0].mxu0 %v93
  %v282 = vpop.f32.mrb[0].mxu0
  %v283 = vadd.f32 0.0, %v282
  %v284 = vpop.f32.mrb[0].mxu0
  %285 = vmatprep.mubr.f32.mxu0 0.0
  %286 = vmatmul.mubr.f32.gmra.mrb[0].mxu0 %v96
  %v287 = vpop.f32.mrb[0].mxu0
  %v288 = vadd.f32 0.0, %v287
  %v289 = vpop.f32.mrb[0].mxu0
  %290 = vmatprep.mubr.f32.mxu0 0.0
  %291 = vmatmul.mubr.f32.gmra.mrb[0].mxu0 %v99
  %v292 = vpop.f32.mrb[0].mxu0
  %v293 = vadd.f32 0.0, %v292
  %v294 = vpop.f32.mrb[0].mxu0
  %295 = vmatprep.mubr.f32.mxu0 0.0
  %296 = vmatmul.mubr.f32.gmra.mrb[0].mxu0 %v102
  %v297 = vpop.f32.mrb[0].mxu0
  %v298 = vadd.f32 0.0, %v297
  %v299 = vpop.f32.mrb[0].mxu0
  %300 = vmatprep.mubr.f32.mxu0 0.0
  %301 = vmatmul.mubr.f32.gmra.mrb[0].mxu0 %v105
  %v302 = vpop.f32.mrb[0].mxu0
  %v303 = vadd.f32 0.0, %v302
  %v304 = vpop.f32.mrb[0].mxu0
  %305 = vmatprep.mubr.f32.mxu0 0.0
  %306 = vmatmul.mubr.f32.gmra.mrb[0].mxu0 %v108
  %v307 = vpop.f32.mrb[0].mxu0
  %v308 = vadd.f32 0.0, %v307
  %v309 = vpop.f32.mrb[0].mxu0
  %310 = vmatprep.mubr.f32.mxu0 0.0
  %311 = vmatmul.mubr.f32.gmra.mrb[0].mxu0 %v111
  %v312 = vpop.f32.mrb[0].mxu0
  %v313 = vadd.f32 0.0, %v312
  %v314 = vpop.f32.mrb[0].mxu0
  %315 = vmatprep.mubr.f32.mxu0 0.0
  %316 = vmatmul.mubr.f32.gmra.mrb[0].mxu0 %v114
  %v317 = vpop.f32.mrb[0].mxu0
  %v318 = vadd.f32 0.0, %v317
  %v319 = vpop.f32.mrb[0].mxu0
  %320 = vmatprep.mubr.f32.mxu0 0.0
  %321 = vmatmul.mubr.f32.gmra.mrb[0].mxu0 %v117
  %v322 = vpop.f32.mrb[0].mxu0
  %v323 = vadd.f32 0.0, %v322
  %v324 = vpop.f32.mrb[0].mxu0
  %325 = vmatprep.mubr.f32.mxu0 0.0
  %326 = vmatmul.mubr.f32.gmra.mrb[0].mxu0 %v120
  %v327 = vpop.f32.mrb[0].mxu0
  %v328 = vadd.f32 0.0, %v327
  %v329 = vpop.f32.mrb[0].mxu0
  %330 = vmatprep.mubr.f32.mxu0 0.0
  %331 = vmatmul.mubr.f32.gmra.mrb[0].mxu0 %v123
  %v332 = vpop.f32.mrb[0].mxu0
  %v333 = vadd.f32 0.0, %v332
  %v334 = vpop.f32.mrb[0].mxu0
  %335 = vmatprep.mubr.f32.mxu0 0.0
  %336 = vmatmul.mubr.f32.gmra.mrb[0].mxu0 %v126
  %v337 = vpop.f32.mrb[0].mxu0
  %v338 = vadd.f32 0.0, %v337
  %v339 = vpop.f32.mrb[0].mxu0
  %340 = vmatprep.mubr.f32.mxu0 0.0
  %341 = vmatmul.mubr.f32.gmra.mrb[0].mxu0 %v129
  %v342 = vpop.f32.mrb[0].mxu0
  %v343 = vadd.f32 0.0, %v342
  %v344 = vpop.f32.mrb[0].mxu0
  %345 = vmatprep.mubr.f32.mxu0 0.0
  %346 = vmatmul.mubr.f32.gmra.mrb[0].mxu0 %v132
  %v347 = vpop.f32.mrb[0].mxu0
  %v348 = vadd.f32 0.0, %v347
  %v349 = vpop.f32.mrb[0].mxu0
  %350 = vmatprep.mubr.f32.mxu0 0.0
  %351 = vmatmul.mubr.f32.gmra.mrb[0].mxu0 %v135
  %v352 = vpop.f32.mrb[0].mxu0
  %v353 = vadd.f32 0.0, %v352
  %v354 = vpop.f32.mrb[0].mxu0
  %355 = vmatprep.mubr.f32.mxu0 0.0
  %356 = vmatmul.mubr.f32.gmra.mrb[0].mxu0 %v138
  %v357 = vpop.f32.mrb[0].mxu0
  %v358 = vadd.f32 0.0, %v357
  %v359 = vpop.f32.mrb[0].mxu0
  %360 = vmatprep.mubr.f32.mxu0 0.0
  %361 = vmatmul.mubr.f32.gmra.mrb[0].mxu0 %v141
  %v362 = vpop.f32.mrb[0].mxu0
  %v363 = vadd.f32 0.0, %v362
  %v364 = vpop.f32.mrb[0].mxu0
  %365 = vmatprep.mubr.f32.mxu0 0.0
  %366 = vmatmul.mubr.f32.gmra.mrb[0].mxu0 %v144
  %v367 = vpop.f32.mrb[0].mxu0
  %v368 = vadd.f32 0.0, %v367
  %v369 = vpop.f32.mrb[0].mxu0
  %370 = vdwg.mxu0
  %v371 = vpack.c.bf16 %v218, %v213
  %v372 = vpack.c.bf16 %v228, %v223
  %v373 = vpack.c.bf16 %v238, %v233
  %v374 = vpack.c.bf16 %v248, %v243
  %v375 = vpack.c.bf16 %v258, %v253
  %v376 = vpack.c.bf16 %v268, %v263
  %v377 = vpack.c.bf16 %v278, %v273
  %v378 = vpack.c.bf16 %v288, %v283
  %v379 = vpack.c.bf16 %v298, %v293
  %v380 = vpack.c.bf16 %v308, %v303
  %v381 = vpack.c.bf16 %v318, %v313
  %v382 = vpack.c.bf16 %v328, %v323
  %v383 = vpack.c.bf16 %v338, %v333
  %v384 = vpack.c.bf16 %v348, %v343
  %v385 = vpack.c.bf16 %v358, %v353
  %v386 = vpack.c.bf16 %v368, %v363
  %v403 = vunpack.c.l.b16 %v371
  %v404 = vunpack.c.h.b16 %v371
  %v405 = vunpack.c.l.b16 %v372
  %v406 = vunpack.c.h.b16 %v372
  %v407 = vunpack.c.l.b16 %v373
  %v408 = vunpack.c.h.b16 %v373
  %v409 = vunpack.c.l.b16 %v374
  %v410 = vunpack.c.h.b16 %v374
  %v411 = vunpack.c.l.b16 %v375
  %v412 = vunpack.c.h.b16 %v375
  %v413 = vunpack.c.l.b16 %v376
  %v414 = vunpack.c.h.b16 %v376
  %v415 = vunpack.c.l.b16 %v377
  %v416 = vunpack.c.h.b16 %v377
  %v417 = vunpack.c.l.b16 %v378
  %v418 = vunpack.c.h.b16 %v378
  %v419 = vunpack.c.l.b16 %v379
  %v420 = vunpack.c.h.b16 %v379
  %v421 = vunpack.c.l.b16 %v380
  %v422 = vunpack.c.h.b16 %v380
  %v423 = vunpack.c.l.b16 %v381
  %v424 = vunpack.c.h.b16 %v381
  %v425 = vunpack.c.l.b16 %v382
  %v426 = vunpack.c.h.b16 %v382
  %v427 = vunpack.c.l.b16 %v383
  %v428 = vunpack.c.h.b16 %v383
  %v429 = vunpack.c.l.b16 %v384
  %v430 = vunpack.c.h.b16 %v384
  %v431 = vunpack.c.l.b16 %v385
  %v432 = vunpack.c.h.b16 %v385
  %v433 = vunpack.c.l.b16 %v386
  %v434 = vunpack.c.h.b16 %v386
  %v435 = vpack.c.b16 %v403, %v403
  %v436 = vpack.c.b16 %v404, %v404
  %v437 = vpack.c.b16 %v405, %v405
  %v438 = vpack.c.b16 %v406, %v406
  %v439 = vpack.c.b16 %v407, %v407
  %v440 = vpack.c.b16 %v408, %v408
  %v441 = vpack.c.b16 %v409, %v409
  %v442 = vpack.c.b16 %v410, %v410
  %v443 = vpack.c.b16 %v411, %v411
  %v444 = vpack.c.b16 %v412, %v412
  %v445 = vpack.c.b16 %v413, %v413
  %v446 = vpack.c.b16 %v414, %v414
  %v447 = vpack.c.b16 %v415, %v415
  %v448 = vpack.c.b16 %v416, %v416
  %v449 = vpack.c.b16 %v417, %v417
  %v450 = vpack.c.b16 %v418, %v418
  %v451 = vpack.c.b16 %v419, %v419
  %v452 = vpack.c.b16 %v420, %v420
  %v453 = vpack.c.b16 %v421, %v421
  %v454 = vpack.c.b16 %v422, %v422
  %v455 = vpack.c.b16 %v423, %v423
  %v456 = vpack.c.b16 %v424, %v424
  %v457 = vpack.c.b16 %v425, %v425
  %v458 = vpack.c.b16 %v426, %v426
  %v459 = vpack.c.b16 %v427, %v427
  %v460 = vpack.c.b16 %v428, %v428
  %v461 = vpack.c.b16 %v429, %v429
  %v462 = vpack.c.b16 %v430, %v430
  %v463 = vpack.c.b16 %v431, %v431
  %v464 = vpack.c.b16 %v432, %v432
  %v465 = vpack.c.b16 %v433, %v433
  %v466 = vpack.c.b16 %v434, %v434
  %vm499 = vcmask 224256
  %500 = vst.msk [vmem:[%s2] sm:$0xf] %vm499, %v435
  %501 = vst.msk [vmem:[%s2 + $0x4] sm:$0xf] %vm499, %v436
  %502 = vst.msk [vmem:[%s2 + $0x8] sm:$0xf] %vm499, %v437
  %503 = vst.msk [vmem:[%s2 + $0xc] sm:$0xf] %vm499, %v438
  %504 = vst.msk [vmem:[%s2 + $0x10] sm:$0xf] %vm499, %v439
  %505 = vst.msk [vmem:[%s2 + $0x14] sm:$0xf] %vm499, %v440
  %506 = vst.msk [vmem:[%s2 + $0x18] sm:$0xf] %vm499, %v441
  %507 = vst.msk [vmem:[%s2 + $0x1c] sm:$0xf] %vm499, %v442
  %508 = vst.msk [vmem:[%s2 + $0x20] sm:$0xf] %vm499, %v443
  %509 = vst.msk [vmem:[%s2 + $0x24] sm:$0xf] %vm499, %v444
  %510 = vst.msk [vmem:[%s2 + $0x28] sm:$0xf] %vm499, %v445
  %511 = vst.msk [vmem:[%s2 + $0x2c] sm:$0xf] %vm499, %v446
  %512 = vst.msk [vmem:[%s2 + $0x30] sm:$0xf] %vm499, %v447
  %513 = vst.msk [vmem:[%s2 + $0x34] sm:$0xf] %vm499, %v448
  %514 = vst.msk [vmem:[%s2 + $0x38] sm:$0xf] %vm499, %v449
  %515 = vst.msk [vmem:[%s2 + $0x3c] sm:$0xf] %vm499, %v450
  %516 = vst.msk [vmem:[%s2 + $0x40] sm:$0xf] %vm499, %v451
  %517 = vst.msk [vmem:[%s2 + $0x44] sm:$0xf] %vm499, %v452
  %518 = vst.msk [vmem:[%s2 + $0x48] sm:$0xf] %vm499, %v453
  %519 = vst.msk [vmem:[%s2 + $0x4c] sm:$0xf] %vm499, %v454
  %520 = vst.msk [vmem:[%s2 + $0x50] sm:$0xf] %vm499, %v455
  %521 = vst.msk [vmem:[%s2 + $0x54] sm:$0xf] %vm499, %v456
  %522 = vst.msk [vmem:[%s2 + $0x58] sm:$0xf] %vm499, %v457
  %523 = vst.msk [vmem:[%s2 + $0x5c] sm:$0xf] %vm499, %v458
  %524 = vst.msk [vmem:[%s2 + $0x60] sm:$0xf] %vm499, %v459
  %525 = vst.msk [vmem:[%s2 + $0x64] sm:$0xf] %vm499, %v460
  %526 = vst.msk [vmem:[%s2 + $0x68] sm:$0xf] %vm499, %v461
  %527 = vst.msk [vmem:[%s2 + $0x6c] sm:$0xf] %vm499, %v462
  %528 = vst.msk [vmem:[%s2 + $0x70] sm:$0xf] %vm499, %v463
  %529 = vst.msk [vmem:[%s2 + $0x74] sm:$0xf] %vm499, %v464
  %530 = vst.msk [vmem:[%s2 + $0x78] sm:$0xf] %vm499, %v465
  %531 = vst.msk [vmem:[%s2 + $0x7c] sm:$0xf] %vm499, %v466
  // Predicated region
  $region10: #{gcn_merge_forward.7} parent=0 // pred_check
    _
  $region11: #{gcn_merge_forward.7} parent=0 // pred_check_branch
    %533 = sbr.rel (0) target = $region13
  $region12: #{gcn_merge_forward.7} parent=0 // pred_region
    _
  $region13: #{gcn_merge_forward.7} parent=0 // pred_fallthru
    _
  // Predicated region
  $region14: #{gcn_merge_forward.7} parent=0 // pred_check
    _
  $region15: #{gcn_merge_forward.7} parent=0 // pred_check_branch
    %535 = sbr.rel (0) target = $region17
  $region16: #{gcn_merge_forward.7} parent=0 // pred_region
    _
  $region17: #{gcn_merge_forward.7} parent=0 // pred_fallthru
    _

// kernel: gcn_merge_forward.6
$region0: #{gcn_merge_forward.6}
  #allocation0 [shape = 'u32[]', space=smem, size = 0x4, offset = 0x4, fixed_abs, tag = 'smem constant byte address 0x4 - core index']
  #allocation1 [shape = 'u32[144,128]{1,0:T(1,128)}', space=vmem, size = 0x12000, scoped, tag = 'internal scratch']
  %s0 = inlined_call_operand.vmem [shape: bf16[256,256], index: 0, kind: input, shape index: {}]
  %s1 = inlined_call_operand.vmem [shape: bf16[256,52], index: 1, kind: input, shape index: {}]
  %s2 = inlined_call_operand.vmem [shape: f32[2,256], index: 2, kind: input, shape index: {}]
  %s3 = inlined_call_operand.vmem [shape: f32[1,128], index: 3, kind: input, shape index: {}]
  %s4 = inlined_call_operand.vmem [shape: f32[256,128], index: 4, kind: output, shape index: {}]
  %s5 = sld [smem:[#allocation0]]
  $region49: #{gcn_merge_forward.6} parent=0
    _
  %s7 = ssub.s32 1, %s5
  %s8 = scalar_select 0, %s7, %s5
  loop: start=0, step=1, limit=4
  $region2: #{gcn_merge_forward.6} parent=0 // loop_pre_header
    _
  $region3: #{gcn_merge_forward.6} parent=0 // loop_header
    %s10 = sphi 0, %s14
    %p11 = scmp.ge.s32.totalorder %s10, 4
    %s20 = sphi 0, %s22
    %s23 = sphi 0, %s20
    %s24 = sphi 0, %s23
    %s40 = sphi 0, %s24
    %s44 = sphi 0, %s44
    %s46 = sphi 0, %s44
    %s47 = sphi 0, %s46
    %s61 = sphi 0, %s47
    %s65 = sphi 0, %s65
    %s67 = sphi 0, %s65
    %s68 = sphi 0, %s67
    %s82 = sphi 0, %s68
    %s86 = sphi 0, %s86
    %s88 = sphi 0, %s86
    %s89 = sphi 0, %s88
    %s103 = sphi 0, %s89
    %s109 = sphi 0, %s111
    %s112 = sphi 0, %s109
    %s113 = sphi 0, %s112
    %s129 = sphi 0, %s113
  $region4: #{gcn_merge_forward.6} parent=0 // loop_header_branch
    %13 = sbr.rel (%p11) target = $region8
  $region5: #{gcn_merge_forward.6} parent=0 // loop_body
    %s15 = ssub.s32 %s10, 1
    %s16 = ssub.s32 %s10, 2
    %s17 = sadd.s32 %s10, 1
    %s18 = ssub.s32 %s10, %s17
    %p19 = scmp.eq.s32.totalorder %s18, 0
    %s21 = sadd.s32 %s20, 1
    %s22 = scalar_select %p19, %s20, %s21
    %p25 = pneg %p19
    %p26 = scmp.eq.s32.totalorder %s10, 1
    %p27 = por %p25, %p26
    %p28 = scmp.ne.s32.totalorder %s20, %s23
    %p29 = scmp.eq.s32.totalorder %s10, 0
    %p30 = por %p28, %p29
    %p31 = scmp.ne.s32.totalorder %s20, %s23
    %p32 = scmp.eq.s32.totalorder %s15, 1
    %p33 = por %p31, %p32
    %p34 = scmp.ne.s32.totalorder %s23, %s24
    %p35 = scmp.eq.s32.totalorder %s15, 0
    %p36 = por %p34, %p35
    %p37 = scmp.ne.s32.totalorder %s23, %s24
    %p38 = scmp.eq.s32.totalorder %s16, 1
    %p39 = por %p37, %p38
    %p41 = scmp.ne.s32.totalorder %s24, %s40
    %p42 = scmp.eq.s32.totalorder %s16, 0
    %p43 = por %p41, %p42
    %s45 = sadd.s32 %s44, 1
    %p48 = scmp.eq.s32.totalorder %s10, 1
    %p49 = scmp.ne.s32.totalorder %s44, %s46
    %p50 = scmp.eq.s32.totalorder %s10, 0
    %p51 = por %p49, %p50
    %p52 = scmp.ne.s32.totalorder %s44, %s46
    %p53 = scmp.eq.s32.totalorder %s15, 1
    %p54 = por %p52, %p53
    %p55 = scmp.ne.s32.totalorder %s46, %s47
    %p56 = scmp.eq.s32.totalorder %s15, 0
    %p57 = por %p55, %p56
    %p58 = scmp.ne.s32.totalorder %s46, %s47
    %p59 = scmp.eq.s32.totalorder %s16, 1
    %p60 = por %p58, %p59
    %p62 = scmp.ne.s32.totalorder %s47, %s61
    %p63 = scmp.eq.s32.totalorder %s16, 0
    %p64 = por %p62, %p63
    %s66 = sadd.s32 %s65, 1
    %p69 = scmp.eq.s32.totalorder %s10, 1
    %p70 = scmp.ne.s32.totalorder %s65, %s67
    %p71 = scmp.eq.s32.totalorder %s10, 0
    %p72 = por %p70, %p71
    %p73 = scmp.ne.s32.totalorder %s65, %s67
    %p74 = scmp.eq.s32.totalorder %s15, 1
    %p75 = por %p73, %p74
    %p76 = scmp.ne.s32.totalorder %s67, %s68
    %p77 = scmp.eq.s32.totalorder %s15, 0
    %p78 = por %p76, %p77
    %p79 = scmp.ne.s32.totalorder %s67, %s68
    %p80 = scmp.eq.s32.totalorder %s16, 1
    %p81 = por %p79, %p80
    %p83 = scmp.ne.s32.totalorder %s68, %s82
    %p84 = scmp.eq.s32.totalorder %s16, 0
    %p85 = por %p83, %p84
    %s87 = sadd.s32 %s86, 1
    %p90 = scmp.eq.s32.totalorder %s10, 1
    %p91 = scmp.ne.s32.totalorder %s86, %s88
    %p92 = scmp.eq.s32.totalorder %s10, 0
    %p93 = por %p91, %p92
    %p94 = scmp.ne.s32.totalorder %s86, %s88
    %p95 = scmp.eq.s32.totalorder %s15, 1
    %p96 = por %p94, %p95
    %p97 = scmp.ne.s32.totalorder %s88, %s89
    %p98 = scmp.eq.s32.totalorder %s15, 0
    %p99 = por %p97, %p98
    %p100 = scmp.ne.s32.totalorder %s88, %s89
    %p101 = scmp.eq.s32.totalorder %s16, 1
    %p102 = por %p100, %p101
    %p104 = scmp.ne.s32.totalorder %s89, %s103
    %p105 = scmp.eq.s32.totalorder %s16, 0
    %p106 = por %p104, %p105
    %s107 = ssub.s32 %s10, %s17
    %p108 = scmp.eq.s32.totalorder %s107, 0
    %s110 = sadd.s32 %s109, 1
    %s111 = scalar_select %p108, %s109, %s110
    %p114 = pneg %p108
    %p115 = scmp.eq.s32.totalorder %s10, 1
    %p116 = por %p114, %p115
    %p117 = scmp.ne.s32.totalorder %s109, %s112
    %p118 = scmp.eq.s32.totalorder %s10, 0
    %p119 = por %p117, %p118
    %p120 = scmp.ne.s32.totalorder %s109, %s112
    %p121 = scmp.eq.s32.totalorder %s15, 1
    %p122 = por %p120, %p121
    %p123 = scmp.ne.s32.totalorder %s112, %s113
    %p124 = scmp.eq.s32.totalorder %s15, 0
    %p125 = por %p123, %p124
    %p126 = scmp.ne.s32.totalorder %s112, %s113
    %p127 = scmp.eq.s32.totalorder %s16, 1
    %p128 = por %p126, %p127
    %p130 = scmp.ne.s32.totalorder %s113, %s129
    %p131 = scmp.eq.s32.totalorder %s16, 0
    %p132 = por %p130, %p131
    %p133 = scmp.le.s32.totalorder 1, %s10
    %p134 = scmp.lt.s32.totalorder %s10, 3
    %p135 = pnand %p133, %p134
    %p136 = pneg %p135
    // Predicated region
    $region9: #{gcn_merge_forward.6} parent=5 // pred_check
      _
    $region10: #{gcn_merge_forward.6} parent=5 // pred_check_branch
      %138 = sbr.rel (%p135) target = $region12
    $region11: #{gcn_merge_forward.6} parent=5 // pred_region
      %s139 = ssub.s32 %s10, 1
      // Predicated region
      $region13: #{gcn_merge_forward.6} parent=11 // pred_check
        %p140 = pneg %p57
      $region14: #{gcn_merge_forward.6} parent=11 // pred_check_branch
        %142 = sbr.rel (%p140) target = $region16
      $region15: #{gcn_merge_forward.6} parent=11 // pred_region
        _
      $region16: #{gcn_merge_forward.6} parent=11 // pred_fallthru
        _
      // Predicated region
      $region17: #{gcn_merge_forward.6} parent=11 // pred_check
        %p143 = pneg %p78
      $region18: #{gcn_merge_forward.6} parent=11 // pred_check_branch
        %145 = sbr.rel (%p143) target = $region20
      $region19: #{gcn_merge_forward.6} parent=11 // pred_region
        _
      $region20: #{gcn_merge_forward.6} parent=11 // pred_fallthru
        _
      // Predicated region
      $region21: #{gcn_merge_forward.6} parent=11 // pred_check
        %p146 = pneg %p99
      $region22: #{gcn_merge_forward.6} parent=11 // pred_check_branch
        %148 = sbr.rel (%p146) target = $region24
      $region23: #{gcn_merge_forward.6} parent=11 // pred_region
        _
      $region24: #{gcn_merge_forward.6} parent=11 // pred_fallthru
        _
    $region12: #{gcn_merge_forward.6} parent=5 // pred_fallthru
      _
    %p149 = scmp.lt.s32.totalorder %s10, 2
    // Predicated region
    $region25: #{gcn_merge_forward.6} parent=5 // pred_check
      %p150 = pneg %p149
    $region26: #{gcn_merge_forward.6} parent=5 // pred_check_branch
      %152 = sbr.rel (%p150) target = $region28
    $region27: #{gcn_merge_forward.6} parent=5 // pred_region
      // Predicated region
      $region29: #{gcn_merge_forward.6} parent=27 // pred_check
        %p153 = pneg %p30
      $region30: #{gcn_merge_forward.6} parent=27 // pred_check_branch
        %155 = sbr.rel (%p153) target = $region32
      $region31: #{gcn_merge_forward.6} parent=27 // pred_region
        %s156 = smul.u32 16, %s10
        %p157 = scmp.lt.s32.totalorder %s156, 31
        %s158 = scalar_select %p157, %s156, 31
        %s159 = smul.addr %s158, 2
        %s160 = smul.addr %s159, 4
        %s161 = scalar_lea.vmem %s0, %s160
        %s162 = smul.u32 16, %s10
      $region32: #{gcn_merge_forward.6} parent=27 // pred_fallthru
        _
    $region28: #{gcn_merge_forward.6} parent=5 // pred_fallthru
      _
    %p163 = scmp.le.s32.totalorder 1, %s10
    %p164 = scmp.lt.s32.totalorder %s10, 3
    %p165 = pnand %p163, %p164
    %p166 = pneg %p165
    // Predicated region
    $region33: #{gcn_merge_forward.6} parent=5 // pred_check
      _
    $region34: #{gcn_merge_forward.6} parent=5 // pred_check_branch
      %168 = sbr.rel (%p165) target = $region36
    $region35: #{gcn_merge_forward.6} parent=5 // pred_region
      %s169 = ssub.s32 %s10, 1
      %s170 = smul.u32 16, %s15
      %p171 = scmp.lt.s32.totalorder %s170, 31
      %s172 = scalar_select %p171, %s170, 31
      %s173 = smul.addr %s172, 2
      %s174 = smul.addr %s173, 4
      %s175 = scalar_lea.vmem %s0, %s174
      %p176 = pneg %p36
      %p177 = pneg %p33
      %p178 = pneg %p57
      %p179 = pneg %p54
      %p180 = pneg %p78
      %p181 = pneg %p75
      %p182 = pneg %p99
      %p183 = pneg %p96
      %p184 = pneg %p125
      %p185 = pneg %p122
      %s186 = smul.u32 16, %s15
      %p187 = scmp.lt.s32.totalorder %s186, 31
      %s188 = scalar_select %p187, %s186, 31
      %s189 = smul.addr %s188, 8
      %s190 = scalar_lea.vmem %s4, %s189
      %s191 = smul.u32 16, %s15
      %p192 = scmp.lt.s32.totalorder %s191, 31
      %s193 = scalar_select %p192, %s191, 31
      %s194 = smul.addr %s193, 2
      %s195 = smul.addr %s194, 4
      %s196 = scalar_lea.vmem %s0, %s195
      %s197 = smul.u32 16, %s15
      %s198 = smul.u32 16, %s15
      %p199 = scmp.lt.s32.totalorder %s198, 31
      %s200 = scalar_select %p199, %s198, 31
      %s201 = smul.addr %s200, 8
      %s202 = scalar_lea.vmem %s4, %s201
      %s203 = smul.u32 16, %s15
      %v207 = vld [vmem:[%s196] sm:$0xff]
      %v208 = vld [vmem:[%s196 + $0x8] sm:$0xff]
      %v209 = vld [vmem:[%s196 + $0x10] sm:$0xff]
      %v210 = vld [vmem:[%s196 + $0x18] sm:$0xff]
      %v211 = vld [vmem:[%s196 + $0x20] sm:$0xff]
      %v212 = vld [vmem:[%s196 + $0x28] sm:$0xff]
      %v213 = vld [vmem:[%s196 + $0x30] sm:$0xff]
      %v214 = vld [vmem:[%s196 + $0x38] sm:$0xff]
      %v215 = vld [vmem:[%s196 + $0x40] sm:$0xff]
      %v216 = vld [vmem:[%s196 + $0x48] sm:$0xff]
      %v217 = vld [vmem:[%s196 + $0x50] sm:$0xff]
      %v218 = vld [vmem:[%s196 + $0x58] sm:$0xff]
      %v219 = vld [vmem:[%s196 + $0x60] sm:$0xff]
      %v220 = vld [vmem:[%s196 + $0x68] sm:$0xff]
      %v221 = vld [vmem:[%s196 + $0x70] sm:$0xff]
      %v222 = vld [vmem:[%s196 + $0x78] sm:$0xff]
      %vm223 = vcmp.gt.bf16.partialorder %v207, 0
      %vm224 = vcmp.gt.bf16.partialorder %v208, 0
      %vm225 = vcmp.gt.bf16.partialorder %v209, 0
      %vm226 = vcmp.gt.bf16.partialorder %v210, 0
      %vm227 = vcmp.gt.bf16.partialorder %v211, 0
      %vm228 = vcmp.gt.bf16.partialorder %v212, 0
      %vm229 = vcmp.gt.bf16.partialorder %v213, 0
      %vm230 = vcmp.gt.bf16.partialorder %v214, 0
      %vm231 = vcmp.gt.bf16.partialorder %v215, 0
      %vm232 = vcmp.gt.bf16.partialorder %v216, 0
      %vm233 = vcmp.gt.bf16.partialorder %v217, 0
      %vm234 = vcmp.gt.bf16.partialorder %v218, 0
      %vm235 = vcmp.gt.bf16.partialorder %v219, 0
      %vm236 = vcmp.gt.bf16.partialorder %v220, 0
      %vm237 = vcmp.gt.bf16.partialorder %v221, 0
      %vm238 = vcmp.gt.bf16.partialorder %v222, 0
      %v239 = vld [vmem:[%s1] sm:$0xf]
      %v240 = vld [vmem:[%s1 + $0x4] sm:$0xf]
      %v241 = vld [vmem:[%s1 + $0x8] sm:$0xf]
      %v242 = vld [vmem:[%s1 + $0xc] sm:$0xf]
      %v243 = vld [vmem:[%s1 + $0x10] sm:$0xf]
      %v244 = vld [vmem:[%s1 + $0x14] sm:$0xf]
      %v245 = vld [vmem:[%s1 + $0x18] sm:$0xf]
      %v246 = vld [vmem:[%s1 + $0x1c] sm:$0xf]
      %v247 = vld [vmem:[%s1 + $0x20] sm:$0xf]
      %v248 = vld [vmem:[%s1 + $0x24] sm:$0xf]
      %v249 = vld [vmem:[%s1 + $0x28] sm:$0xf]
      %v250 = vld [vmem:[%s1 + $0x2c] sm:$0xf]
      %v251 = vld [vmem:[%s1 + $0x30] sm:$0xf]
      %v252 = vld [vmem:[%s1 + $0x34] sm:$0xf]
      %v253 = vld [vmem:[%s1 + $0x38] sm:$0xf]
      %v254 = vld [vmem:[%s1 + $0x3c] sm:$0xf]
      %v255 = vld [vmem:[%s1 + $0x40] sm:$0xf]
      %v256 = vld [vmem:[%s1 + $0x44] sm:$0xf]
      %v257 = vld [vmem:[%s1 + $0x48] sm:$0xf]
      %v258 = vld [vmem:[%s1 + $0x4c] sm:$0xf]
      %v259 = vld [vmem:[%s1 + $0x50] sm:$0xf]
      %v260 = vld [vmem:[%s1 + $0x54] sm:$0xf]
      %v261 = vld [vmem:[%s1 + $0x58] sm:$0xf]
      %v262 = vld [vmem:[%s1 + $0x5c] sm:$0xf]
      %v263 = vld [vmem:[%s1 + $0x60] sm:$0xf]
      %v264 = vld [vmem:[%s1 + $0x64] sm:$0xf]
      %v265 = vld [vmem:[%s1 + $0x68] sm:$0xf]
      %v266 = vld [vmem:[%s1 + $0x6c] sm:$0xf]
      %v267 = vld [vmem:[%s1 + $0x70] sm:$0xf]
      %v268 = vld [vmem:[%s1 + $0x74] sm:$0xf]
      %v269 = vld [vmem:[%s1 + $0x78] sm:$0xf]
      %v270 = vld [vmem:[%s1 + $0x7c] sm:$0xf]
      %s271 = smul.u32 %s15, 128
      %s272 = sshra.s32 %s271, 3
      %s273 = sand.u32 %s271, 7
      %s274 = smul.addr %s272, 4
      %s275 = scalar_lea.vmem %s1, %s274
      %v276 = vld [vmem:[%s275] sm:$0xf]
      %v277 = vld [vmem:[%s275 + $0x4] sm:$0xf]
      %v278 = vld [vmem:[%s275 + $0x8] sm:$0xf]
      %v279 = vld [vmem:[%s275 + $0xc] sm:$0xf]
      %v280 = vld [vmem:[%s275 + $0x10] sm:$0xf]
      %v281 = vld [vmem:[%s275 + $0x14] sm:$0xf]
      %v282 = vld [vmem:[%s275 + $0x18] sm:$0xf]
      %v283 = vld [vmem:[%s275 + $0x1c] sm:$0xf]
      %v284 = vld [vmem:[%s275 + $0x20] sm:$0xf]
      %v285 = vld [vmem:[%s275 + $0x24] sm:$0xf]
      %v286 = vld [vmem:[%s275 + $0x28] sm:$0xf]
      %v287 = vld [vmem:[%s275 + $0x2c] sm:$0xf]
      %v288 = vld [vmem:[%s275 + $0x30] sm:$0xf]
      %v289 = vld [vmem:[%s275 + $0x34] sm:$0xf]
      %v290 = vld [vmem:[%s275 + $0x38] sm:$0xf]
      %v291 = vld [vmem:[%s275 + $0x3c] sm:$0xf]
      %v308 = vunpack.c.l.b16 %v207
      %v309 = vunpack.c.h.b16 %v207
      %v310 = vunpack.c.l.b16 %v208
      %v311 = vunpack.c.h.b16 %v208
      %v312 = vunpack.c.l.b16 %v209
      %v313 = vunpack.c.h.b16 %v209
      %v314 = vunpack.c.l.b16 %v210
      %v315 = vunpack.c.h.b16 %v210
      %v316 = vunpack.c.l.b16 %v211
      %v317 = vunpack.c.h.b16 %v211
      %v318 = vunpack.c.l.b16 %v212
      %v319 = vunpack.c.h.b16 %v212
      %v320 = vunpack.c.l.b16 %v213
      %v321 = vunpack.c.h.b16 %v213
      %v322 = vunpack.c.l.b16 %v214
      %v323 = vunpack.c.h.b16 %v214
      %v324 = vunpack.c.l.b16 %v215
      %v325 = vunpack.c.h.b16 %v215
      %v326 = vunpack.c.l.b16 %v216
      %v327 = vunpack.c.h.b16 %v216
      %v328 = vunpack.c.l.b16 %v217
      %v329 = vunpack.c.h.b16 %v217
      %v330 = vunpack.c.l.b16 %v218
      %v331 = vunpack.c.h.b16 %v218
      %v332 = vunpack.c.l.b16 %v219
      %v333 = vunpack.c.h.b16 %v219
      %v334 = vunpack.c.l.b16 %v220
      %v335 = vunpack.c.h.b16 %v220
      %v336 = vunpack.c.l.b16 %v221
      %v337 = vunpack.c.h.b16 %v221
      %v338 = vunpack.c.l.b16 %v222
      %v339 = vunpack.c.h.b16 %v222
      %v340 = vpack.c.b16 %v310, %v308
      %v341 = vpack.c.b16 %v311, %v309
      %v342 = vpack.c.b16 %v314, %v312
      %v343 = vpack.c.b16 %v315, %v313
      %v344 = vpack.c.b16 %v318, %v316
      %v345 = vpack.c.b16 %v319, %v317
      %v346 = vpack.c.b16 %v322, %v320
      %v347 = vpack.c.b16 %v323, %v321
      %v348 = vpack.c.b16 %v326, %v324
      %v349 = vpack.c.b16 %v327, %v325
      %v350 = vpack.c.b16 %v330, %v328
      %v351 = vpack.c.b16 %v331, %v329
      %v352 = vpack.c.b16 %v334, %v332
      %v353 = vpack.c.b16 %v335, %v333
      %v354 = vpack.c.b16 %v338, %v336
      %v355 = vpack.c.b16 %v339, %v337
      %v404 = vunpack.c.l.b16 %v239
      %v405 = vunpack.c.l.b16 %v240
      %v406 = vunpack.c.l.b16 %v241
      %v407 = vunpack.c.l.b16 %v242
      %v408 = vunpack.c.l.b16 %v243
      %v409 = vunpack.c.l.b16 %v244
      %v410 = vunpack.c.l.b16 %v245
      %v411 = vunpack.c.l.b16 %v246
      %v412 = vunpack.c.l.b16 %v247
      %v413 = vunpack.c.l.b16 %v248
      %v414 = vunpack.c.l.b16 %v249
      %v415 = vunpack.c.l.b16 %v250
      %v416 = vunpack.c.l.b16 %v251
      %v417 = vunpack.c.l.b16 %v252
      %v418 = vunpack.c.l.b16 %v253
      %v419 = vunpack.c.l.b16 %v254
      %v420 = vunpack.c.l.b16 %v255
      %v421 = vunpack.c.l.b16 %v256
      %v422 = vunpack.c.l.b16 %v257
      %v423 = vunpack.c.l.b16 %v258
      %v424 = vunpack.c.l.b16 %v259
      %v425 = vunpack.c.l.b16 %v260
      %v426 = vunpack.c.l.b16 %v261
      %v427 = vunpack.c.l.b16 %v262
      %v428 = vunpack.c.l.b16 %v263
      %v429 = vunpack.c.l.b16 %v264
      %v430 = vunpack.c.l.b16 %v265
      %v431 = vunpack.c.l.b16 %v266
      %v432 = vunpack.c.l.b16 %v267
      %v433 = vunpack.c.l.b16 %v268
      %v434 = vunpack.c.l.b16 %v269
      %v435 = vunpack.c.l.b16 %v270
      %v436 = vpack.c.b16 %v405, %v404
      %v437 = vpack.c.b16 %v407, %v406
      %v438 = vpack.c.b16 %v409, %v408
      %v439 = vpack.c.b16 %v411, %v410
      %v440 = vpack.c.b16 %v413, %v412
      %v441 = vpack.c.b16 %v415, %v414
      %v442 = vpack.c.b16 %v417, %v416
      %v443 = vpack.c.b16 %v419, %v418
      %v444 = vpack.c.b16 %v421, %v420
      %v445 = vpack.c.b16 %v423, %v422
      %v446 = vpack.c.b16 %v425, %v424
      %v447 = vpack.c.b16 %v427, %v426
      %v448 = vpack.c.b16 %v429, %v428
      %v449 = vpack.c.b16 %v431, %v430
      %v450 = vpack.c.b16 %v433, %v432
      %v451 = vpack.c.b16 %v435, %v434
      %468 = vmatprep.subr.bf16.mxu0 0
      %469 = vmatpush1.bf16.msra.mxu0 %v436
      %470 = vmatprep.subr.bf16.mxu0 0
      %471 = vmatpush1.bf16.msra.mxu0 %v437
      %472 = vmatprep.subr.bf16.mxu0 0
      %473 = vmatpush1.bf16.msra.mxu0 %v438
      %474 = vmatprep.subr.bf16.mxu0 0
      %475 = vmatpush1.bf16.msra.mxu0 %v439
      %476 = vmatprep.subr.bf16.mxu0 0
      %477 = vmatpush1.bf16.msra.mxu0 %v440
      %478 = vmatprep.subr.bf16.mxu0 0
      %479 = vmatpush1.bf16.msra.mxu0 %v441
      %480 = vmatprep.subr.bf16.mxu0 0
      %481 = vmatpush1.bf16.msra.mxu0 %v442
      %482 = vmatprep.subr.bf16.mxu0 0
      %483 = vmatpush1.bf16.msra.mxu0 %v443
      %484 = vmatprep.subr.bf16.mxu0 0
      %485 = vmatpush1.bf16.msra.mxu0 %v444
      %486 = vmatprep.subr.bf16.mxu0 0
      %487 = vmatpush1.bf16.msra.mxu0 %v445
      %488 = vmatprep.subr.bf16.mxu0 0
      %489 = vmatpush1.bf16.msra.mxu0 %v446
      %490 = vmatprep.subr.bf16.mxu0 0
      %491 = vmatpush1.bf16.msra.mxu0 %v447
      %492 = vmatprep.subr.bf16.mxu0 0
      %493 = vmatpush1.bf16.msra.mxu0 %v448
      %494 = vmatprep.subr.bf16.mxu0 0
      %495 = vmatpush1.bf16.msra.mxu0 %v449
      %496 = vmatprep.subr.bf16.mxu0 0
      %497 = vmatpush1.bf16.msra.mxu0 %v450
      %498 = vmatprep.subr.bf16.mxu0 0
      %499 = vmatpush1.bf16.msra.mxu0 %v451
      %500 = vmatprep.mubr.bf16.mxu0 %v341
      %501 = vmatmul.mubr.bf16.gmra.mrb[0].mxu0 %v340
      %v502 = vpop.f32.mrb[0].mxu0
      %v503 = vadd.f32 0.0, %v502
      %v504 = vpop.f32.mrb[0].mxu0
      %v505 = vpop.f32.mrb[0].mxu0
      %v506 = vadd.f32 0.0, %v505
      %v507 = vpop.f32.mrb[0].mxu0
      %508 = vmatprep.mubr.bf16.mxu0 %v343
      %509 = vmatmul.mubr.bf16.gmra.mrb[0].mxu0 %v342
      %v510 = vpop.f32.mrb[0].mxu0
      %v511 = vadd.f32 0.0, %v510
      %v512 = vpop.f32.mrb[0].mxu0
      %v513 = vpop.f32.mrb[0].mxu0
      %v514 = vadd.f32 0.0, %v513
      %v515 = vpop.f32.mrb[0].mxu0
      %516 = vmatprep.mubr.bf16.mxu0 %v345
      %517 = vmatmul.mubr.bf16.gmra.mrb[0].mxu0 %v344
      %v518 = vpop.f32.mrb[0].mxu0
      %v519 = vadd.f32 0.0, %v518
      %v520 = vpop.f32.mrb[0].mxu0
      %v521 = vpop.f32.mrb[0].mxu0
      %v522 = vadd.f32 0.0, %v521
      %v523 = vpop.f32.mrb[0].mxu0
      %524 = vmatprep.mubr.bf16.mxu0 %v347
      %525 = vmatmul.mubr.bf16.gmra.mrb[0].mxu0 %v346
      %v526 = vpop.f32.mrb[0].mxu0
      %v527 = vadd.f32 0.0, %v526
      %v528 = vpop.f32.mrb[0].mxu0
      %v529 = vpop.f32.mrb[0].mxu0
      %v530 = vadd.f32 0.0, %v529
      %v531 = vpop.f32.mrb[0].mxu0
      %532 = vmatprep.mubr.bf16.mxu0 %v349
      %533 = vmatmul.mubr.bf16.gmra.mrb[0].mxu0 %v348
      %v534 = vpop.f32.mrb[0].mxu0
      %v535 = vadd.f32 0.0, %v534
      %v536 = vpop.f32.mrb[0].mxu0
      %v537 = vpop.f32.mrb[0].mxu0
      %v538 = vadd.f32 0.0, %v537
      %v539 = vpop.f32.mrb[0].mxu0
      %540 = vmatprep.mubr.bf16.mxu0 %v351
      %541 = vmatmul.mubr.bf16.gmra.mrb[0].mxu0 %v350
      %v542 = vpop.f32.mrb[0].mxu0
      %v543 = vadd.f32 0.0, %v542
      %v544 = vpop.f32.mrb[0].mxu0
      %v545 = vpop.f32.mrb[0].mxu0
      %v546 = vadd.f32 0.0, %v545
      %v547 = vpop.f32.mrb[0].mxu0
      %548 = vmatprep.mubr.bf16.mxu0 %v353
      %549 = vmatmul.mubr.bf16.gmra.mrb[0].mxu0 %v352
      %v550 = vpop.f32.mrb[0].mxu0
      %v551 = vadd.f32 0.0, %v550
      %v552 = vpop.f32.mrb[0].mxu0
      %v553 = vpop.f32.mrb[0].mxu0
      %v554 = vadd.f32 0.0, %v553
      %v555 = vpop.f32.mrb[0].mxu0
      %556 = vmatprep.mubr.bf16.mxu0 %v355
      %557 = vmatmul.mubr.bf16.gmra.mrb[0].mxu0 %v354
      %v558 = vpop.f32.mrb[0].mxu0
      %v559 = vadd.f32 0.0, %v558
      %v560 = vpop.f32.mrb[0].mxu0
      %v561 = vpop.f32.mrb[0].mxu0
      %v562 = vadd.f32 0.0, %v561
      %v563 = vpop.f32.mrb[0].mxu0
      %564 = vdwg.mxu0
      %v565 = vld [vmem:[%s2] ss:$2 sm:$0x3]
      %v566 = vunpack.c.l.bf16 %v276
      %v567 = vunpack.c.l.bf16 %v277
      %v568 = vunpack.c.l.bf16 %v278
      %v569 = vunpack.c.l.bf16 %v279
      %v570 = vunpack.c.l.bf16 %v280
      %v571 = vunpack.c.l.bf16 %v281
      %v572 = vunpack.c.l.bf16 %v282
      %v573 = vunpack.c.l.bf16 %v283
      %v574 = vunpack.c.l.bf16 %v284
      %v575 = vunpack.c.l.bf16 %v285
      %v576 = vunpack.c.l.bf16 %v286
      %v577 = vunpack.c.l.bf16 %v287
      %v578 = vunpack.c.l.bf16 %v288
      %v579 = vunpack.c.l.bf16 %v289
      %v580 = vunpack.c.l.bf16 %v290
      %v581 = vunpack.c.l.bf16 %v291
      %583 = vset.pattern.permute.xlu0 50
      %584 = vperm.xlu0 %583, %v566
      %v585 = vpop.permute.xlu0 %584
      %588 = vset.pattern.permute.xlu0 50
      %589 = vperm.xlu0 %588, %v567
      %v590 = vpop.permute.xlu0 %589
      %593 = vset.pattern.permute.xlu0 50
      %594 = vperm.xlu0 %593, %v568
      %v595 = vpop.permute.xlu0 %594
      %598 = vset.pattern.permute.xlu0 50
      %599 = vperm.xlu0 %598, %v569
      %v600 = vpop.permute.xlu0 %599
      %603 = vset.pattern.permute.xlu0 50
      %604 = vperm.xlu0 %603, %v570
      %v605 = vpop.permute.xlu0 %604
      %608 = vset.pattern.permute.xlu0 50
      %609 = vperm.xlu0 %608, %v571
      %v610 = vpop.permute.xlu0 %609
      %613 = vset.pattern.permute.xlu0 50
      %614 = vperm.xlu0 %613, %v572
      %v615 = vpop.permute.xlu0 %614
      %618 = vset.pattern.permute.xlu0 50
      %619 = vperm.xlu0 %618, %v573
      %v620 = vpop.permute.xlu0 %619
      %623 = vset.pattern.permute.xlu0 50
      %624 = vperm.xlu0 %623, %v574
      %v625 = vpop.permute.xlu0 %624
      %628 = vset.pattern.permute.xlu0 50
      %629 = vperm.xlu0 %628, %v575
      %v630 = vpop.permute.xlu0 %629
      %633 = vset.pattern.permute.xlu0 50
      %634 = vperm.xlu0 %633, %v576
      %v635 = vpop.permute.xlu0 %634
      %638 = vset.pattern.permute.xlu0 50
      %639 = vperm.xlu0 %638, %v577
      %v640 = vpop.permute.xlu0 %639
      %643 = vset.pattern.permute.xlu0 50
      %644 = vperm.xlu0 %643, %v578
      %v645 = vpop.permute.xlu0 %644
      %648 = vset.pattern.permute.xlu0 50
      %649 = vperm.xlu0 %648, %v579
      %v650 = vpop.permute.xlu0 %649
      %653 = vset.pattern.permute.xlu0 50
      %654 = vperm.xlu0 %653, %v580
      %v655 = vpop.permute.xlu0 %654
      %658 = vset.pattern.permute.xlu0 50
      %659 = vperm.xlu0 %658, %v581
      %v660 = vpop.permute.xlu0 %659
      %v663 = vlaneseq
      %v664 = vshrl.u32 %v663, 7
      %v665 = vsub.s32 0, %v664
      %v666 = vrot.slane %v565, %v665
      %v667 = vlaneseq
      %v668 = vshrl.u32 %v667, 7
      %v669 = vsub.s32 1, %v668
      %v670 = vrot.slane %v565, %v669
      %v673 = vadd.f32 %v585, %v666
      %v674 = vadd.f32 %v585, %v670
      %v675 = vadd.f32 %v590, %v666
      %v676 = vadd.f32 %v590, %v670
      %v677 = vadd.f32 %v595, %v666
      %v678 = vadd.f32 %v595, %v670
      %v679 = vadd.f32 %v600, %v666
      %v680 = vadd.f32 %v600, %v670
      %v681 = vadd.f32 %v605, %v666
      %v682 = vadd.f32 %v605, %v670
      %v683 = vadd.f32 %v610, %v666
      %v684 = vadd.f32 %v610, %v670
      %v685 = vadd.f32 %v615, %v666
      %v686 = vadd.f32 %v615, %v670
      %v687 = vadd.f32 %v620, %v666
      %v688 = vadd.f32 %v620, %v670
      %v689 = vadd.f32 %v625, %v666
      %v690 = vadd.f32 %v625, %v670
      %v691 = vadd.f32 %v630, %v666
      %v692 = vadd.f32 %v630, %v670
      %v693 = vadd.f32 %v635, %v666
      %v694 = vadd.f32 %v635, %v670
      %v695 = vadd.f32 %v640, %v666
      %v696 = vadd.f32 %v640, %v670
      %v697 = vadd.f32 %v645, %v666
      %v698 = vadd.f32 %v645, %v670
      %v699 = vadd.f32 %v650, %v666
      %v700 = vadd.f32 %v650, %v670
      %v701 = vadd.f32 %v655, %v666
      %v702 = vadd.f32 %v655, %v670
      %v703 = vadd.f32 %v660, %v666
      %v704 = vadd.f32 %v660, %v670
      %vm705 = vcmp.gt.f32.partialorder %v673, 0.0
      %vm706 = vcmp.gt.f32.partialorder %v674, 0.0
      %vm707 = vcmp.gt.f32.partialorder %v675, 0.0
      %vm708 = vcmp.gt.f32.partialorder %v676, 0.0
      %vm709 = vcmp.gt.f32.partialorder %v677, 0.0
      %vm710 = vcmp.gt.f32.partialorder %v678, 0.0
      %vm711 = vcmp.gt.f32.partialorder %v679, 0.0
      %vm712 = vcmp.gt.f32.partialorder %v680, 0.0
      %vm713 = vcmp.gt.f32.partialorder %v681, 0.0
      %vm714 = vcmp.gt.f32.partialorder %v682, 0.0
      %vm715 = vcmp.gt.f32.partialorder %v683, 0.0
      %vm716 = vcmp.gt.f32.partialorder %v684, 0.0
      %vm717 = vcmp.gt.f32.partialorder %v685, 0.0
      %vm718 = vcmp.gt.f32.partialorder %v686, 0.0
      %vm719 = vcmp.gt.f32.partialorder %v687, 0.0
      %vm720 = vcmp.gt.f32.partialorder %v688, 0.0
      %vm721 = vcmp.gt.f32.partialorder %v689, 0.0
      %vm722 = vcmp.gt.f32.partialorder %v690, 0.0
      %vm723 = vcmp.gt.f32.partialorder %v691, 0.0
      %vm724 = vcmp.gt.f32.partialorder %v692, 0.0
      %vm725 = vcmp.gt.f32.partialorder %v693, 0.0
      %vm726 = vcmp.gt.f32.partialorder %v694, 0.0
      %vm727 = vcmp.gt.f32.partialorder %v695, 0.0
      %vm728 = vcmp.gt.f32.partialorder %v696, 0.0
      %vm729 = vcmp.gt.f32.partialorder %v697, 0.0
      %vm730 = vcmp.gt.f32.partialorder %v698, 0.0
      %vm731 = vcmp.gt.f32.partialorder %v699, 0.0
      %vm732 = vcmp.gt.f32.partialorder %v700, 0.0
      %vm733 = vcmp.gt.f32.partialorder %v701, 0.0
      %vm734 = vcmp.gt.f32.partialorder %v702, 0.0
      %vm735 = vcmp.gt.f32.partialorder %v703, 0.0
      %vm736 = vcmp.gt.f32.partialorder %v704, 0.0
      %v737 = vmul.f32 %v673, 0.2
      %v738 = vmul.f32 %v674, 0.2
      %v739 = vmul.f32 %v675, 0.2
      %v740 = vmul.f32 %v676, 0.2
      %v741 = vmul.f32 %v677, 0.2
      %v742 = vmul.f32 %v678, 0.2
      %v743 = vmul.f32 %v679, 0.2
      %v744 = vmul.f32 %v680, 0.2
      %v745 = vmul.f32 %v681, 0.2
      %v746 = vmul.f32 %v682, 0.2
      %v747 = vmul.f32 %v683, 0.2
      %v748 = vmul.f32 %v684, 0.2
      %v749 = vmul.f32 %v685, 0.2
      %v750 = vmul.f32 %v686, 0.2
      %v751 = vmul.f32 %v687, 0.2
      %v752 = vmul.f32 %v688, 0.2
      %v753 = vmul.f32 %v689, 0.2
      %v754 = vmul.f32 %v690, 0.2
      %v755 = vmul.f32 %v691, 0.2
      %v756 = vmul.f32 %v692, 0.2
      %v757 = vmul.f32 %v693, 0.2
      %v758 = vmul.f32 %v694, 0.2
      %v759 = vmul.f32 %v695, 0.2
      %v760 = vmul.f32 %v696, 0.2
      %v761 = vmul.f32 %v697, 0.2
      %v762 = vmul.f32 %v698, 0.2
      %v763 = vmul.f32 %v699, 0.2
      %v764 = vmul.f32 %v700, 0.2
      %v765 = vmul.f32 %v701, 0.2
      %v766 = vmul.f32 %v702, 0.2
      %v767 = vmul.f32 %v703, 0.2
      %v768 = vmul.f32 %v704, 0.2
      %v769 = vsel %vm705, %v673, %v737
      %v770 = vsel %vm706, %v674, %v738
      %v771 = vsel %vm707, %v675, %v739
      %v772 = vsel %vm708, %v676, %v740
      %v773 = vsel %vm709, %v677, %v741
      %v774 = vsel %vm710, %v678, %v742
      %v775 = vsel %vm711, %v679, %v743
      %v776 = vsel %vm712, %v680, %v744
      %v777 = vsel %vm713, %v681, %v745
      %v778 = vsel %vm714, %v682, %v746
      %v779 = vsel %vm715, %v683, %v747
      %v780 = vsel %vm716, %v684, %v748
      %v781 = vsel %vm717, %v685, %v749
      %v782 = vsel %vm718, %v686, %v750
      %v783 = vsel %vm719, %v687, %v751
      %v784 = vsel %vm720, %v688, %v752
      %v785 = vsel %vm721, %v689, %v753
      %v786 = vsel %vm722, %v690, %v754
      %v787 = vsel %vm723, %v691, %v755
      %v788 = vsel %vm724, %v692, %v756
      %v789 = vsel %vm725, %v693, %v757
      %v790 = vsel %vm726, %v694, %v758
      %v791 = vsel %vm727, %v695, %v759
      %v792 = vsel %vm728, %v696, %v760
      %v793 = vsel %vm729, %v697, %v761
      %v794 = vsel %vm730, %v698, %v762
      %v795 = vsel %vm731, %v699, %v763
      %v796 = vsel %vm732, %v700, %v764
      %v797 = vsel %vm733, %v701, %v765
      %v798 = vsel %vm734, %v702, %v766
      %v799 = vsel %vm735, %v703, %v767
      %v800 = vsel %vm736, %v704, %v768
      %v801 = vsel %vm223, 65537, 0
      %v802 = vsel %vm224, 65537, 0
      %v803 = vsel %vm225, 65537, 0
      %v804 = vsel %vm226, 65537, 0
      %v805 = vsel %vm227, 65537, 0
      %v806 = vsel %vm228, 65537, 0
      %v807 = vsel %vm229, 65537, 0
      %v808 = vsel %vm230, 65537, 0
      %v809 = vsel %vm231, 65537, 0
      %v810 = vsel %vm232, 65537, 0
      %v811 = vsel %vm233, 65537, 0
      %v812 = vsel %vm234, 65537, 0
      %v813 = vsel %vm235, 65537, 0
      %v814 = vsel %vm236, 65537, 0
      %v815 = vsel %vm237, 65537, 0
      %v816 = vsel %vm238, 65537, 0
      %v817 = vunpack.c.l.b16 %v801
      %v818 = vunpack.c.h.b16 %v801
      %v819 = vunpack.c.l.b16 %v802
      %v820 = vunpack.c.h.b16 %v802
      %v821 = vunpack.c.l.b16 %v803
      %v822 = vunpack.c.h.b16 %v803
      %v823 = vunpack.c.l.b16 %v804
      %v824 = vunpack.c.h.b16 %v804
      %v825 = vunpack.c.l.b16 %v805
      %v826 = vunpack.c.h.b16 %v805
      %v827 = vunpack.c.l.b16 %v806
      %v828 = vunpack.c.h.b16 %v806
      %v829 = vunpack.c.l.b16 %v807
      %v830 = vunpack.c.h.b16 %v807
      %v831 = vunpack.c.l.b16 %v808
      %v832 = vunpack.c.h.b16 %v808
      %v833 = vunpack.c.l.b16 %v809
      %v834 = vunpack.c.h.b16 %v809
      %v835 = vunpack.c.l.b16 %v810
      %v836 = vunpack.c.h.b16 %v810
      %v837 = vunpack.c.l.b16 %v811
      %v838 = vunpack.c.h.b16 %v811
      %v839 = vunpack.c.l.b16 %v812
      %v840 = vunpack.c.h.b16 %v812
      %v841 = vunpack.c.l.b16 %v813
      %v842 = vunpack.c.h.b16 %v813
      %v843 = vunpack.c.l.b16 %v814
      %v844 = vunpack.c.h.b16 %v814
      %v845 = vunpack.c.l.b16 %v815
      %v846 = vunpack.c.h.b16 %v815
      %v847 = vunpack.c.l.b16 %v816
      %v848 = vunpack.c.h.b16 %v816
      %vm849 = vcmp.ne.s32.totalorder %v817, 0
      %vm850 = vcmp.ne.s32.totalorder %v818, 0
      %vm851 = vcmp.ne.s32.totalorder %v819, 0
      %vm852 = vcmp.ne.s32.totalorder %v820, 0
      %vm853 = vcmp.ne.s32.totalorder %v821, 0
      %vm854 = vcmp.ne.s32.totalorder %v822, 0
      %vm855 = vcmp.ne.s32.totalorder %v823, 0
      %vm856 = vcmp.ne.s32.totalorder %v824, 0
      %vm857 = vcmp.ne.s32.totalorder %v825, 0
      %vm858 = vcmp.ne.s32.totalorder %v826, 0
      %vm859 = vcmp.ne.s32.totalorder %v827, 0
      %vm860 = vcmp.ne.s32.totalorder %v828, 0
      %vm861 = vcmp.ne.s32.totalorder %v829, 0
      %vm862 = vcmp.ne.s32.totalorder %v830, 0
      %vm863 = vcmp.ne.s32.totalorder %v831, 0
      %vm864 = vcmp.ne.s32.totalorder %v832, 0
      %vm865 = vcmp.ne.s32.totalorder %v833, 0
      %vm866 = vcmp.ne.s32.totalorder %v834, 0
      %vm867 = vcmp.ne.s32.totalorder %v835, 0
      %vm868 = vcmp.ne.s32.totalorder %v836, 0
      %vm869 = vcmp.ne.s32.totalorder %v837, 0
      %vm870 = vcmp.ne.s32.totalorder %v838, 0
      %vm871 = vcmp.ne.s32.totalorder %v839, 0
      %vm872 = vcmp.ne.s32.totalorder %v840, 0
      %vm873 = vcmp.ne.s32.totalorder %v841, 0
      %vm874 = vcmp.ne.s32.totalorder %v842, 0
      %vm875 = vcmp.ne.s32.totalorder %v843, 0
      %vm876 = vcmp.ne.s32.totalorder %v844, 0
      %vm877 = vcmp.ne.s32.totalorder %v845, 0
      %vm878 = vcmp.ne.s32.totalorder %v846, 0
      %vm879 = vcmp.ne.s32.totalorder %v847, 0
      %vm880 = vcmp.ne.s32.totalorder %v848, 0
      %v881 = vsel %vm849, %v769, -1e+30
      %v882 = vsel %vm850, %v770, -1e+30
      %v883 = vsel %vm851, %v771, -1e+30
      %v884 = vsel %vm852, %v772, -1e+30
      %v885 = vsel %vm853, %v773, -1e+30
      %v886 = vsel %vm854, %v774, -1e+30
      %v887 = vsel %vm855, %v775, -1e+30
      %v888 = vsel %vm856, %v776, -1e+30
      %v889 = vsel %vm857, %v777, -1e+30
      %v890 = vsel %vm858, %v778, -1e+30
      %v891 = vsel %vm859, %v779, -1e+30
      %v892 = vsel %vm860, %v780, -1e+30
      %v893 = vsel %vm861, %v781, -1e+30
      %v894 = vsel %vm862, %v782, -1e+30
      %v895 = vsel %vm863, %v783, -1e+30
      %v896 = vsel %vm864, %v784, -1e+30
      %v897 = vsel %vm865, %v785, -1e+30
      %v898 = vsel %vm866, %v786, -1e+30
      %v899 = vsel %vm867, %v787, -1e+30
      %v900 = vsel %vm868, %v788, -1e+30
      %v901 = vsel %vm869, %v789, -1e+30
      %v902 = vsel %vm870, %v790, -1e+30
      %v903 = vsel %vm871, %v791, -1e+30
      %v904 = vsel %vm872, %v792, -1e+30
      %v905 = vsel %vm873, %v793, -1e+30
      %v906 = vsel %vm874, %v794, -1e+30
      %v907 = vsel %vm875, %v795, -1e+30
      %v908 = vsel %vm876, %v796, -1e+30
      %v909 = vsel %vm877, %v797, -1e+30
      %v910 = vsel %vm878, %v798, -1e+30
      %v911 = vsel %vm879, %v799, -1e+30
      %v912 = vsel %vm880, %v800, -1e+30
      %v913 = vmax.f32 %v881, %v882
      %914 = vmax.xlane.f32.xlu0 %v913
      %v915 = vpop.xlane.xlu0 %914
      %v916 = vmax.f32 %v883, %v884
      %917 = vmax.xlane.f32.xlu0 %v916
      %v918 = vpop.xlane.xlu0 %917
      %v919 = vmax.f32 %v885, %v886
      %920 = vmax.xlane.f32.xlu0 %v919
      %v921 = vpop.xlane.xlu0 %920
      %v922 = vmax.f32 %v887, %v888
      %923 = vmax.xlane.f32.xlu0 %v922
      %v924 = vpop.xlane.xlu0 %923
      %v925 = vmax.f32 %v889, %v890
      %926 = vmax.xlane.f32.xlu0 %v925
      %v927 = vpop.xlane.xlu0 %926
      %v928 = vmax.f32 %v891, %v892
      %929 = vmax.xlane.f32.xlu0 %v928
      %v930 = vpop.xlane.xlu0 %929
      %v931 = vmax.f32 %v893, %v894
      %932 = vmax.xlane.f32.xlu0 %v931
      %v933 = vpop.xlane.xlu0 %932
      %v934 = vmax.f32 %v895, %v896
      %935 = vmax.xlane.f32.xlu0 %v934
      %v936 = vpop.xlane.xlu0 %935
      %v937 = vmax.f32 %v897, %v898
      %938 = vmax.xlane.f32.xlu0 %v937
      %v939 = vpop.xlane.xlu0 %938
      %v940 = vmax.f32 %v899, %v900
      %941 = vmax.xlane.f32.xlu0 %v940
      %v942 = vpop.xlane.xlu0 %941
      %v943 = vmax.f32 %v901, %v902
      %944 = vmax.xlane.f32.xlu0 %v943
      %v945 = vpop.xlane.xlu0 %944
      %v946 = vmax.f32 %v903, %v904
      %947 = vmax.xlane.f32.xlu0 %v946
      %v948 = vpop.xlane.xlu0 %947
      %v949 = vmax.f32 %v905, %v906
      %950 = vmax.xlane.f32.xlu0 %v949
      %v951 = vpop.xlane.xlu0 %950
      %v952 = vmax.f32 %v907, %v908
      %953 = vmax.xlane.f32.xlu0 %v952
      %v954 = vpop.xlane.xlu0 %953
      %v955 = vmax.f32 %v909, %v910
      %956 = vmax.xlane.f32.xlu0 %v955
      %v957 = vpop.xlane.xlu0 %956
      %v958 = vmax.f32 %v911, %v912
      %959 = vmax.xlane.f32.xlu0 %v958
      %v960 = vpop.xlane.xlu0 %959
      %v961 = vsub.f32 %v881, %v915
      %v962 = vsub.f32 %v882, %v915
      %v963 = vsub.f32 %v883, %v918
      %v964 = vsub.f32 %v884, %v918
      %v965 = vsub.f32 %v885, %v921
      %v966 = vsub.f32 %v886, %v921
      %v967 = vsub.f32 %v887, %v924
      %v968 = vsub.f32 %v888, %v924
      %v969 = vsub.f32 %v889, %v927
      %v970 = vsub.f32 %v890, %v927
      %v971 = vsub.f32 %v891, %v930
      %v972 = vsub.f32 %v892, %v930
      %v973 = vsub.f32 %v893, %v933
      %v974 = vsub.f32 %v894, %v933
      %v975 = vsub.f32 %v895, %v936
      %v976 = vsub.f32 %v896, %v936
      %v977 = vsub.f32 %v897, %v939
      %v978 = vsub.f32 %v898, %v939
      %v979 = vsub.f32 %v899, %v942
      %v980 = vsub.f32 %v900, %v942
      %v981 = vsub.f32 %v901, %v945
      %v982 = vsub.f32 %v902, %v945
      %v983 = vsub.f32 %v903, %v948
      %v984 = vsub.f32 %v904, %v948
      %v985 = vsub.f32 %v905, %v951
      %v986 = vsub.f32 %v906, %v951
      %v987 = vsub.f32 %v907, %v954
      %v988 = vsub.f32 %v908, %v954
      %v989 = vsub.f32 %v909, %v957
      %v990 = vsub.f32 %v910, %v957
      %v991 = vsub.f32 %v911, %v960
      %v992 = vsub.f32 %v912, %v960
      %v993 = vmul.f32 %v961, 1.442695
      %v994 = vpow.pop %v993
      %v995 = vmul.f32 %v962, 1.442695
      %v996 = vpow.pop %v995
      %v997 = vmul.f32 %v963, 1.442695
      %v998 = vpow.pop %v997
      %v999 = vmul.f32 %v964, 1.442695
      %v1000 = vpow.pop %v999
      %v1001 = vmul.f32 %v965, 1.442695
      %v1002 = vpow.pop %v1001
      %v1003 = vmul.f32 %v966, 1.442695
      %v1004 = vpow.pop %v1003
      %v1005 = vmul.f32 %v967, 1.442695
      %v1006 = vpow.pop %v1005
      %v1007 = vmul.f32 %v968, 1.442695
      %v1008 = vpow.pop %v1007
      %v1009 = vmul.f32 %v969, 1.442695
      %v1010 = vpow.pop %v1009
      %v1011 = vmul.f32 %v970, 1.442695
      %v1012 = vpow.pop %v1011
      %v1013 = vmul.f32 %v971, 1.442695
      %v1014 = vpow.pop %v1013
      %v1015 = vmul.f32 %v972, 1.442695
      %v1016 = vpow.pop %v1015
      %v1017 = vmul.f32 %v973, 1.442695
      %v1018 = vpow.pop %v1017
      %v1019 = vmul.f32 %v974, 1.442695
      %v1020 = vpow.pop %v1019
      %v1021 = vmul.f32 %v975, 1.442695
      %v1022 = vpow.pop %v1021
      %v1023 = vmul.f32 %v976, 1.442695
      %v1024 = vpow.pop %v1023
      %v1025 = vmul.f32 %v977, 1.442695
      %v1026 = vpow.pop %v1025
      %v1027 = vmul.f32 %v978, 1.442695
      %v1028 = vpow.pop %v1027
      %v1029 = vmul.f32 %v979, 1.442695
      %v1030 = vpow.pop %v1029
      %v1031 = vmul.f32 %v980, 1.442695
      %v1032 = vpow.pop %v1031
      %v1033 = vmul.f32 %v981, 1.442695
      %v1034 = vpow.pop %v1033
      %v1035 = vmul.f32 %v982, 1.442695
      %v1036 = vpow.pop %v1035
      %v1037 = vmul.f32 %v983, 1.442695
      %v1038 = vpow.pop %v1037
      %v1039 = vmul.f32 %v984, 1.442695
      %v1040 = vpow.pop %v1039
      %v1041 = vmul.f32 %v985, 1.442695
      %v1042 = vpow.pop %v1041
      %v1043 = vmul.f32 %v986, 1.442695
      %v1044 = vpow.pop %v1043
      %v1045 = vmul.f32 %v987, 1.442695
      %v1046 = vpow.pop %v1045
      %v1047 = vmul.f32 %v988, 1.442695
      %v1048 = vpow.pop %v1047
      %v1049 = vmul.f32 %v989, 1.442695
      %v1050 = vpow.pop %v1049
      %v1051 = vmul.f32 %v990, 1.442695
      %v1052 = vpow.pop %v1051
      %v1053 = vmul.f32 %v991, 1.442695
      %v1054 = vpow.pop %v1053
      %v1055 = vmul.f32 %v992, 1.442695
      %v1056 = vpow.pop %v1055
      %v1057 = vadd.f32 %v994, %v996
      %1058 = vadd.xlane.f32.xlu0 %v1057
      %v1059 = vpop.xlane.xlu0 %1058
      %v1060 = vadd.f32 %v998, %v1000
      %1061 = vadd.xlane.f32.xlu0 %v1060
      %v1062 = vpop.xlane.xlu0 %1061
      %v1063 = vadd.f32 %v1002, %v1004
      %1064 = vadd.xlane.f32.xlu0 %v1063
      %v1065 = vpop.xlane.xlu0 %1064
      %v1066 = vadd.f32 %v1006, %v1008
      %1067 = vadd.xlane.f32.xlu0 %v1066
      %v1068 = vpop.xlane.xlu0 %1067
      %v1069 = vadd.f32 %v1010, %v1012
      %1070 = vadd.xlane.f32.xlu0 %v1069
      %v1071 = vpop.xlane.xlu0 %1070
      %v1072 = vadd.f32 %v1014, %v1016
      %1073 = vadd.xlane.f32.xlu0 %v1072
      %v1074 = vpop.xlane.xlu0 %1073
      %v1075 = vadd.f32 %v1018, %v1020
      %1076 = vadd.xlane.f32.xlu0 %v1075
      %v1077 = vpop.xlane.xlu0 %1076
      %v1078 = vadd.f32 %v1022, %v1024
      %1079 = vadd.xlane.f32.xlu0 %v1078
      %v1080 = vpop.xlane.xlu0 %1079
      %v1081 = vadd.f32 %v1026, %v1028
      %1082 = vadd.xlane.f32.xlu0 %v1081
      %v1083 = vpop.xlane.xlu0 %1082
      %v1084 = vadd.f32 %v1030, %v1032
      %1085 = vadd.xlane.f32.xlu0 %v1084
      %v1086 = vpop.xlane.xlu0 %1085
      %v1087 = vadd.f32 %v1034, %v1036
      %1088 = vadd.xlane.f32.xlu0 %v1087
      %v1089 = vpop.xlane.xlu0 %1088
      %v1090 = vadd.f32 %v1038, %v1040
      %1091 = vadd.xlane.f32.xlu0 %v1090
      %v1092 = vpop.xlane.xlu0 %1091
      %v1093 = vadd.f32 %v1042, %v1044
      %1094 = vadd.xlane.f32.xlu0 %v1093
      %v1095 = vpop.xlane.xlu0 %1094
      %v1096 = vadd.f32 %v1046, %v1048
      %1097 = vadd.xlane.f32.xlu0 %v1096
      %v1098 = vpop.xlane.xlu0 %1097
      %v1099 = vadd.f32 %v1050, %v1052
      %1100 = vadd.xlane.f32.xlu0 %v1099
      %v1101 = vpop.xlane.xlu0 %1100
      %v1102 = vadd.f32 %v1054, %v1056
      %1103 = vadd.xlane.f32.xlu0 %v1102
      %v1104 = vpop.xlane.xlu0 %1103
      %v1105 = vmax.f32 %v1059, 1e-20
      %v1106 = vmax.f32 %v1062, 1e-20
      %v1107 = vmax.f32 %v1065, 1e-20
      %v1108 = vmax.f32 %v1068, 1e-20
      %v1109 = vmax.f32 %v1071, 1e-20
      %v1110 = vmax.f32 %v1074, 1e-20
      %v1111 = vmax.f32 %v1077, 1e-20
      %v1112 = vmax.f32 %v1080, 1e-20
      %v1113 = vmax.f32 %v1083, 1e-20
      %v1114 = vmax.f32 %v1086, 1e-20
      %v1115 = vmax.f32 %v1089, 1e-20
      %v1116 = vmax.f32 %v1092, 1e-20
      %v1117 = vmax.f32 %v1095, 1e-20
      %v1118 = vmax.f32 %v1098, 1e-20
      %v1119 = vmax.f32 %v1101, 1e-20
      %v1120 = vmax.f32 %v1104, 1e-20
      %v1121 = vrcp.pop %v1105
      %v1122 = vrcp.pop %v1106
      %v1123 = vrcp.pop %v1107
      %v1124 = vrcp.pop %v1108
      %v1125 = vrcp.pop %v1109
      %v1126 = vrcp.pop %v1110
      %v1127 = vrcp.pop %v1111
      %v1128 = vrcp.pop %v1112
      %v1129 = vrcp.pop %v1113
      %v1130 = vrcp.pop %v1114
      %v1131 = vrcp.pop %v1115
      %v1132 = vrcp.pop %v1116
      %v1133 = vrcp.pop %v1117
      %v1134 = vrcp.pop %v1118
      %v1135 = vrcp.pop %v1119
      %v1136 = vrcp.pop %v1120
      %v1137 = vmul.f32 %v994, %v1121
      %v1138 = vmul.f32 %v996, %v1121
      %v1139 = vmul.f32 %v998, %v1122
      %v1140 = vmul.f32 %v1000, %v1122
      %v1141 = vmul.f32 %v1002, %v1123
      %v1142 = vmul.f32 %v1004, %v1123
      %v1143 = vmul.f32 %v1006, %v1124
      %v1144 = vmul.f32 %v1008, %v1124
      %v1145 = vmul.f32 %v1010, %v1125
      %v1146 = vmul.f32 %v1012, %v1125
      %v1147 = vmul.f32 %v1014, %v1126
      %v1148 = vmul.f32 %v1016, %v1126
      %v1149 = vmul.f32 %v1018, %v1127
      %v1150 = vmul.f32 %v1020, %v1127
      %v1151 = vmul.f32 %v1022, %v1128
      %v1152 = vmul.f32 %v1024, %v1128
      %v1153 = vmul.f32 %v1026, %v1129
      %v1154 = vmul.f32 %v1028, %v1129
      %v1155 = vmul.f32 %v1030, %v1130
      %v1156 = vmul.f32 %v1032, %v1130
      %v1157 = vmul.f32 %v1034, %v1131
      %v1158 = vmul.f32 %v1036, %v1131
      %v1159 = vmul.f32 %v1038, %v1132
      %v1160 = vmul.f32 %v1040, %v1132
      %v1161 = vmul.f32 %v1042, %v1133
      %v1162 = vmul.f32 %v1044, %v1133
      %v1163 = vmul.f32 %v1046, %v1134
      %v1164 = vmul.f32 %v1048, %v1134
      %v1165 = vmul.f32 %v1050, %v1135
      %v1166 = vmul.f32 %v1052, %v1135
      %v1167 = vmul.f32 %v1054, %v1136
      %v1168 = vmul.f32 %v1056, %v1136
      %v1169 = vpack.c.bf16 %v1139, %v1137
      %v1170 = vpack.c.bf16 %v1140, %v1138
      %v1171 = vpack.c.bf16 %v1143, %v1141
      %v1172 = vpack.c.bf16 %v1144, %v1142
      %v1173 = vpack.c.bf16 %v1147, %v1145
      %v1174 = vpack.c.bf16 %v1148, %v1146
      %v1175 = vpack.c.bf16 %v1151, %v1149
      %v1176 = vpack.c.bf16 %v1152, %v1150
      %v1177 = vpack.c.bf16 %v1155, %v1153
      %v1178 = vpack.c.bf16 %v1156, %v1154
      %v1179 = vpack.c.bf16 %v1159, %v1157
      %v1180 = vpack.c.bf16 %v1160, %v1158
      %v1181 = vpack.c.bf16 %v1163, %v1161
      %v1182 = vpack.c.bf16 %v1164, %v1162
      %v1183 = vpack.c.bf16 %v1167, %v1165
      %v1184 = vpack.c.bf16 %v1168, %v1166
      %1185 = vrot.lane.b32.xlu0 %v436, 112
      %v1186 = vpop.permute.xlu0 %1185
      %1187 = vrot.lane.b32.xlu0 %v437, 112
      %v1188 = vpop.permute.xlu0 %1187
      %1189 = vrot.lane.b32.xlu0 %v438, 112
      %v1190 = vpop.permute.xlu0 %1189
      %1191 = vrot.lane.b32.xlu0 %v439, 112
      %v1192 = vpop.permute.xlu0 %1191
      %1193 = vrot.lane.b32.xlu0 %v440, 112
      %v1194 = vpop.permute.xlu0 %1193
      %1195 = vrot.lane.b32.xlu0 %v441, 112
      %v1196 = vpop.permute.xlu0 %1195
      %1197 = vrot.lane.b32.xlu0 %v442, 112
      %v1198 = vpop.permute.xlu0 %1197
      %1199 = vrot.lane.b32.xlu0 %v443, 112
      %v1200 = vpop.permute.xlu0 %1199
      %1201 = vrot.lane.b32.xlu0 %v444, 112
      %v1202 = vpop.permute.xlu0 %1201
      %1203 = vrot.lane.b32.xlu0 %v445, 112
      %v1204 = vpop.permute.xlu0 %1203
      %1205 = vrot.lane.b32.xlu0 %v446, 112
      %v1206 = vpop.permute.xlu0 %1205
      %1207 = vrot.lane.b32.xlu0 %v447, 112
      %v1208 = vpop.permute.xlu0 %1207
      %1209 = vrot.lane.b32.xlu0 %v448, 112
      %v1210 = vpop.permute.xlu0 %1209
      %1211 = vrot.lane.b32.xlu0 %v449, 112
      %v1212 = vpop.permute.xlu0 %1211
      %1213 = vrot.lane.b32.xlu0 %v450, 112
      %v1214 = vpop.permute.xlu0 %1213
      %1215 = vrot.lane.b32.xlu0 %v451, 112
      %v1216 = vpop.permute.xlu0 %1215
      %1233 = vmatprep.subr.bf16.mxu0 0
      %1234 = vmatpush1.bf16.msra.mxu0 %v1186
      %1235 = vmatprep.subr.bf16.mxu0 0
      %1236 = vmatpush1.bf16.msra.mxu0 %v1188
      %1237 = vmatprep.subr.bf16.mxu0 0
      %1238 = vmatpush1.bf16.msra.mxu0 %v1190
      %1239 = vmatprep.subr.bf16.mxu0 0
      %1240 = vmatpush1.bf16.msra.mxu0 %v1192
      %1241 = vmatprep.subr.bf16.mxu0 0
      %1242 = vmatpush1.bf16.msra.mxu0 %v1194
      %1243 = vmatprep.subr.bf16.mxu0 0
      %1244 = vmatpush1.bf16.msra.mxu0 %v1196
      %1245 = vmatprep.subr.bf16.mxu0 0
      %1246 = vmatpush1.bf16.msra.mxu0 %v1198
      %1247 = vmatprep.subr.bf16.mxu0 0
      %1248 = vmatpush1.bf16.msra.mxu0 %v1200
      %1249 = vmatprep.subr.bf16.mxu0 0
      %1250 = vmatpush1.bf16.msra.mxu0 %v1202
      %1251 = vmatprep.subr.bf16.mxu0 0
      %1252 = vmatpush1.bf16.msra.mxu0 %v1204
      %1253 = vmatprep.subr.bf16.mxu0 0
      %1254 = vmatpush1.bf16.msra.mxu0 %v1206
      %1255 = vmatprep.subr.bf16.mxu0 0
      %1256 = vmatpush1.bf16.msra.mxu0 %v1208
      %1257 = vmatprep.subr.bf16.mxu0 0
      %1258 = vmatpush1.bf16.msra.mxu0 %v1210
      %1259 = vmatprep.subr.bf16.mxu0 0
      %1260 = vmatpush1.bf16.msra.mxu0 %v1212
      %1261 = vmatprep.subr.bf16.mxu0 0
      %1262 = vmatpush1.bf16.msra.mxu0 %v1214
      %1263 = vmatprep.subr.bf16.mxu0 0
      %1264 = vmatpush1.bf16.msra.mxu0 %v1216
      %1265 = vmatprep.mubr.bf16.mxu0 %v1170
      %1266 = vmatmul.mubr.bf16.gmra.mrb[0].mxu0 %v1169
      %v1267 = vpop.f32.mrb[0].mxu0
      %v1268 = vadd.f32 0.0, %v1267
      %v1269 = vpop.f32.mrb[0].mxu0
      %v1270 = vpop.f32.mrb[0].mxu0
      %v1271 = vadd.f32 0.0, %v1270
      %v1272 = vpop.f32.mrb[0].mxu0
      %1273 = vmatprep.mubr.bf16.mxu0 %v1172
      %1274 = vmatmul.mubr.bf16.gmra.mrb[0].mxu0 %v1171
      %v1275 = vpop.f32.mrb[0].mxu0
      %v1276 = vadd.f32 0.0, %v1275
      %v1277 = vpop.f32.mrb[0].mxu0
      %v1278 = vpop.f32.mrb[0].mxu0
      %v1279 = vadd.f32 0.0, %v1278
      %v1280 = vpop.f32.mrb[0].mxu0
      %1281 = vmatprep.mubr.bf16.mxu0 %v1174
      %1282 = vmatmul.mubr.bf16.gmra.mrb[0].mxu0 %v1173
      %v1283 = vpop.f32.mrb[0].mxu0
      %v1284 = vadd.f32 0.0, %v1283
      %v1285 = vpop.f32.mrb[0].mxu0
      %v1286 = vpop.f32.mrb[0].mxu0
      %v1287 = vadd.f32 0.0, %v1286
      %v1288 = vpop.f32.mrb[0].mxu0
      %1289 = vmatprep.mubr.bf16.mxu0 %v1176
      %1290 = vmatmul.mubr.bf16.gmra.mrb[0].mxu0 %v1175
      %v1291 = vpop.f32.mrb[0].mxu0
      %v1292 = vadd.f32 0.0, %v1291
      %v1293 = vpop.f32.mrb[0].mxu0
      %v1294 = vpop.f32.mrb[0].mxu0
      %v1295 = vadd.f32 0.0, %v1294
      %v1296 = vpop.f32.mrb[0].mxu0
      %1297 = vmatprep.mubr.bf16.mxu0 %v1178
      %1298 = vmatmul.mubr.bf16.gmra.mrb[0].mxu0 %v1177
      %v1299 = vpop.f32.mrb[0].mxu0
      %v1300 = vadd.f32 0.0, %v1299
      %v1301 = vpop.f32.mrb[0].mxu0
      %v1302 = vpop.f32.mrb[0].mxu0
      %v1303 = vadd.f32 0.0, %v1302
      %v1304 = vpop.f32.mrb[0].mxu0
      %1305 = vmatprep.mubr.bf16.mxu0 %v1180
      %1306 = vmatmul.mubr.bf16.gmra.mrb[0].mxu0 %v1179
      %v1307 = vpop.f32.mrb[0].mxu0
      %v1308 = vadd.f32 0.0, %v1307
      %v1309 = vpop.f32.mrb[0].mxu0
      %v1310 = vpop.f32.mrb[0].mxu0
      %v1311 = vadd.f32 0.0, %v1310
      %v1312 = vpop.f32.mrb[0].mxu0
      %1313 = vmatprep.mubr.bf16.mxu0 %v1182
      %1314 = vmatmul.mubr.bf16.gmra.mrb[0].mxu0 %v1181
      %v1315 = vpop.f32.mrb[0].mxu0
      %v1316 = vadd.f32 0.0, %v1315
      %v1317 = vpop.f32.mrb[0].mxu0
      %v1318 = vpop.f32.mrb[0].mxu0
      %v1319 = vadd.f32 0.0, %v1318
      %v1320 = vpop.f32.mrb[0].mxu0
      %1321 = vmatprep.mubr.bf16.mxu0 %v1184
      %1322 = vmatmul.mubr.bf16.gmra.mrb[0].mxu0 %v1183
      %v1323 = vpop.f32.mrb[0].mxu0
      %v1324 = vadd.f32 0.0, %v1323
      %v1325 = vpop.f32.mrb[0].mxu0
      %v1326 = vpop.f32.mrb[0].mxu0
      %v1327 = vadd.f32 0.0, %v1326
      %v1328 = vpop.f32.mrb[0].mxu0
      %1329 = vdwg.mxu0
      %s1330 = scalar_lea.vmem %s2, 1
      %v1331 = vld [vmem:[%s1330] ss:$2 sm:$0x3]
      %1332 = vset.pattern.permute.xlu0 51
      %1333 = vperm.xlu0 %1332, %v566
      %v1334 = vpop.permute.xlu0 %1333
      %1336 = vset.pattern.permute.xlu0 51
      %1337 = vperm.xlu0 %1336, %v567
      %v1338 = vpop.permute.xlu0 %1337
      %1340 = vset.pattern.permute.xlu0 51
      %1341 = vperm.xlu0 %1340, %v568
      %v1342 = vpop.permute.xlu0 %1341
      %1344 = vset.pattern.permute.xlu0 51
      %1345 = vperm.xlu0 %1344, %v569
      %v1346 = vpop.permute.xlu0 %1345
      %1348 = vset.pattern.permute.xlu0 51
      %1349 = vperm.xlu0 %1348, %v570
      %v1350 = vpop.permute.xlu0 %1349
      %1352 = vset.pattern.permute.xlu0 51
      %1353 = vperm.xlu0 %1352, %v571
      %v1354 = vpop.permute.xlu0 %1353
      %1356 = vset.pattern.permute.xlu0 51
      %1357 = vperm.xlu0 %1356, %v572
      %v1358 = vpop.permute.xlu0 %1357
      %1360 = vset.pattern.permute.xlu0 51
      %1361 = vperm.xlu0 %1360, %v573
      %v1362 = vpop.permute.xlu0 %1361
      %1364 = vset.pattern.permute.xlu0 51
      %1365 = vperm.xlu0 %1364, %v574
      %v1366 = vpop.permute.xlu0 %1365
      %1368 = vset.pattern.permute.xlu0 51
      %1369 = vperm.xlu0 %1368, %v575
      %v1370 = vpop.permute.xlu0 %1369
      %1372 = vset.pattern.permute.xlu0 51
      %1373 = vperm.xlu0 %1372, %v576
      %v1374 = vpop.permute.xlu0 %1373
      %1376 = vset.pattern.permute.xlu0 51
      %1377 = vperm.xlu0 %1376, %v577
      %v1378 = vpop.permute.xlu0 %1377
      %1380 = vset.pattern.permute.xlu0 51
      %1381 = vperm.xlu0 %1380, %v578
      %v1382 = vpop.permute.xlu0 %1381
      %1384 = vset.pattern.permute.xlu0 51
      %1385 = vperm.xlu0 %1384, %v579
      %v1386 = vpop.permute.xlu0 %1385
      %1388 = vset.pattern.permute.xlu0 51
      %1389 = vperm.xlu0 %1388, %v580
      %v1390 = vpop.permute.xlu0 %1389
      %1392 = vset.pattern.permute.xlu0 51
      %1393 = vperm.xlu0 %1392, %v581
      %v1394 = vpop.permute.xlu0 %1393
      %v1397 = vlaneseq
      %v1398 = vshrl.u32 %v1397, 7
      %v1399 = vsub.s32 0, %v1398
      %v1400 = vrot.slane %v1331, %v1399
      %v1401 = vlaneseq
      %v1402 = vshrl.u32 %v1401, 7
      %v1403 = vsub.s32 1, %v1402
      %v1404 = vrot.slane %v1331, %v1403
      %v1407 = vadd.f32 %v1334, %v1400
      %v1408 = vadd.f32 %v1334, %v1404
      %v1409 = vadd.f32 %v1338, %v1400
      %v1410 = vadd.f32 %v1338, %v1404
      %v1411 = vadd.f32 %v1342, %v1400
      %v1412 = vadd.f32 %v1342, %v1404
      %v1413 = vadd.f32 %v1346, %v1400
      %v1414 = vadd.f32 %v1346, %v1404
      %v1415 = vadd.f32 %v1350, %v1400
      %v1416 = vadd.f32 %v1350, %v1404
      %v1417 = vadd.f32 %v1354, %v1400
      %v1418 = vadd.f32 %v1354, %v1404
      %v1419 = vadd.f32 %v1358, %v1400
      %v1420 = vadd.f32 %v1358, %v1404
      %v1421 = vadd.f32 %v1362, %v1400
      %v1422 = vadd.f32 %v1362, %v1404
      %v1423 = vadd.f32 %v1366, %v1400
      %v1424 = vadd.f32 %v1366, %v1404
      %v1425 = vadd.f32 %v1370, %v1400
      %v1426 = vadd.f32 %v1370, %v1404
      %v1427 = vadd.f32 %v1374, %v1400
      %v1428 = vadd.f32 %v1374, %v1404
      %v1429 = vadd.f32 %v1378, %v1400
      %v1430 = vadd.f32 %v1378, %v1404
      %v1431 = vadd.f32 %v1382, %v1400
      %v1432 = vadd.f32 %v1382, %v1404
      %v1433 = vadd.f32 %v1386, %v1400
      %v1434 = vadd.f32 %v1386, %v1404
      %v1435 = vadd.f32 %v1390, %v1400
      %v1436 = vadd.f32 %v1390, %v1404
      %v1437 = vadd.f32 %v1394, %v1400
      %v1438 = vadd.f32 %v1394, %v1404
      %vm1439 = vcmp.gt.f32.partialorder %v1407, 0.0
      %vm1440 = vcmp.gt.f32.partialorder %v1408, 0.0
      %vm1441 = vcmp.gt.f32.partialorder %v1409, 0.0
      %vm1442 = vcmp.gt.f32.partialorder %v1410, 0.0
      %vm1443 = vcmp.gt.f32.partialorder %v1411, 0.0
      %vm1444 = vcmp.gt.f32.partialorder %v1412, 0.0
      %vm1445 = vcmp.gt.f32.partialorder %v1413, 0.0
      %vm1446 = vcmp.gt.f32.partialorder %v1414, 0.0
      %vm1447 = vcmp.gt.f32.partialorder %v1415, 0.0
      %vm1448 = vcmp.gt.f32.partialorder %v1416, 0.0
      %vm1449 = vcmp.gt.f32.partialorder %v1417, 0.0
      %vm1450 = vcmp.gt.f32.partialorder %v1418, 0.0
      %vm1451 = vcmp.gt.f32.partialorder %v1419, 0.0
      %vm1452 = vcmp.gt.f32.partialorder %v1420, 0.0
      %vm1453 = vcmp.gt.f32.partialorder %v1421, 0.0
      %vm1454 = vcmp.gt.f32.partialorder %v1422, 0.0
      %vm1455 = vcmp.gt.f32.partialorder %v1423, 0.0
      %vm1456 = vcmp.gt.f32.partialorder %v1424, 0.0
      %vm1457 = vcmp.gt.f32.partialorder %v1425, 0.0
      %vm1458 = vcmp.gt.f32.partialorder %v1426, 0.0
      %vm1459 = vcmp.gt.f32.partialorder %v1427, 0.0
      %vm1460 = vcmp.gt.f32.partialorder %v1428, 0.0
      %vm1461 = vcmp.gt.f32.partialorder %v1429, 0.0
      %vm1462 = vcmp.gt.f32.partialorder %v1430, 0.0
      %vm1463 = vcmp.gt.f32.partialorder %v1431, 0.0
      %vm1464 = vcmp.gt.f32.partialorder %v1432, 0.0
      %vm1465 = vcmp.gt.f32.partialorder %v1433, 0.0
      %vm1466 = vcmp.gt.f32.partialorder %v1434, 0.0
      %vm1467 = vcmp.gt.f32.partialorder %v1435, 0.0
      %vm1468 = vcmp.gt.f32.partialorder %v1436, 0.0
      %vm1469 = vcmp.gt.f32.partialorder %v1437, 0.0
      %vm1470 = vcmp.gt.f32.partialorder %v1438, 0.0
      %v1471 = vmul.f32 %v1407, 0.2
      %v1472 = vmul.f32 %v1408, 0.2
      %v1473 = vmul.f32 %v1409, 0.2
      %v1474 = vmul.f32 %v1410, 0.2
      %v1475 = vmul.f32 %v1411, 0.2
      %v1476 = vmul.f32 %v1412, 0.2
      %v1477 = vmul.f32 %v1413, 0.2
      %v1478 = vmul.f32 %v1414, 0.2
      %v1479 = vmul.f32 %v1415, 0.2
      %v1480 = vmul.f32 %v1416, 0.2
      %v1481 = vmul.f32 %v1417, 0.2
      %v1482 = vmul.f32 %v1418, 0.2
      %v1483 = vmul.f32 %v1419, 0.2
      %v1484 = vmul.f32 %v1420, 0.2
      %v1485 = vmul.f32 %v1421, 0.2
      %v1486 = vmul.f32 %v1422, 0.2
      %v1487 = vmul.f32 %v1423, 0.2
      %v1488 = vmul.f32 %v1424, 0.2
      %v1489 = vmul.f32 %v1425, 0.2
      %v1490 = vmul.f32 %v1426, 0.2
      %v1491 = vmul.f32 %v1427, 0.2
      %v1492 = vmul.f32 %v1428, 0.2
      %v1493 = vmul.f32 %v1429, 0.2
      %v1494 = vmul.f32 %v1430, 0.2
      %v1495 = vmul.f32 %v1431, 0.2
      %v1496 = vmul.f32 %v1432, 0.2
      %v1497 = vmul.f32 %v1433, 0.2
      %v1498 = vmul.f32 %v1434, 0.2
      %v1499 = vmul.f32 %v1435, 0.2
      %v1500 = vmul.f32 %v1436, 0.2
      %v1501 = vmul.f32 %v1437, 0.2
      %v1502 = vmul.f32 %v1438, 0.2
      %v1503 = vsel %vm1439, %v1407, %v1471
      %v1504 = vsel %vm1440, %v1408, %v1472
      %v1505 = vsel %vm1441, %v1409, %v1473
      %v1506 = vsel %vm1442, %v1410, %v1474
      %v1507 = vsel %vm1443, %v1411, %v1475
      %v1508 = vsel %vm1444, %v1412, %v1476
      %v1509 = vsel %vm1445, %v1413, %v1477
      %v1510 = vsel %vm1446, %v1414, %v1478
      %v1511 = vsel %vm1447, %v1415, %v1479
      %v1512 = vsel %vm1448, %v1416, %v1480
      %v1513 = vsel %vm1449, %v1417, %v1481
      %v1514 = vsel %vm1450, %v1418, %v1482
      %v1515 = vsel %vm1451, %v1419, %v1483
      %v1516 = vsel %vm1452, %v1420, %v1484
      %v1517 = vsel %vm1453, %v1421, %v1485
      %v1518 = vsel %vm1454, %v1422, %v1486
      %v1519 = vsel %vm1455, %v1423, %v1487
      %v1520 = vsel %vm1456, %v1424, %v1488
      %v1521 = vsel %vm1457, %v1425, %v1489
      %v1522 = vsel %vm1458, %v1426, %v1490
      %v1523 = vsel %vm1459, %v1427, %v1491
      %v1524 = vsel %vm1460, %v1428, %v1492
      %v1525 = vsel %vm1461, %v1429, %v1493
      %v1526 = vsel %vm1462, %v1430, %v1494
      %v1527 = vsel %vm1463, %v1431, %v1495
      %v1528 = vsel %vm1464, %v1432, %v1496
      %v1529 = vsel %vm1465, %v1433, %v1497
      %v1530 = vsel %vm1466, %v1434, %v1498
      %v1531 = vsel %vm1467, %v1435, %v1499
      %v1532 = vsel %vm1468, %v1436, %v1500
      %v1533 = vsel %vm1469, %v1437, %v1501
      %v1534 = vsel %vm1470, %v1438, %v1502
      %v1535 = vsel %vm849, %v1503, -1e+30
      %v1536 = vsel %vm850, %v1504, -1e+30
      %v1537 = vsel %vm851, %v1505, -1e+30
      %v1538 = vsel %vm852, %v1506, -1e+30
      %v1539 = vsel %vm853, %v1507, -1e+30
      %v1540 = vsel %vm854, %v1508, -1e+30
      %v1541 = vsel %vm855, %v1509, -1e+30
      %v1542 = vsel %vm856, %v1510, -1e+30
      %v1543 = vsel %vm857, %v1511, -1e+30
      %v1544 = vsel %vm858, %v1512, -1e+30
      %v1545 = vsel %vm859, %v1513, -1e+30
      %v1546 = vsel %vm860, %v1514, -1e+30
      %v1547 = vsel %vm861, %v1515, -1e+30
      %v1548 = vsel %vm862, %v1516, -1e+30
      %v1549 = vsel %vm863, %v1517, -1e+30
      %v1550 = vsel %vm864, %v1518, -1e+30
      %v1551 = vsel %vm865, %v1519, -1e+30
      %v1552 = vsel %vm866, %v1520, -1e+30
      %v1553 = vsel %vm867, %v1521, -1e+30
      %v1554 = vsel %vm868, %v1522, -1e+30
      %v1555 = vsel %vm869, %v1523, -1e+30
      %v1556 = vsel %vm870, %v1524, -1e+30
      %v1557 = vsel %vm871, %v1525, -1e+30
      %v1558 = vsel %vm872, %v1526, -1e+30
      %v1559 = vsel %vm873, %v1527, -1e+30
      %v1560 = vsel %vm874, %v1528, -1e+30
      %v1561 = vsel %vm875, %v1529, -1e+30
      %v1562 = vsel %vm876, %v1530, -1e+30
      %v1563 = vsel %vm877, %v1531, -1e+30
      %v1564 = vsel %vm878, %v1532, -1e+30
      %v1565 = vsel %vm879, %v1533, -1e+30
      %v1566 = vsel %vm880, %v1534, -1e+30
      %v1567 = vmax.f32 %v1535, %v1536
      %1568 = vmax.xlane.f32.xlu0 %v1567
      %v1569 = vpop.xlane.xlu0 %1568
      %v1570 = vmax.f32 %v1537, %v1538
      %1571 = vmax.xlane.f32.xlu0 %v1570
      %v1572 = vpop.xlane.xlu0 %1571
      %v1573 = vmax.f32 %v1539, %v1540
      %1574 = vmax.xlane.f32.xlu0 %v1573
      %v1575 = vpop.xlane.xlu0 %1574
      %v1576 = vmax.f32 %v1541, %v1542
      %1577 = vmax.xlane.f32.xlu0 %v1576
      %v1578 = vpop.xlane.xlu0 %1577
      %v1579 = vmax.f32 %v1543, %v1544
      %1580 = vmax.xlane.f32.xlu0 %v1579
      %v1581 = vpop.xlane.xlu0 %1580
      %v1582 = vmax.f32 %v1545, %v1546
      %1583 = vmax.xlane.f32.xlu0 %v1582
      %v1584 = vpop.xlane.xlu0 %1583
      %v1585 = vmax.f32 %v1547, %v1548
      %1586 = vmax.xlane.f32.xlu0 %v1585
      %v1587 = vpop.xlane.xlu0 %1586
      %v1588 = vmax.f32 %v1549, %v1550
      %1589 = vmax.xlane.f32.xlu0 %v1588
      %v1590 = vpop.xlane.xlu0 %1589
      %v1591 = vmax.f32 %v1551, %v1552
      %1592 = vmax.xlane.f32.xlu0 %v1591
      %v1593 = vpop.xlane.xlu0 %1592
      %v1594 = vmax.f32 %v1553, %v1554
      %1595 = vmax.xlane.f32.xlu0 %v1594
      %v1596 = vpop.xlane.xlu0 %1595
      %v1597 = vmax.f32 %v1555, %v1556
      %1598 = vmax.xlane.f32.xlu0 %v1597
      %v1599 = vpop.xlane.xlu0 %1598
      %v1600 = vmax.f32 %v1557, %v1558
      %1601 = vmax.xlane.f32.xlu0 %v1600
      %v1602 = vpop.xlane.xlu0 %1601
      %v1603 = vmax.f32 %v1559, %v1560
      %1604 = vmax.xlane.f32.xlu0 %v1603
      %v1605 = vpop.xlane.xlu0 %1604
      %v1606 = vmax.f32 %v1561, %v1562
      %1607 = vmax.xlane.f32.xlu0 %v1606
      %v1608 = vpop.xlane.xlu0 %1607
      %v1609 = vmax.f32 %v1563, %v1564
      %1610 = vmax.xlane.f32.xlu0 %v1609
      %v1611 = vpop.xlane.xlu0 %1610
      %v1612 = vmax.f32 %v1565, %v1566
      %1613 = vmax.xlane.f32.xlu0 %v1612
      %v1614 = vpop.xlane.xlu0 %1613
      %v1615 = vsub.f32 %v1535, %v1569
      %v1616 = vsub.f32 %v1536, %v1569
      %v1617 = vsub.f32 %v1537, %v1572
      %v1618 = vsub.f32 %v1538, %v1572
      %v1619 = vsub.f32 %v1539, %v1575
      %v1620 = vsub.f32 %v1540, %v1575
      %v1621 = vsub.f32 %v1541, %v1578
      %v1622 = vsub.f32 %v1542, %v1578
      %v1623 = vsub.f32 %v1543, %v1581
      %v1624 = vsub.f32 %v1544, %v1581
      %v1625 = vsub.f32 %v1545, %v1584
      %v1626 = vsub.f32 %v1546, %v1584
      %v1627 = vsub.f32 %v1547, %v1587
      %v1628 = vsub.f32 %v1548, %v1587
      %v1629 = vsub.f32 %v1549, %v1590
      %v1630 = vsub.f32 %v1550, %v1590
      %v1631 = vsub.f32 %v1551, %v1593
      %v1632 = vsub.f32 %v1552, %v1593
      %v1633 = vsub.f32 %v1553, %v1596
      %v1634 = vsub.f32 %v1554, %v1596
      %v1635 = vsub.f32 %v1555, %v1599
      %v1636 = vsub.f32 %v1556, %v1599
      %v1637 = vsub.f32 %v1557, %v1602
      %v1638 = vsub.f32 %v1558, %v1602
      %v1639 = vsub.f32 %v1559, %v1605
      %v1640 = vsub.f32 %v1560, %v1605
      %v1641 = vsub.f32 %v1561, %v1608
      %v1642 = vsub.f32 %v1562, %v1608
      %v1643 = vsub.f32 %v1563, %v1611
      %v1644 = vsub.f32 %v1564, %v1611
      %v1645 = vsub.f32 %v1565, %v1614
      %v1646 = vsub.f32 %v1566, %v1614
      %v1647 = vmul.f32 %v1615, 1.442695
      %v1648 = vpow.pop %v1647
      %v1649 = vmul.f32 %v1616, 1.442695
      %v1650 = vpow.pop %v1649
      %v1651 = vmul.f32 %v1617, 1.442695
      %v1652 = vpow.pop %v1651
      %v1653 = vmul.f32 %v1618, 1.442695
      %v1654 = vpow.pop %v1653
      %v1655 = vmul.f32 %v1619, 1.442695
      %v1656 = vpow.pop %v1655
      %v1657 = vmul.f32 %v1620, 1.442695
      %v1658 = vpow.pop %v1657
      %v1659 = vmul.f32 %v1621, 1.442695
      %v1660 = vpow.pop %v1659
      %v1661 = vmul.f32 %v1622, 1.442695
      %v1662 = vpow.pop %v1661
      %v1663 = vmul.f32 %v1623, 1.442695
      %v1664 = vpow.pop %v1663
      %v1665 = vmul.f32 %v1624, 1.442695
      %v1666 = vpow.pop %v1665
      %v1667 = vmul.f32 %v1625, 1.442695
      %v1668 = vpow.pop %v1667
      %v1669 = vmul.f32 %v1626, 1.442695
      %v1670 = vpow.pop %v1669
      %v1671 = vmul.f32 %v1627, 1.442695
      %v1672 = vpow.pop %v1671
      %v1673 = vmul.f32 %v1628, 1.442695
      %v1674 = vpow.pop %v1673
      %v1675 = vmul.f32 %v1629, 1.442695
      %v1676 = vpow.pop %v1675
      %v1677 = vmul.f32 %v1630, 1.442695
      %v1678 = vpow.pop %v1677
      %v1679 = vmul.f32 %v1631, 1.442695
      %v1680 = vpow.pop %v1679
      %v1681 = vmul.f32 %v1632, 1.442695
      %v1682 = vpow.pop %v1681
      %v1683 = vmul.f32 %v1633, 1.442695
      %v1684 = vpow.pop %v1683
      %v1685 = vmul.f32 %v1634, 1.442695
      %v1686 = vpow.pop %v1685
      %v1687 = vmul.f32 %v1635, 1.442695
      %v1688 = vpow.pop %v1687
      %v1689 = vmul.f32 %v1636, 1.442695
      %v1690 = vpow.pop %v1689
      %v1691 = vmul.f32 %v1637, 1.442695
      %v1692 = vpow.pop %v1691
      %v1693 = vmul.f32 %v1638, 1.442695
      %v1694 = vpow.pop %v1693
      %v1695 = vmul.f32 %v1639, 1.442695
      %v1696 = vpow.pop %v1695
      %v1697 = vmul.f32 %v1640, 1.442695
      %v1698 = vpow.pop %v1697
      %v1699 = vmul.f32 %v1641, 1.442695
      %v1700 = vpow.pop %v1699
      %v1701 = vmul.f32 %v1642, 1.442695
      %v1702 = vpow.pop %v1701
      %v1703 = vmul.f32 %v1643, 1.442695
      %v1704 = vpow.pop %v1703
      %v1705 = vmul.f32 %v1644, 1.442695
      %v1706 = vpow.pop %v1705
      %v1707 = vmul.f32 %v1645, 1.442695
      %v1708 = vpow.pop %v1707
      %v1709 = vmul.f32 %v1646, 1.442695
      %v1710 = vpow.pop %v1709
      %v1711 = vadd.f32 %v1648, %v1650
      %1712 = vadd.xlane.f32.xlu0 %v1711
      %v1713 = vpop.xlane.xlu0 %1712
      %v1714 = vadd.f32 %v1652, %v1654
      %1715 = vadd.xlane.f32.xlu0 %v1714
      %v1716 = vpop.xlane.xlu0 %1715
      %v1717 = vadd.f32 %v1656, %v1658
      %1718 = vadd.xlane.f32.xlu0 %v1717
      %v1719 = vpop.xlane.xlu0 %1718
      %v1720 = vadd.f32 %v1660, %v1662
      %1721 = vadd.xlane.f32.xlu0 %v1720
      %v1722 = vpop.xlane.xlu0 %1721
      %v1723 = vadd.f32 %v1664, %v1666
      %1724 = vadd.xlane.f32.xlu0 %v1723
      %v1725 = vpop.xlane.xlu0 %1724
      %v1726 = vadd.f32 %v1668, %v1670
      %1727 = vadd.xlane.f32.xlu0 %v1726
      %v1728 = vpop.xlane.xlu0 %1727
      %v1729 = vadd.f32 %v1672, %v1674
      %1730 = vadd.xlane.f32.xlu0 %v1729
      %v1731 = vpop.xlane.xlu0 %1730
      %v1732 = vadd.f32 %v1676, %v1678
      %1733 = vadd.xlane.f32.xlu0 %v1732
      %v1734 = vpop.xlane.xlu0 %1733
      %v1735 = vadd.f32 %v1680, %v1682
      %1736 = vadd.xlane.f32.xlu0 %v1735
      %v1737 = vpop.xlane.xlu0 %1736
      %v1738 = vadd.f32 %v1684, %v1686
      %1739 = vadd.xlane.f32.xlu0 %v1738
      %v1740 = vpop.xlane.xlu0 %1739
      %v1741 = vadd.f32 %v1688, %v1690
      %1742 = vadd.xlane.f32.xlu0 %v1741
      %v1743 = vpop.xlane.xlu0 %1742
      %v1744 = vadd.f32 %v1692, %v1694
      %1745 = vadd.xlane.f32.xlu0 %v1744
      %v1746 = vpop.xlane.xlu0 %1745
      %v1747 = vadd.f32 %v1696, %v1698
      %1748 = vadd.xlane.f32.xlu0 %v1747
      %v1749 = vpop.xlane.xlu0 %1748
      %v1750 = vadd.f32 %v1700, %v1702
      %1751 = vadd.xlane.f32.xlu0 %v1750
      %v1752 = vpop.xlane.xlu0 %1751
      %v1753 = vadd.f32 %v1704, %v1706
      %1754 = vadd.xlane.f32.xlu0 %v1753
      %v1755 = vpop.xlane.xlu0 %1754
      %v1756 = vadd.f32 %v1708, %v1710
      %1757 = vadd.xlane.f32.xlu0 %v1756
      %v1758 = vpop.xlane.xlu0 %1757
      %v1759 = vmax.f32 %v1713, 1e-20
      %v1760 = vmax.f32 %v1716, 1e-20
      %v1761 = vmax.f32 %v1719, 1e-20
      %v1762 = vmax.f32 %v1722, 1e-20
      %v1763 = vmax.f32 %v1725, 1e-20
      %v1764 = vmax.f32 %v1728, 1e-20
      %v1765 = vmax.f32 %v1731, 1e-20
      %v1766 = vmax.f32 %v1734, 1e-20
      %v1767 = vmax.f32 %v1737, 1e-20
      %v1768 = vmax.f32 %v1740, 1e-20
      %v1769 = vmax.f32 %v1743, 1e-20
      %v1770 = vmax.f32 %v1746, 1e-20
      %v1771 = vmax.f32 %v1749, 1e-20
      %v1772 = vmax.f32 %v1752, 1e-20
      %v1773 = vmax.f32 %v1755, 1e-20
      %v1774 = vmax.f32 %v1758, 1e-20
      %v1775 = vrcp.pop %v1759
      %v1776 = vrcp.pop %v1760
      %v1777 = vrcp.pop %v1761
      %v1778 = vrcp.pop %v1762
      %v1779 = vrcp.pop %v1763
      %v1780 = vrcp.pop %v1764
      %v1781 = vrcp.pop %v1765
      %v1782 = vrcp.pop %v1766
      %v1783 = vrcp.pop %v1767
      %v1784 = vrcp.pop %v1768
      %v1785 = vrcp.pop %v1769
      %v1786 = vrcp.pop %v1770
      %v1787 = vrcp.pop %v1771
      %v1788 = vrcp.pop %v1772
      %v1789 = vrcp.pop %v1773
      %v1790 = vrcp.pop %v1774
      %v1791 = vmul.f32 %v1648, %v1775
      %v1792 = vmul.f32 %v1650, %v1775
      %v1793 = vmul.f32 %v1652, %v1776
      %v1794 = vmul.f32 %v1654, %v1776
      %v1795 = vmul.f32 %v1656, %v1777
      %v1796 = vmul.f32 %v1658, %v1777
      %v1797 = vmul.f32 %v1660, %v1778
      %v1798 = vmul.f32 %v1662, %v1778
      %v1799 = vmul.f32 %v1664, %v1779
      %v1800 = vmul.f32 %v1666, %v1779
      %v1801 = vmul.f32 %v1668, %v1780
      %v1802 = vmul.f32 %v1670, %v1780
      %v1803 = vmul.f32 %v1672, %v1781
      %v1804 = vmul.f32 %v1674, %v1781
      %v1805 = vmul.f32 %v1676, %v1782
      %v1806 = vmul.f32 %v1678, %v1782
      %v1807 = vmul.f32 %v1680, %v1783
      %v1808 = vmul.f32 %v1682, %v1783
      %v1809 = vmul.f32 %v1684, %v1784
      %v1810 = vmul.f32 %v1686, %v1784
      %v1811 = vmul.f32 %v1688, %v1785
      %v1812 = vmul.f32 %v1690, %v1785
      %v1813 = vmul.f32 %v1692, %v1786
      %v1814 = vmul.f32 %v1694, %v1786
      %v1815 = vmul.f32 %v1696, %v1787
      %v1816 = vmul.f32 %v1698, %v1787
      %v1817 = vmul.f32 %v1700, %v1788
      %v1818 = vmul.f32 %v1702, %v1788
      %v1819 = vmul.f32 %v1704, %v1789
      %v1820 = vmul.f32 %v1706, %v1789
      %v1821 = vmul.f32 %v1708, %v1790
      %v1822 = vmul.f32 %v1710, %v1790
      %v1823 = vpack.c.bf16 %v1793, %v1791
      %v1824 = vpack.c.bf16 %v1794, %v1792
      %v1825 = vpack.c.bf16 %v1797, %v1795
      %v1826 = vpack.c.bf16 %v1798, %v1796
      %v1827 = vpack.c.bf16 %v1801, %v1799
      %v1828 = vpack.c.bf16 %v1802, %v1800
      %v1829 = vpack.c.bf16 %v1805, %v1803
      %v1830 = vpack.c.bf16 %v1806, %v1804
      %v1831 = vpack.c.bf16 %v1809, %v1807
      %v1832 = vpack.c.bf16 %v1810, %v1808
      %v1833 = vpack.c.bf16 %v1813, %v1811
      %v1834 = vpack.c.bf16 %v1814, %v1812
      %v1835 = vpack.c.bf16 %v1817, %v1815
      %v1836 = vpack.c.bf16 %v1818, %v1816
      %v1837 = vpack.c.bf16 %v1821, %v1819
      %v1838 = vpack.c.bf16 %v1822, %v1820
      %1839 = vrot.lane.b32.xlu0 %v436, 96
      %v1840 = vpop.permute.xlu0 %1839
      %1841 = vrot.lane.b32.xlu0 %v437, 96
      %v1842 = vpop.permute.xlu0 %1841
      %1843 = vrot.lane.b32.xlu0 %v438, 96
      %v1844 = vpop.permute.xlu0 %1843
      %1845 = vrot.lane.b32.xlu0 %v439, 96
      %v1846 = vpop.permute.xlu0 %1845
      %1847 = vrot.lane.b32.xlu0 %v440, 96
      %v1848 = vpop.permute.xlu0 %1847
      %1849 = vrot.lane.b32.xlu0 %v441, 96
      %v1850 = vpop.permute.xlu0 %1849
      %1851 = vrot.lane.b32.xlu0 %v442, 96
      %v1852 = vpop.permute.xlu0 %1851
      %1853 = vrot.lane.b32.xlu0 %v443, 96
      %v1854 = vpop.permute.xlu0 %1853
      %1855 = vrot.lane.b32.xlu0 %v444, 96
      %v1856 = vpop.permute.xlu0 %1855
      %1857 = vrot.lane.b32.xlu0 %v445, 96
      %v1858 = vpop.permute.xlu0 %1857
      %1859 = vrot.lane.b32.xlu0 %v446, 96
      %v1860 = vpop.permute.xlu0 %1859
      %1861 = vrot.lane.b32.xlu0 %v447, 96
      %v1862 = vpop.permute.xlu0 %1861
      %1863 = vrot.lane.b32.xlu0 %v448, 96
      %v1864 = vpop.permute.xlu0 %1863
      %1865 = vrot.lane.b32.xlu0 %v449, 96
      %v1866 = vpop.permute.xlu0 %1865
      %1867 = vrot.lane.b32.xlu0 %v450, 96
      %v1868 = vpop.permute.xlu0 %1867
      %1869 = vrot.lane.b32.xlu0 %v451, 96
      %v1870 = vpop.permute.xlu0 %1869
      %1887 = vmatprep.subr.bf16.mxu0 0
      %1888 = vmatpush1.bf16.msra.mxu0 %v1840
      %1889 = vmatprep.subr.bf16.mxu0 0
      %1890 = vmatpush1.bf16.msra.mxu0 %v1842
      %1891 = vmatprep.subr.bf16.mxu0 0
      %1892 = vmatpush1.bf16.msra.mxu0 %v1844
      %1893 = vmatprep.subr.bf16.mxu0 0
      %1894 = vmatpush1.bf16.msra.mxu0 %v1846
      %1895 = vmatprep.subr.bf16.mxu0 0
      %1896 = vmatpush1.bf16.msra.mxu0 %v1848
      %1897 = vmatprep.subr.bf16.mxu0 0
      %1898 = vmatpush1.bf16.msra.mxu0 %v1850
      %1899 = vmatprep.subr.bf16.mxu0 0
      %1900 = vmatpush1.bf16.msra.mxu0 %v1852
      %1901 = vmatprep.subr.bf16.mxu0 0
      %1902 = vmatpush1.bf16.msra.mxu0 %v1854
      %1903 = vmatprep.subr.bf16.mxu0 0
      %1904 = vmatpush1.bf16.msra.mxu0 %v1856
      %1905 = vmatprep.subr.bf16.mxu0 0
      %1906 = vmatpush1.bf16.msra.mxu0 %v1858
      %1907 = vmatprep.subr.bf16.mxu0 0
      %1908 = vmatpush1.bf16.msra.mxu0 %v1860
      %1909 = vmatprep.subr.bf16.mxu0 0
      %1910 = vmatpush1.bf16.msra.mxu0 %v1862
      %1911 = vmatprep.subr.bf16.mxu0 0
      %1912 = vmatpush1.bf16.msra.mxu0 %v1864
      %1913 = vmatprep.subr.bf16.mxu0 0
      %1914 = vmatpush1.bf16.msra.mxu0 %v1866
      %1915 = vmatprep.subr.bf16.mxu0 0
      %1916 = vmatpush1.bf16.msra.mxu0 %v1868
      %1917 = vmatprep.subr.bf16.mxu0 0
      %1918 = vmatpush1.bf16.msra.mxu0 %v1870
      %1919 = vmatprep.mubr.bf16.mxu0 %v1824
      %1920 = vmatmul.mubr.bf16.gmra.mrb[0].mxu0 %v1823
      %v1921 = vpop.f32.mrb[0].mxu0
      %v1922 = vadd.f32 0.0, %v1921
      %v1923 = vpop.f32.mrb[0].mxu0
      %v1924 = vpop.f32.mrb[0].mxu0
      %v1925 = vadd.f32 0.0, %v1924
      %v1926 = vpop.f32.mrb[0].mxu0
      %1927 = vmatprep.mubr.bf16.mxu0 %v1826
      %1928 = vmatmul.mubr.bf16.gmra.mrb[0].mxu0 %v1825
      %v1929 = vpop.f32.mrb[0].mxu0
      %v1930 = vadd.f32 0.0, %v1929
      %v1931 = vpop.f32.mrb[0].mxu0
      %v1932 = vpop.f32.mrb[0].mxu0
      %v1933 = vadd.f32 0.0, %v1932
      %v1934 = vpop.f32.mrb[0].mxu0
      %1935 = vmatprep.mubr.bf16.mxu0 %v1828
      %1936 = vmatmul.mubr.bf16.gmra.mrb[0].mxu0 %v1827
      %v1937 = vpop.f32.mrb[0].mxu0
      %v1938 = vadd.f32 0.0, %v1937
      %v1939 = vpop.f32.mrb[0].mxu0
      %v1940 = vpop.f32.mrb[0].mxu0
      %v1941 = vadd.f32 0.0, %v1940
      %v1942 = vpop.f32.mrb[0].mxu0
      %1943 = vmatprep.mubr.bf16.mxu0 %v1830
      %1944 = vmatmul.mubr.bf16.gmra.mrb[0].mxu0 %v1829
      %v1945 = vpop.f32.mrb[0].mxu0
      %v1946 = vadd.f32 0.0, %v1945
      %v1947 = vpop.f32.mrb[0].mxu0
      %v1948 = vpop.f32.mrb[0].mxu0
      %v1949 = vadd.f32 0.0, %v1948
      %v1950 = vpop.f32.mrb[0].mxu0
      %1951 = vmatprep.mubr.bf16.mxu0 %v1832
      %1952 = vmatmul.mubr.bf16.gmra.mrb[0].mxu0 %v1831
      %v1953 = vpop.f32.mrb[0].mxu0
      %v1954 = vadd.f32 0.0, %v1953
      %v1955 = vpop.f32.mrb[0].mxu0
      %v1956 = vpop.f32.mrb[0].mxu0
      %v1957 = vadd.f32 0.0, %v1956
      %v1958 = vpop.f32.mrb[0].mxu0
      %1959 = vmatprep.mubr.bf16.mxu0 %v1834
      %1960 = vmatmul.mubr.bf16.gmra.mrb[0].mxu0 %v1833
      %v1961 = vpop.f32.mrb[0].mxu0
      %v1962 = vadd.f32 0.0, %v1961
      %v1963 = vpop.f32.mrb[0].mxu0
      %v1964 = vpop.f32.mrb[0].mxu0
      %v1965 = vadd.f32 0.0, %v1964
      %v1966 = vpop.f32.mrb[0].mxu0
      %1967 = vmatprep.mubr.bf16.mxu0 %v1836
      %1968 = vmatmul.mubr.bf16.gmra.mrb[0].mxu0 %v1835
      %v1969 = vpop.f32.mrb[0].mxu0
      %v1970 = vadd.f32 0.0, %v1969
      %v1971 = vpop.f32.mrb[0].mxu0
      %v1972 = vpop.f32.mrb[0].mxu0
      %v1973 = vadd.f32 0.0, %v1972
      %v1974 = vpop.f32.mrb[0].mxu0
      %1975 = vmatprep.mubr.bf16.mxu0 %v1838
      %1976 = vmatmul.mubr.bf16.gmra.mrb[0].mxu0 %v1837
      %v1977 = vpop.f32.mrb[0].mxu0
      %v1978 = vadd.f32 0.0, %v1977
      %v1979 = vpop.f32.mrb[0].mxu0
      %v1980 = vpop.f32.mrb[0].mxu0
      %v1981 = vadd.f32 0.0, %v1980
      %v1982 = vpop.f32.mrb[0].mxu0
      %1983 = vdwg.mxu0
      %2000 = vrot.lane.b32.xlu0 %v1922, 16
      %v2001 = vpop.permute.xlu0 %2000
      %2002 = vrot.lane.b32.xlu0 %v1925, 16
      %v2003 = vpop.permute.xlu0 %2002
      %2004 = vrot.lane.b32.xlu0 %v1930, 16
      %v2005 = vpop.permute.xlu0 %2004
      %2006 = vrot.lane.b32.xlu0 %v1933, 16
      %v2007 = vpop.permute.xlu0 %2006
      %2008 = vrot.lane.b32.xlu0 %v1938, 16
      %v2009 = vpop.permute.xlu0 %2008
      %2010 = vrot.lane.b32.xlu0 %v1941, 16
      %v2011 = vpop.permute.xlu0 %2010
      %2012 = vrot.lane.b32.xlu0 %v1946, 16
      %v2013 = vpop.permute.xlu0 %2012
      %2014 = vrot.lane.b32.xlu0 %v1949, 16
      %v2015 = vpop.permute.xlu0 %2014
      %2016 = vrot.lane.b32.xlu0 %v1954, 16
      %v2017 = vpop.permute.xlu0 %2016
      %2018 = vrot.lane.b32.xlu0 %v1957, 16
      %v2019 = vpop.permute.xlu0 %2018
      %2020 = vrot.lane.b32.xlu0 %v1962, 16
      %v2021 = vpop.permute.xlu0 %2020
      %2022 = vrot.lane.b32.xlu0 %v1965, 16
      %v2023 = vpop.permute.xlu0 %2022
      %2024 = vrot.lane.b32.xlu0 %v1970, 16
      %v2025 = vpop.permute.xlu0 %2024
      %2026 = vrot.lane.b32.xlu0 %v1973, 16
      %v2027 = vpop.permute.xlu0 %2026
      %2028 = vrot.lane.b32.xlu0 %v1978, 16
      %v2029 = vpop.permute.xlu0 %2028
      %2030 = vrot.lane.b32.xlu0 %v1981, 16
      %v2031 = vpop.permute.xlu0 %2030
      %vm2048 = vcmask 130048
      %v2049 = vsel %vm2048, %v1268, %v2001
      %v2050 = vsel %vm2048, %v1271, %v2003
      %v2051 = vsel %vm2048, %v1276, %v2005
      %v2052 = vsel %vm2048, %v1279, %v2007
      %v2053 = vsel %vm2048, %v1284, %v2009
      %v2054 = vsel %vm2048, %v1287, %v2011
      %v2055 = vsel %vm2048, %v1292, %v2013
      %v2056 = vsel %vm2048, %v1295, %v2015
      %v2057 = vsel %vm2048, %v1300, %v2017
      %v2058 = vsel %vm2048, %v1303, %v2019
      %v2059 = vsel %vm2048, %v1308, %v2021
      %v2060 = vsel %vm2048, %v1311, %v2023
      %v2061 = vsel %vm2048, %v1316, %v2025
      %v2062 = vsel %vm2048, %v1319, %v2027
      %v2063 = vsel %vm2048, %v1324, %v2029
      %v2064 = vsel %vm2048, %v1327, %v2031
      %2081 = vrot.lane.b32.xlu0 %v2049, 16
      %v2082 = vpop.permute.xlu0 %2081
      %2083 = vrot.lane.b32.xlu0 %v2050, 16
      %v2084 = vpop.permute.xlu0 %2083
      %2085 = vrot.lane.b32.xlu0 %v2051, 16
      %v2086 = vpop.permute.xlu0 %2085
      %2087 = vrot.lane.b32.xlu0 %v2052, 16
      %v2088 = vpop.permute.xlu0 %2087
      %2089 = vrot.lane.b32.xlu0 %v2053, 16
      %v2090 = vpop.permute.xlu0 %2089
      %2091 = vrot.lane.b32.xlu0 %v2054, 16
      %v2092 = vpop.permute.xlu0 %2091
      %2093 = vrot.lane.b32.xlu0 %v2055, 16
      %v2094 = vpop.permute.xlu0 %2093
      %2095 = vrot.lane.b32.xlu0 %v2056, 16
      %v2096 = vpop.permute.xlu0 %2095
      %2097 = vrot.lane.b32.xlu0 %v2057, 16
      %v2098 = vpop.permute.xlu0 %2097
      %2099 = vrot.lane.b32.xlu0 %v2058, 16
      %v2100 = vpop.permute.xlu0 %2099
      %2101 = vrot.lane.b32.xlu0 %v2059, 16
      %v2102 = vpop.permute.xlu0 %2101
      %2103 = vrot.lane.b32.xlu0 %v2060, 16
      %v2104 = vpop.permute.xlu0 %2103
      %2105 = vrot.lane.b32.xlu0 %v2061, 16
      %v2106 = vpop.permute.xlu0 %2105
      %2107 = vrot.lane.b32.xlu0 %v2062, 16
      %v2108 = vpop.permute.xlu0 %2107
      %2109 = vrot.lane.b32.xlu0 %v2063, 16
      %v2110 = vpop.permute.xlu0 %2109
      %2111 = vrot.lane.b32.xlu0 %v2064, 16
      %v2112 = vpop.permute.xlu0 %2111
      %v2129 = vsel %vm2048, %v503, %v2082
      %v2130 = vsel %vm2048, %v506, %v2084
      %v2131 = vsel %vm2048, %v511, %v2086
      %v2132 = vsel %vm2048, %v514, %v2088
      %v2133 = vsel %vm2048, %v519, %v2090
      %v2134 = vsel %vm2048, %v522, %v2092
      %v2135 = vsel %vm2048, %v527, %v2094
      %v2136 = vsel %vm2048, %v530, %v2096
      %v2137 = vsel %vm2048, %v535, %v2098
      %v2138 = vsel %vm2048, %v538, %v2100
      %v2139 = vsel %vm2048, %v543, %v2102
      %v2140 = vsel %vm2048, %v546, %v2104
      %v2141 = vsel %vm2048, %v551, %v2106
      %v2142 = vsel %vm2048, %v554, %v2108
      %v2143 = vsel %vm2048, %v559, %v2110
      %v2144 = vsel %vm2048, %v562, %v2112
      %vm2145 = vcmask 392192
      %v2146 = vsel %vm2145, %v2129, 0.0
      %v2147 = vsel %vm2145, %v2130, 0.0
      %v2148 = vsel %vm2145, %v2131, 0.0
      %v2149 = vsel %vm2145, %v2132, 0.0
      %v2150 = vsel %vm2145, %v2133, 0.0
      %v2151 = vsel %vm2145, %v2134, 0.0
      %v2152 = vsel %vm2145, %v2135, 0.0
      %v2153 = vsel %vm2145, %v2136, 0.0
      %v2154 = vsel %vm2145, %v2137, 0.0
      %v2155 = vsel %vm2145, %v2138, 0.0
      %v2156 = vsel %vm2145, %v2139, 0.0
      %v2157 = vsel %vm2145, %v2140, 0.0
      %v2158 = vsel %vm2145, %v2141, 0.0
      %v2159 = vsel %vm2145, %v2142, 0.0
      %v2160 = vsel %vm2145, %v2143, 0.0
      %v2161 = vsel %vm2145, %v2144, 0.0
      %v2162 = vld [vmem:[%s3] sm:$0x1]
      %v2164 = vlaneseq
      %v2165 = vshrl.u32 %v2164, 7
      %v2166 = vsub.s32 0, %v2165
      %v2167 = vrot.slane %v2162, %v2166
      %v2169 = vadd.f32 %v2146, %v2167
      %v2170 = vadd.f32 %v2147, %v2167
      %v2171 = vadd.f32 %v2148, %v2167
      %v2172 = vadd.f32 %v2149, %v2167
      %v2173 = vadd.f32 %v2150, %v2167
      %v2174 = vadd.f32 %v2151, %v2167
      %v2175 = vadd.f32 %v2152, %v2167
      %v2176 = vadd.f32 %v2153, %v2167
      %v2177 = vadd.f32 %v2154, %v2167
      %v2178 = vadd.f32 %v2155, %v2167
      %v2179 = vadd.f32 %v2156, %v2167
      %v2180 = vadd.f32 %v2157, %v2167
      %v2181 = vadd.f32 %v2158, %v2167
      %v2182 = vadd.f32 %v2159, %v2167
      %v2183 = vadd.f32 %v2160, %v2167
      %v2184 = vadd.f32 %v2161, %v2167
      %2185 = vst [vmem:[%s202] sm:$0xff] %v2169
      %2186 = vst [vmem:[%s202 + $0x8] sm:$0xff] %v2170
      %2187 = vst [vmem:[%s202 + $0x10] sm:$0xff] %v2171
      %2188 = vst [vmem:[%s202 + $0x18] sm:$0xff] %v2172
      %2189 = vst [vmem:[%s202 + $0x20] sm:$0xff] %v2173
      %2190 = vst [vmem:[%s202 + $0x28] sm:$0xff] %v2174
      %2191 = vst [vmem:[%s202 + $0x30] sm:$0xff] %v2175
      %2192 = vst [vmem:[%s202 + $0x38] sm:$0xff] %v2176
      %2193 = vst [vmem:[%s202 + $0x40] sm:$0xff] %v2177
      %2194 = vst [vmem:[%s202 + $0x48] sm:$0xff] %v2178
      %2195 = vst [vmem:[%s202 + $0x50] sm:$0xff] %v2179
      %2196 = vst [vmem:[%s202 + $0x58] sm:$0xff] %v2180
      %2197 = vst [vmem:[%s202 + $0x60] sm:$0xff] %v2181
      %2198 = vst [vmem:[%s202 + $0x68] sm:$0xff] %v2182
      %2199 = vst [vmem:[%s202 + $0x70] sm:$0xff] %v2183
      %2200 = vst [vmem:[%s202 + $0x78] sm:$0xff] %v2184
      %s2201 = smul.u32 16, %s15
      %p2202 = scmp.lt.s32.totalorder %s2201, 31
      %s2203 = scalar_select %p2202, %s2201, 31
      %s2204 = smul.addr %s2203, 8
      %s2205 = scalar_lea.vmem %s4, %s2204
      // Predicated region
      $region37: #{gcn_merge_forward.6} parent=35 // pred_check
        %p2206 = pneg %p122
      $region38: #{gcn_merge_forward.6} parent=35 // pred_check_branch
        %2208 = sbr.rel (%p2206) target = $region40
      $region39: #{gcn_merge_forward.6} parent=35 // pred_region
        %s2209 = smul.u32 16, %s15
      $region40: #{gcn_merge_forward.6} parent=35 // pred_fallthru
        _
    $region36: #{gcn_merge_forward.6} parent=5 // pred_fallthru
      _
    %p2210 = scmp.le.s32.totalorder 2, %s10
    // Predicated region
    $region41: #{gcn_merge_forward.6} parent=5 // pred_check
      %p2211 = pneg %p2210
    $region42: #{gcn_merge_forward.6} parent=5 // pred_check_branch
      %2213 = sbr.rel (%p2211) target = $region44
    $region43: #{gcn_merge_forward.6} parent=5 // pred_region
      %s2214 = ssub.s32 %s10, 2
      // Predicated region
      $region45: #{gcn_merge_forward.6} parent=43 // pred_check
        %p2215 = pneg %p128
      $region46: #{gcn_merge_forward.6} parent=43 // pred_check_branch
        %2217 = sbr.rel (%p2215) target = $region48
      $region47: #{gcn_merge_forward.6} parent=43 // pred_region
        %s2218 = smul.u32 16, %s16
        %p2219 = scmp.lt.s32.totalorder %s2218, 31
        %s2220 = scalar_select %p2219, %s2218, 31
        %s2221 = smul.addr %s2220, 8
        %s2222 = scalar_lea.vmem %s4, %s2221
      $region48: #{gcn_merge_forward.6} parent=43 // pred_fallthru
        _
    $region44: #{gcn_merge_forward.6} parent=5 // pred_fallthru
      _
  $region6: #{gcn_merge_forward.6} parent=0 // loop_footer
    %s14 = sadd.s32 1, %s10
  $region7: #{gcn_merge_forward.6} parent=0 // loop_footer_branch
    %9 = sbr.rel target = $region3
  $region8: #{gcn_merge_forward.6} parent=0 // loop_exit
    _

// kernel: gcn_merge_forward.9
$region0: #{gcn_merge_forward.9}
  #allocation0 [shape = 'u32[]', space=smem, size = 0x4, offset = 0x4, fixed_abs, tag = 'smem constant byte address 0x4 - core index']
  #allocation1 [shape = 'u32[144,128]{1,0:T(1,128)}', space=vmem, size = 0x12000, scoped, tag = 'internal scratch']
  %s0 = inlined_call_operand.vmem [shape: f32[256,8], index: 0, kind: input, shape index: {}, may-alias: {0,1}]
  %s1 = inlined_call_operand.vmem [shape: f32[256,8], index: 1, kind: input, shape index: {}, may-alias: {0,1}]
  %s2 = inlined_call_operand.hbm [shape: f32[256,256], index: 2, kind: output, shape index: {}]
  %s3 = sld [smem:[#allocation0]]
  $region18: #{gcn_merge_forward.9} parent=0
    _
  %s5 = ssub.s32 1, %s3
  %s6 = scalar_select 0, %s5, %s3
  $region1: #{gcn_merge_forward.9} parent=0
    #allocation2 [shape = 'u8[262144]{0}', space=vmem, size = 0x40000, scoped, tag = 'output window, operand 0, single buffered']
    #allocation3 [shape = 's32[1]{0}', space=sflag, size = 0x4, scoped, tag = 'scoped memory for gcn_merge_forward.9']
    %7 = vsyncpa [#allocation3], 0
    // Predicated region
    $region2: #{gcn_merge_forward.9} parent=1 // pred_check
      _
    $region3: #{gcn_merge_forward.9} parent=1 // pred_check_branch
      %9 = sbr.rel (0) target = $region5
    $region4: #{gcn_merge_forward.9} parent=1 // pred_region
      _
    $region5: #{gcn_merge_forward.9} parent=1 // pred_fallthru
      _
    // Predicated region
    $region6: #{gcn_merge_forward.9} parent=1 // pred_check
      _
    $region7: #{gcn_merge_forward.9} parent=1 // pred_check_branch
      %11 = sbr.rel (0) target = $region9
    $region8: #{gcn_merge_forward.9} parent=1 // pred_region
      _
    $region9: #{gcn_merge_forward.9} parent=1 // pred_fallthru
      _
    %v12 = vld [vmem:[%s0] sm:$0xff]
    %v13 = vld [vmem:[%s0 + $0x8] sm:$0xff]
    %v14 = vld [vmem:[%s0 + $0x10] sm:$0xff]
    %v15 = vld [vmem:[%s0 + $0x18] sm:$0xff]
    %v16 = vld [vmem:[%s0 + $0x20] sm:$0xff]
    %v17 = vld [vmem:[%s0 + $0x28] sm:$0xff]
    %v18 = vld [vmem:[%s0 + $0x30] sm:$0xff]
    %v19 = vld [vmem:[%s0 + $0x38] sm:$0xff]
    %v20 = vld [vmem:[%s0 + $0x40] sm:$0xff]
    %v21 = vld [vmem:[%s0 + $0x48] sm:$0xff]
    %v22 = vld [vmem:[%s0 + $0x50] sm:$0xff]
    %v23 = vld [vmem:[%s0 + $0x58] sm:$0xff]
    %v24 = vld [vmem:[%s0 + $0x60] sm:$0xff]
    %v25 = vld [vmem:[%s0 + $0x68] sm:$0xff]
    %v26 = vld [vmem:[%s0 + $0x70] sm:$0xff]
    %v27 = vld [vmem:[%s0 + $0x78] sm:$0xff]
    %v28 = vld [vmem:[%s0 + $0x80] sm:$0xff]
    %v29 = vld [vmem:[%s0 + $0x88] sm:$0xff]
    %v30 = vld [vmem:[%s0 + $0x90] sm:$0xff]
    %v31 = vld [vmem:[%s0 + $0x98] sm:$0xff]
    %v32 = vld [vmem:[%s0 + $0xa0] sm:$0xff]
    %v33 = vld [vmem:[%s0 + $0xa8] sm:$0xff]
    %v34 = vld [vmem:[%s0 + $0xb0] sm:$0xff]
    %v35 = vld [vmem:[%s0 + $0xb8] sm:$0xff]
    %v36 = vld [vmem:[%s0 + $0xc0] sm:$0xff]
    %v37 = vld [vmem:[%s0 + $0xc8] sm:$0xff]
    %v38 = vld [vmem:[%s0 + $0xd0] sm:$0xff]
    %v39 = vld [vmem:[%s0 + $0xd8] sm:$0xff]
    %v40 = vld [vmem:[%s0 + $0xe0] sm:$0xff]
    %v41 = vld [vmem:[%s0 + $0xe8] sm:$0xff]
    %v42 = vld [vmem:[%s0 + $0xf0] sm:$0xff]
    %v43 = vld [vmem:[%s0 + $0xf8] sm:$0xff]
    %v44 = vld [vmem:[%s1] sm:$0xff]
    %v45 = vld [vmem:[%s1 + $0x8] sm:$0xff]
    %v46 = vld [vmem:[%s1 + $0x10] sm:$0xff]
    %v47 = vld [vmem:[%s1 + $0x18] sm:$0xff]
    %v48 = vld [vmem:[%s1 + $0x20] sm:$0xff]
    %v49 = vld [vmem:[%s1 + $0x28] sm:$0xff]
    %v50 = vld [vmem:[%s1 + $0x30] sm:$0xff]
    %v51 = vld [vmem:[%s1 + $0x38] sm:$0xff]
    %v52 = vld [vmem:[%s1 + $0x40] sm:$0xff]
    %v53 = vld [vmem:[%s1 + $0x48] sm:$0xff]
    %v54 = vld [vmem:[%s1 + $0x50] sm:$0xff]
    %v55 = vld [vmem:[%s1 + $0x58] sm:$0xff]
    %v56 = vld [vmem:[%s1 + $0x60] sm:$0xff]
    %v57 = vld [vmem:[%s1 + $0x68] sm:$0xff]
    %v58 = vld [vmem:[%s1 + $0x70] sm:$0xff]
    %v59 = vld [vmem:[%s1 + $0x78] sm:$0xff]
    %v60 = vld [vmem:[%s1 + $0x80] sm:$0xff]
    %v61 = vld [vmem:[%s1 + $0x88] sm:$0xff]
    %v62 = vld [vmem:[%s1 + $0x90] sm:$0xff]
    %v63 = vld [vmem:[%s1 + $0x98] sm:$0xff]
    %v64 = vld [vmem:[%s1 + $0xa0] sm:$0xff]
    %v65 = vld [vmem:[%s1 + $0xa8] sm:$0xff]
    %v66 = vld [vmem:[%s1 + $0xb0] sm:$0xff]
    %v67 = vld [vmem:[%s1 + $0xb8] sm:$0xff]
    %v68 = vld [vmem:[%s1 + $0xc0] sm:$0xff]
    %v69 = vld [vmem:[%s1 + $0xc8] sm:$0xff]
    %v70 = vld [vmem:[%s1 + $0xd0] sm:$0xff]
    %v71 = vld [vmem:[%s1 + $0xd8] sm:$0xff]
    %v72 = vld [vmem:[%s1 + $0xe0] sm:$0xff]
    %v73 = vld [vmem:[%s1 + $0xe8] sm:$0xff]
    %v74 = vld [vmem:[%s1 + $0xf0] sm:$0xff]
    %v75 = vld [vmem:[%s1 + $0xf8] sm:$0xff]
    %vm76 = vcmask 64512
    %v78 = vsel %vm76, %v12, 0
    %v81 = vsel %vm76, %v13, 0
    %v84 = vsel %vm76, %v14, 0
    %v87 = vsel %vm76, %v15, 0
    %v90 = vsel %vm76, %v16, 0
    %v93 = vsel %vm76, %v17, 0
    %v96 = vsel %vm76, %v18, 0
    %v99 = vsel %vm76, %v19, 0
    %v102 = vsel %vm76, %v20, 0
    %v105 = vsel %vm76, %v21, 0
    %v108 = vsel %vm76, %v22, 0
    %v111 = vsel %vm76, %v23, 0
    %v114 = vsel %vm76, %v24, 0
    %v117 = vsel %vm76, %v25, 0
    %v120 = vsel %vm76, %v26, 0
    %v123 = vsel %vm76, %v27, 0
    %v126 = vsel %vm76, %v28, 0
    %v129 = vsel %vm76, %v29, 0
    %v132 = vsel %vm76, %v30, 0
    %v135 = vsel %vm76, %v31, 0
    %v138 = vsel %vm76, %v32, 0
    %v141 = vsel %vm76, %v33, 0
    %v144 = vsel %vm76, %v34, 0
    %v147 = vsel %vm76, %v35, 0
    %v150 = vsel %vm76, %v36, 0
    %v153 = vsel %vm76, %v37, 0
    %v156 = vsel %vm76, %v38, 0
    %v159 = vsel %vm76, %v39, 0
    %v162 = vsel %vm76, %v40, 0
    %v165 = vsel %vm76, %v41, 0
    %v168 = vsel %vm76, %v42, 0
    %v171 = vsel %vm76, %v43, 0
    %v174 = vsel %vm76, %v44, 0
    %v177 = vsel %vm76, %v45, 0
    %v180 = vsel %vm76, %v46, 0
    %v183 = vsel %vm76, %v47, 0
    %v186 = vsel %vm76, %v48, 0
    %v189 = vsel %vm76, %v49, 0
    %v192 = vsel %vm76, %v50, 0
    %v195 = vsel %vm76, %v51, 0
    %v198 = vsel %vm76, %v52, 0
    %v201 = vsel %vm76, %v53, 0
    %v204 = vsel %vm76, %v54, 0
    %v207 = vsel %vm76, %v55, 0
    %v210 = vsel %vm76, %v56, 0
    %v213 = vsel %vm76, %v57, 0
    %v216 = vsel %vm76, %v58, 0
    %v219 = vsel %vm76, %v59, 0
    %v222 = vsel %vm76, %v60, 0
    %v225 = vsel %vm76, %v61, 0
    %v228 = vsel %vm76, %v62, 0
    %v231 = vsel %vm76, %v63, 0
    %v234 = vsel %vm76, %v64, 0
    %v237 = vsel %vm76, %v65, 0
    %v240 = vsel %vm76, %v66, 0
    %v243 = vsel %vm76, %v67, 0
    %v246 = vsel %vm76, %v68, 0
    %v249 = vsel %vm76, %v69, 0
    %v252 = vsel %vm76, %v70, 0
    %v255 = vsel %vm76, %v71, 0
    %v258 = vsel %vm76, %v72, 0
    %v261 = vsel %vm76, %v73, 0
    %v264 = vsel %vm76, %v74, 0
    %v267 = vsel %vm76, %v75, 0
    %269 = vmatprep.subr.mxu0 0.0
    %270 = vmatpush1.xpose.msra.mxu0 %v174
    %271 = vmatprep.subr.mxu0 0.0
    %272 = vmatpush1.xpose.msra.mxu0 %v177
    %273 = vmatprep.subr.mxu0 0.0
    %274 = vmatpush1.xpose.msra.mxu0 %v180
    %275 = vmatprep.subr.mxu0 0.0
    %276 = vmatpush1.xpose.msra.mxu0 %v183
    %277 = vmatprep.subr.mxu0 0.0
    %278 = vmatpush1.xpose.msra.mxu0 %v186
    %279 = vmatprep.subr.mxu0 0.0
    %280 = vmatpush1.xpose.msra.mxu0 %v189
    %281 = vmatprep.subr.mxu0 0.0
    %282 = vmatpush1.xpose.msra.mxu0 %v192
    %283 = vmatprep.subr.mxu0 0.0
    %284 = vmatpush1.xpose.msra.mxu0 %v195
    %285 = vmatprep.subr.mxu0 0.0
    %286 = vmatpush1.xpose.msra.mxu0 %v198
    %287 = vmatprep.subr.mxu0 0.0
    %288 = vmatpush1.xpose.msra.mxu0 %v201
    %289 = vmatprep.subr.mxu0 0.0
    %290 = vmatpush1.xpose.msra.mxu0 %v204
    %291 = vmatprep.subr.mxu0 0.0
    %292 = vmatpush1.xpose.msra.mxu0 %v207
    %293 = vmatprep.subr.mxu0 0.0
    %294 = vmatpush1.xpose.msra.mxu0 %v210
    %295 = vmatprep.subr.mxu0 0.0
    %296 = vmatpush1.xpose.msra.mxu0 %v213
    %297 = vmatprep.subr.mxu0 0.0
    %298 = vmatpush1.xpose.msra.mxu0 %v216
    %299 = vmatprep.subr.mxu0 0.0
    %300 = vmatpush1.xpose.msra.mxu0 %v219
    %301 = vmatprep.subr.mxu0 0.0
    %302 = vmatpush1.xpose.msra.mxu0 %v222
    %303 = vmatprep.subr.mxu0 0.0
    %304 = vmatpush1.xpose.msra.mxu0 %v225
    %305 = vmatprep.subr.mxu0 0.0
    %306 = vmatpush1.xpose.msra.mxu0 %v228
    %307 = vmatprep.subr.mxu0 0.0
    %308 = vmatpush1.xpose.msra.mxu0 %v231
    %309 = vmatprep.subr.mxu0 0.0
    %310 = vmatpush1.xpose.msra.mxu0 %v234
    %311 = vmatprep.subr.mxu0 0.0
    %312 = vmatpush1.xpose.msra.mxu0 %v237
    %313 = vmatprep.subr.mxu0 0.0
    %314 = vmatpush1.xpose.msra.mxu0 %v240
    %315 = vmatprep.subr.mxu0 0.0
    %316 = vmatpush1.xpose.msra.mxu0 %v243
    %317 = vmatprep.subr.mxu0 0.0
    %318 = vmatpush1.xpose.msra.mxu0 %v246
    %319 = vmatprep.subr.mxu0 0.0
    %320 = vmatpush1.xpose.msra.mxu0 %v249
    %321 = vmatprep.subr.mxu0 0.0
    %322 = vmatpush1.xpose.msra.mxu0 %v252
    %323 = vmatprep.subr.mxu0 0.0
    %324 = vmatpush1.xpose.msra.mxu0 %v255
    %325 = vmatprep.subr.mxu0 0.0
    %326 = vmatpush1.xpose.msra.mxu0 %v258
    %327 = vmatprep.subr.mxu0 0.0
    %328 = vmatpush1.xpose.msra.mxu0 %v261
    %329 = vmatprep.subr.mxu0 0.0
    %330 = vmatpush1.xpose.msra.mxu0 %v264
    %331 = vmatprep.subr.mxu0 0.0
    %332 = vmatpush1.xpose.msra.mxu0 %v267
    %333 = vmatprep.mubr.f32.mxu0 0.0
    %334 = vmatmul.mubr.f32.gmra.mrb[0].mxu0 %v78
    %v335 = vpop.f32.mrb[0].mxu0
    %v336 = vadd.f32 0.0, %v335
    %v337 = vpop.f32.mrb[0].mxu0
    %v338 = vadd.f32 0.0, %v337
    %339 = vmatprep.mubr.f32.mxu0 0.0
    %340 = vmatmul.mubr.f32.gmra.mrb[0].mxu0 %v81
    %v341 = vpop.f32.mrb[0].mxu0
    %v342 = vadd.f32 0.0, %v341
    %v343 = vpop.f32.mrb[0].mxu0
    %v344 = vadd.f32 0.0, %v343
    %345 = vmatprep.mubr.f32.mxu0 0.0
    %346 = vmatmul.mubr.f32.gmra.mrb[0].mxu0 %v84
    %v347 = vpop.f32.mrb[0].mxu0
    %v348 = vadd.f32 0.0, %v347
    %v349 = vpop.f32.mrb[0].mxu0
    %v350 = vadd.f32 0.0, %v349
    %351 = vmatprep.mubr.f32.mxu0 0.0
    %352 = vmatmul.mubr.f32.gmra.mrb[0].mxu0 %v87
    %v353 = vpop.f32.mrb[0].mxu0
    %v354 = vadd.f32 0.0, %v353
    %v355 = vpop.f32.mrb[0].mxu0
    %v356 = vadd.f32 0.0, %v355
    %357 = vmatprep.mubr.f32.mxu0 0.0
    %358 = vmatmul.mubr.f32.gmra.mrb[0].mxu0 %v90
    %v359 = vpop.f32.mrb[0].mxu0
    %v360 = vadd.f32 0.0, %v359
    %v361 = vpop.f32.mrb[0].mxu0
    %v362 = vadd.f32 0.0, %v361
    %363 = vmatprep.mubr.f32.mxu0 0.0
    %364 = vmatmul.mubr.f32.gmra.mrb[0].mxu0 %v93
    %v365 = vpop.f32.mrb[0].mxu0
    %v366 = vadd.f32 0.0, %v365
    %v367 = vpop.f32.mrb[0].mxu0
    %v368 = vadd.f32 0.0, %v367
    %369 = vmatprep.mubr.f32.mxu0 0.0
    %370 = vmatmul.mubr.f32.gmra.mrb[0].mxu0 %v96
    %v371 = vpop.f32.mrb[0].mxu0
    %v372 = vadd.f32 0.0, %v371
    %v373 = vpop.f32.mrb[0].mxu0
    %v374 = vadd.f32 0.0, %v373
    %375 = vmatprep.mubr.f32.mxu0 0.0
    %376 = vmatmul.mubr.f32.gmra.mrb[0].mxu0 %v99
    %v377 = vpop.f32.mrb[0].mxu0
    %v378 = vadd.f32 0.0, %v377
    %v379 = vpop.f32.mrb[0].mxu0
    %v380 = vadd.f32 0.0, %v379
    %381 = vmatprep.mubr.f32.mxu0 0.0
    %382 = vmatmul.mubr.f32.gmra.mrb[0].mxu0 %v102
    %v383 = vpop.f32.mrb[0].mxu0
    %v384 = vadd.f32 0.0, %v383
    %v385 = vpop.f32.mrb[0].mxu0
    %v386 = vadd.f32 0.0, %v385
    %387 = vmatprep.mubr.f32.mxu0 0.0
    %388 = vmatmul.mubr.f32.gmra.mrb[0].mxu0 %v105
    %v389 = vpop.f32.mrb[0].mxu0
    %v390 = vadd.f32 0.0, %v389
    %v391 = vpop.f32.mrb[0].mxu0
    %v392 = vadd.f32 0.0, %v391
    %393 = vmatprep.mubr.f32.mxu0 0.0
    %394 = vmatmul.mubr.f32.gmra.mrb[0].mxu0 %v108
    %v395 = vpop.f32.mrb[0].mxu0
    %v396 = vadd.f32 0.0, %v395
    %v397 = vpop.f32.mrb[0].mxu0
    %v398 = vadd.f32 0.0, %v397
    %399 = vmatprep.mubr.f32.mxu0 0.0
    %400 = vmatmul.mubr.f32.gmra.mrb[0].mxu0 %v111
    %v401 = vpop.f32.mrb[0].mxu0
    %v402 = vadd.f32 0.0, %v401
    %v403 = vpop.f32.mrb[0].mxu0
    %v404 = vadd.f32 0.0, %v403
    %405 = vmatprep.mubr.f32.mxu0 0.0
    %406 = vmatmul.mubr.f32.gmra.mrb[0].mxu0 %v114
    %v407 = vpop.f32.mrb[0].mxu0
    %v408 = vadd.f32 0.0, %v407
    %v409 = vpop.f32.mrb[0].mxu0
    %v410 = vadd.f32 0.0, %v409
    %411 = vmatprep.mubr.f32.mxu0 0.0
    %412 = vmatmul.mubr.f32.gmra.mrb[0].mxu0 %v117
    %v413 = vpop.f32.mrb[0].mxu0
    %v414 = vadd.f32 0.0, %v413
    %v415 = vpop.f32.mrb[0].mxu0
    %v416 = vadd.f32 0.0, %v415
    %417 = vmatprep.mubr.f32.mxu0 0.0
    %418 = vmatmul.mubr.f32.gmra.mrb[0].mxu0 %v120
    %v419 = vpop.f32.mrb[0].mxu0
    %v420 = vadd.f32 0.0, %v419
    %v421 = vpop.f32.mrb[0].mxu0
    %v422 = vadd.f32 0.0, %v421
    %423 = vmatprep.mubr.f32.mxu0 0.0
    %424 = vmatmul.mubr.f32.gmra.mrb[0].mxu0 %v123
    %v425 = vpop.f32.mrb[0].mxu0
    %v426 = vadd.f32 0.0, %v425
    %v427 = vpop.f32.mrb[0].mxu0
    %v428 = vadd.f32 0.0, %v427
    %429 = vmatprep.mubr.f32.mxu0 0.0
    %430 = vmatmul.mubr.f32.gmra.mrb[0].mxu0 %v126
    %v431 = vpop.f32.mrb[0].mxu0
    %v432 = vadd.f32 0.0, %v431
    %v433 = vpop.f32.mrb[0].mxu0
    %v434 = vadd.f32 0.0, %v433
    %435 = vmatprep.mubr.f32.mxu0 0.0
    %436 = vmatmul.mubr.f32.gmra.mrb[0].mxu0 %v129
    %v437 = vpop.f32.mrb[0].mxu0
    %v438 = vadd.f32 0.0, %v437
    %v439 = vpop.f32.mrb[0].mxu0
    %v440 = vadd.f32 0.0, %v439
    %441 = vmatprep.mubr.f32.mxu0 0.0
    %442 = vmatmul.mubr.f32.gmra.mrb[0].mxu0 %v132
    %v443 = vpop.f32.mrb[0].mxu0
    %v444 = vadd.f32 0.0, %v443
    %v445 = vpop.f32.mrb[0].mxu0
    %v446 = vadd.f32 0.0, %v445
    %447 = vmatprep.mubr.f32.mxu0 0.0
    %448 = vmatmul.mubr.f32.gmra.mrb[0].mxu0 %v135
    %v449 = vpop.f32.mrb[0].mxu0
    %v450 = vadd.f32 0.0, %v449
    %v451 = vpop.f32.mrb[0].mxu0
    %v452 = vadd.f32 0.0, %v451
    %453 = vmatprep.mubr.f32.mxu0 0.0
    %454 = vmatmul.mubr.f32.gmra.mrb[0].mxu0 %v138
    %v455 = vpop.f32.mrb[0].mxu0
    %v456 = vadd.f32 0.0, %v455
    %v457 = vpop.f32.mrb[0].mxu0
    %v458 = vadd.f32 0.0, %v457
    %459 = vmatprep.mubr.f32.mxu0 0.0
    %460 = vmatmul.mubr.f32.gmra.mrb[0].mxu0 %v141
    %v461 = vpop.f32.mrb[0].mxu0
    %v462 = vadd.f32 0.0, %v461
    %v463 = vpop.f32.mrb[0].mxu0
    %v464 = vadd.f32 0.0, %v463
    %465 = vmatprep.mubr.f32.mxu0 0.0
    %466 = vmatmul.mubr.f32.gmra.mrb[0].mxu0 %v144
    %v467 = vpop.f32.mrb[0].mxu0
    %v468 = vadd.f32 0.0, %v467
    %v469 = vpop.f32.mrb[0].mxu0
    %v470 = vadd.f32 0.0, %v469
    %471 = vmatprep.mubr.f32.mxu0 0.0
    %472 = vmatmul.mubr.f32.gmra.mrb[0].mxu0 %v147
    %v473 = vpop.f32.mrb[0].mxu0
    %v474 = vadd.f32 0.0, %v473
    %v475 = vpop.f32.mrb[0].mxu0
    %v476 = vadd.f32 0.0, %v475
    %477 = vmatprep.mubr.f32.mxu0 0.0
    %478 = vmatmul.mubr.f32.gmra.mrb[0].mxu0 %v150
    %v479 = vpop.f32.mrb[0].mxu0
    %v480 = vadd.f32 0.0, %v479
    %v481 = vpop.f32.mrb[0].mxu0
    %v482 = vadd.f32 0.0, %v481
    %483 = vmatprep.mubr.f32.mxu0 0.0
    %484 = vmatmul.mubr.f32.gmra.mrb[0].mxu0 %v153
    %v485 = vpop.f32.mrb[0].mxu0
    %v486 = vadd.f32 0.0, %v485
    %v487 = vpop.f32.mrb[0].mxu0
    %v488 = vadd.f32 0.0, %v487
    %489 = vmatprep.mubr.f32.mxu0 0.0
    %490 = vmatmul.mubr.f32.gmra.mrb[0].mxu0 %v156
    %v491 = vpop.f32.mrb[0].mxu0
    %v492 = vadd.f32 0.0, %v491
    %v493 = vpop.f32.mrb[0].mxu0
    %v494 = vadd.f32 0.0, %v493
    %495 = vmatprep.mubr.f32.mxu0 0.0
    %496 = vmatmul.mubr.f32.gmra.mrb[0].mxu0 %v159
    %v497 = vpop.f32.mrb[0].mxu0
    %v498 = vadd.f32 0.0, %v497
    %v499 = vpop.f32.mrb[0].mxu0
    %v500 = vadd.f32 0.0, %v499
    %501 = vmatprep.mubr.f32.mxu0 0.0
    %502 = vmatmul.mubr.f32.gmra.mrb[0].mxu0 %v162
    %v503 = vpop.f32.mrb[0].mxu0
    %v504 = vadd.f32 0.0, %v503
    %v505 = vpop.f32.mrb[0].mxu0
    %v506 = vadd.f32 0.0, %v505
    %507 = vmatprep.mubr.f32.mxu0 0.0
    %508 = vmatmul.mubr.f32.gmra.mrb[0].mxu0 %v165
    %v509 = vpop.f32.mrb[0].mxu0
    %v510 = vadd.f32 0.0, %v509
    %v511 = vpop.f32.mrb[0].mxu0
    %v512 = vadd.f32 0.0, %v511
    %513 = vmatprep.mubr.f32.mxu0 0.0
    %514 = vmatmul.mubr.f32.gmra.mrb[0].mxu0 %v168
    %v515 = vpop.f32.mrb[0].mxu0
    %v516 = vadd.f32 0.0, %v515
    %v517 = vpop.f32.mrb[0].mxu0
    %v518 = vadd.f32 0.0, %v517
    %519 = vmatprep.mubr.f32.mxu0 0.0
    %520 = vmatmul.mubr.f32.gmra.mrb[0].mxu0 %v171
    %v521 = vpop.f32.mrb[0].mxu0
    %v522 = vadd.f32 0.0, %v521
    %v523 = vpop.f32.mrb[0].mxu0
    %v524 = vadd.f32 0.0, %v523
    %525 = vdwg.mxu0
    %v526 = vxor.u32 %v336, 2147483648
    %v527 = vxor.u32 %v338, 2147483648
    %v528 = vxor.u32 %v342, 2147483648
    %v529 = vxor.u32 %v344, 2147483648
    %v530 = vxor.u32 %v348, 2147483648
    %v531 = vxor.u32 %v350, 2147483648
    %v532 = vxor.u32 %v354, 2147483648
    %v533 = vxor.u32 %v356, 2147483648
    %v534 = vxor.u32 %v360, 2147483648
    %v535 = vxor.u32 %v362, 2147483648
    %v536 = vxor.u32 %v366, 2147483648
    %v537 = vxor.u32 %v368, 2147483648
    %v538 = vxor.u32 %v372, 2147483648
    %v539 = vxor.u32 %v374, 2147483648
    %v540 = vxor.u32 %v378, 2147483648
    %v541 = vxor.u32 %v380, 2147483648
    %v542 = vxor.u32 %v384, 2147483648
    %v543 = vxor.u32 %v386, 2147483648
    %v544 = vxor.u32 %v390, 2147483648
    %v545 = vxor.u32 %v392, 2147483648
    %v546 = vxor.u32 %v396, 2147483648
    %v547 = vxor.u32 %v398, 2147483648
    %v548 = vxor.u32 %v402, 2147483648
    %v549 = vxor.u32 %v404, 2147483648
    %v550 = vxor.u32 %v408, 2147483648
    %v551 = vxor.u32 %v410, 2147483648
    %v552 = vxor.u32 %v414, 2147483648
    %v553 = vxor.u32 %v416, 2147483648
    %v554 = vxor.u32 %v420, 2147483648
    %v555 = vxor.u32 %v422, 2147483648
    %v556 = vxor.u32 %v426, 2147483648
    %v557 = vxor.u32 %v428, 2147483648
    %v558 = vxor.u32 %v432, 2147483648
    %v559 = vxor.u32 %v434, 2147483648
    %v560 = vxor.u32 %v438, 2147483648
    %v561 = vxor.u32 %v440, 2147483648
    %v562 = vxor.u32 %v444, 2147483648
    %v563 = vxor.u32 %v446, 2147483648
    %v564 = vxor.u32 %v450, 2147483648
    %v565 = vxor.u32 %v452, 2147483648
    %v566 = vxor.u32 %v456, 2147483648
    %v567 = vxor.u32 %v458, 2147483648
    %v568 = vxor.u32 %v462, 2147483648
    %v569 = vxor.u32 %v464, 2147483648
    %v570 = vxor.u32 %v468, 2147483648
    %v571 = vxor.u32 %v470, 2147483648
    %v572 = vxor.u32 %v474, 2147483648
    %v573 = vxor.u32 %v476, 2147483648
    %v574 = vxor.u32 %v480, 2147483648
    %v575 = vxor.u32 %v482, 2147483648
    %v576 = vxor.u32 %v486, 2147483648
    %v577 = vxor.u32 %v488, 2147483648
    %v578 = vxor.u32 %v492, 2147483648
    %v579 = vxor.u32 %v494, 2147483648
    %v580 = vxor.u32 %v498, 2147483648
    %v581 = vxor.u32 %v500, 2147483648
    %v582 = vxor.u32 %v504, 2147483648
    %v583 = vxor.u32 %v506, 2147483648
    %v584 = vxor.u32 %v510, 2147483648
    %v585 = vxor.u32 %v512, 2147483648
    %v586 = vxor.u32 %v516, 2147483648
    %v587 = vxor.u32 %v518, 2147483648
    %v588 = vxor.u32 %v522, 2147483648
    %v589 = vxor.u32 %v524, 2147483648
    %v590 = vmul.f32 %v526, 1.442695
    %v591 = vpow.pop %v590
    %v592 = vmul.f32 %v527, 1.442695
    %v593 = vpow.pop %v592
    %v594 = vmul.f32 %v528, 1.442695
    %v595 = vpow.pop %v594
    %v596 = vmul.f32 %v529, 1.442695
    %v597 = vpow.pop %v596
    %v598 = vmul.f32 %v530, 1.442695
    %v599 = vpow.pop %v598
    %v600 = vmul.f32 %v531, 1.442695
    %v601 = vpow.pop %v600
    %v602 = vmul.f32 %v532, 1.442695
    %v603 = vpow.pop %v602
    %v604 = vmul.f32 %v533, 1.442695
    %v605 = vpow.pop %v604
    %v606 = vmul.f32 %v534, 1.442695
    %v607 = vpow.pop %v606
    %v608 = vmul.f32 %v535, 1.442695
    %v609 = vpow.pop %v608
    %v610 = vmul.f32 %v536, 1.442695
    %v611 = vpow.pop %v610
    %v612 = vmul.f32 %v537, 1.442695
    %v613 = vpow.pop %v612
    %v614 = vmul.f32 %v538, 1.442695
    %v615 = vpow.pop %v614
    %v616 = vmul.f32 %v539, 1.442695
    %v617 = vpow.pop %v616
    %v618 = vmul.f32 %v540, 1.442695
    %v619 = vpow.pop %v618
    %v620 = vmul.f32 %v541, 1.442695
    %v621 = vpow.pop %v620
    %v622 = vmul.f32 %v542, 1.442695
    %v623 = vpow.pop %v622
    %v624 = vmul.f32 %v543, 1.442695
    %v625 = vpow.pop %v624
    %v626 = vmul.f32 %v544, 1.442695
    %v627 = vpow.pop %v626
    %v628 = vmul.f32 %v545, 1.442695
    %v629 = vpow.pop %v628
    %v630 = vmul.f32 %v546, 1.442695
    %v631 = vpow.pop %v630
    %v632 = vmul.f32 %v547, 1.442695
    %v633 = vpow.pop %v632
    %v634 = vmul.f32 %v548, 1.442695
    %v635 = vpow.pop %v634
    %v636 = vmul.f32 %v549, 1.442695
    %v637 = vpow.pop %v636
    %v638 = vmul.f32 %v550, 1.442695
    %v639 = vpow.pop %v638
    %v640 = vmul.f32 %v551, 1.442695
    %v641 = vpow.pop %v640
    %v642 = vmul.f32 %v552, 1.442695
    %v643 = vpow.pop %v642
    %v644 = vmul.f32 %v553, 1.442695
    %v645 = vpow.pop %v644
    %v646 = vmul.f32 %v554, 1.442695
    %v647 = vpow.pop %v646
    %v648 = vmul.f32 %v555, 1.442695
    %v649 = vpow.pop %v648
    %v650 = vmul.f32 %v556, 1.442695
    %v651 = vpow.pop %v650
    %v652 = vmul.f32 %v557, 1.442695
    %v653 = vpow.pop %v652
    %v654 = vmul.f32 %v558, 1.442695
    %v655 = vpow.pop %v654
    %v656 = vmul.f32 %v559, 1.442695
    %v657 = vpow.pop %v656
    %v658 = vmul.f32 %v560, 1.442695
    %v659 = vpow.pop %v658
    %v660 = vmul.f32 %v561, 1.442695
    %v661 = vpow.pop %v660
    %v662 = vmul.f32 %v562, 1.442695
    %v663 = vpow.pop %v662
    %v664 = vmul.f32 %v563, 1.442695
    %v665 = vpow.pop %v664
    %v666 = vmul.f32 %v564, 1.442695
    %v667 = vpow.pop %v666
    %v668 = vmul.f32 %v565, 1.442695
    %v669 = vpow.pop %v668
    %v670 = vmul.f32 %v566, 1.442695
    %v671 = vpow.pop %v670
    %v672 = vmul.f32 %v567, 1.442695
    %v673 = vpow.pop %v672
    %v674 = vmul.f32 %v568, 1.442695
    %v675 = vpow.pop %v674
    %v676 = vmul.f32 %v569, 1.442695
    %v677 = vpow.pop %v676
    %v678 = vmul.f32 %v570, 1.442695
    %v679 = vpow.pop %v678
    %v680 = vmul.f32 %v571, 1.442695
    %v681 = vpow.pop %v680
    %v682 = vmul.f32 %v572, 1.442695
    %v683 = vpow.pop %v682
    %v684 = vmul.f32 %v573, 1.442695
    %v685 = vpow.pop %v684
    %v686 = vmul.f32 %v574, 1.442695
    %v687 = vpow.pop %v686
    %v688 = vmul.f32 %v575, 1.442695
    %v689 = vpow.pop %v688
    %v690 = vmul.f32 %v576, 1.442695
    %v691 = vpow.pop %v690
    %v692 = vmul.f32 %v577, 1.442695
    %v693 = vpow.pop %v692
    %v694 = vmul.f32 %v578, 1.442695
    %v695 = vpow.pop %v694
    %v696 = vmul.f32 %v579, 1.442695
    %v697 = vpow.pop %v696
    %v698 = vmul.f32 %v580, 1.442695
    %v699 = vpow.pop %v698
    %v700 = vmul.f32 %v581, 1.442695
    %v701 = vpow.pop %v700
    %v702 = vmul.f32 %v582, 1.442695
    %v703 = vpow.pop %v702
    %v704 = vmul.f32 %v583, 1.442695
    %v705 = vpow.pop %v704
    %v706 = vmul.f32 %v584, 1.442695
    %v707 = vpow.pop %v706
    %v708 = vmul.f32 %v585, 1.442695
    %v709 = vpow.pop %v708
    %v710 = vmul.f32 %v586, 1.442695
    %v711 = vpow.pop %v710
    %v712 = vmul.f32 %v587, 1.442695
    %v713 = vpow.pop %v712
    %v714 = vmul.f32 %v588, 1.442695
    %v715 = vpow.pop %v714
    %v716 = vmul.f32 %v589, 1.442695
    %v717 = vpow.pop %v716
    %v718 = vadd.f32 %v591, 1.0
    %v719 = vadd.f32 %v593, 1.0
    %v720 = vadd.f32 %v595, 1.0
    %v721 = vadd.f32 %v597, 1.0
    %v722 = vadd.f32 %v599, 1.0
    %v723 = vadd.f32 %v601, 1.0
    %v724 = vadd.f32 %v603, 1.0
    %v725 = vadd.f32 %v605, 1.0
    %v726 = vadd.f32 %v607, 1.0
    %v727 = vadd.f32 %v609, 1.0
    %v728 = vadd.f32 %v611, 1.0
    %v729 = vadd.f32 %v613, 1.0
    %v730 = vadd.f32 %v615, 1.0
    %v731 = vadd.f32 %v617, 1.0
    %v732 = vadd.f32 %v619, 1.0
    %v733 = vadd.f32 %v621, 1.0
    %v734 = vadd.f32 %v623, 1.0
    %v735 = vadd.f32 %v625, 1.0
    %v736 = vadd.f32 %v627, 1.0
    %v737 = vadd.f32 %v629, 1.0
    %v738 = vadd.f32 %v631, 1.0
    %v739 = vadd.f32 %v633, 1.0
    %v740 = vadd.f32 %v635, 1.0
    %v741 = vadd.f32 %v637, 1.0
    %v742 = vadd.f32 %v639, 1.0
    %v743 = vadd.f32 %v641, 1.0
    %v744 = vadd.f32 %v643, 1.0
    %v745 = vadd.f32 %v645, 1.0
    %v746 = vadd.f32 %v647, 1.0
    %v747 = vadd.f32 %v649, 1.0
    %v748 = vadd.f32 %v651, 1.0
    %v749 = vadd.f32 %v653, 1.0
    %v750 = vadd.f32 %v655, 1.0
    %v751 = vadd.f32 %v657, 1.0
    %v752 = vadd.f32 %v659, 1.0
    %v753 = vadd.f32 %v661, 1.0
    %v754 = vadd.f32 %v663, 1.0
    %v755 = vadd.f32 %v665, 1.0
    %v756 = vadd.f32 %v667, 1.0
    %v757 = vadd.f32 %v669, 1.0
    %v758 = vadd.f32 %v671, 1.0
    %v759 = vadd.f32 %v673, 1.0
    %v760 = vadd.f32 %v675, 1.0
    %v761 = vadd.f32 %v677, 1.0
    %v762 = vadd.f32 %v679, 1.0
    %v763 = vadd.f32 %v681, 1.0
    %v764 = vadd.f32 %v683, 1.0
    %v765 = vadd.f32 %v685, 1.0
    %v766 = vadd.f32 %v687, 1.0
    %v767 = vadd.f32 %v689, 1.0
    %v768 = vadd.f32 %v691, 1.0
    %v769 = vadd.f32 %v693, 1.0
    %v770 = vadd.f32 %v695, 1.0
    %v771 = vadd.f32 %v697, 1.0
    %v772 = vadd.f32 %v699, 1.0
    %v773 = vadd.f32 %v701, 1.0
    %v774 = vadd.f32 %v703, 1.0
    %v775 = vadd.f32 %v705, 1.0
    %v776 = vadd.f32 %v707, 1.0
    %v777 = vadd.f32 %v709, 1.0
    %v778 = vadd.f32 %v711, 1.0
    %v779 = vadd.f32 %v713, 1.0
    %v780 = vadd.f32 %v715, 1.0
    %v781 = vadd.f32 %v717, 1.0
    %v782 = vrcp.pop %v718
    %v783 = vmul.f32 1.0, %v782
    %v784 = vrcp.pop %v719
    %v785 = vmul.f32 1.0, %v784
    %v786 = vrcp.pop %v720
    %v787 = vmul.f32 1.0, %v786
    %v788 = vrcp.pop %v721
    %v789 = vmul.f32 1.0, %v788
    %v790 = vrcp.pop %v722
    %v791 = vmul.f32 1.0, %v790
    %v792 = vrcp.pop %v723
    %v793 = vmul.f32 1.0, %v792
    %v794 = vrcp.pop %v724
    %v795 = vmul.f32 1.0, %v794
    %v796 = vrcp.pop %v725
    %v797 = vmul.f32 1.0, %v796
    %v798 = vrcp.pop %v726
    %v799 = vmul.f32 1.0, %v798
    %v800 = vrcp.pop %v727
    %v801 = vmul.f32 1.0, %v800
    %v802 = vrcp.pop %v728
    %v803 = vmul.f32 1.0, %v802
    %v804 = vrcp.pop %v729
    %v805 = vmul.f32 1.0, %v804
    %v806 = vrcp.pop %v730
    %v807 = vmul.f32 1.0, %v806
    %v808 = vrcp.pop %v731
    %v809 = vmul.f32 1.0, %v808
    %v810 = vrcp.pop %v732
    %v811 = vmul.f32 1.0, %v810
    %v812 = vrcp.pop %v733
    %v813 = vmul.f32 1.0, %v812
    %v814 = vrcp.pop %v734
    %v815 = vmul.f32 1.0, %v814
    %v816 = vrcp.pop %v735
    %v817 = vmul.f32 1.0, %v816
    %v818 = vrcp.pop %v736
    %v819 = vmul.f32 1.0, %v818
    %v820 = vrcp.pop %v737
    %v821 = vmul.f32 1.0, %v820
    %v822 = vrcp.pop %v738
    %v823 = vmul.f32 1.0, %v822
    %v824 = vrcp.pop %v739
    %v825 = vmul.f32 1.0, %v824
    %v826 = vrcp.pop %v740
    %v827 = vmul.f32 1.0, %v826
    %v828 = vrcp.pop %v741
    %v829 = vmul.f32 1.0, %v828
    %v830 = vrcp.pop %v742
    %v831 = vmul.f32 1.0, %v830
    %v832 = vrcp.pop %v743
    %v833 = vmul.f32 1.0, %v832
    %v834 = vrcp.pop %v744
    %v835 = vmul.f32 1.0, %v834
    %v836 = vrcp.pop %v745
    %v837 = vmul.f32 1.0, %v836
    %v838 = vrcp.pop %v746
    %v839 = vmul.f32 1.0, %v838
    %v840 = vrcp.pop %v747
    %v841 = vmul.f32 1.0, %v840
    %v842 = vrcp.pop %v748
    %v843 = vmul.f32 1.0, %v842
    %v844 = vrcp.pop %v749
    %v845 = vmul.f32 1.0, %v844
    %v846 = vrcp.pop %v750
    %v847 = vmul.f32 1.0, %v846
    %v848 = vrcp.pop %v751
    %v849 = vmul.f32 1.0, %v848
    %v850 = vrcp.pop %v752
    %v851 = vmul.f32 1.0, %v850
    %v852 = vrcp.pop %v753
    %v853 = vmul.f32 1.0, %v852
    %v854 = vrcp.pop %v754
    %v855 = vmul.f32 1.0, %v854
    %v856 = vrcp.pop %v755
    %v857 = vmul.f32 1.0, %v856
    %v858 = vrcp.pop %v756
    %v859 = vmul.f32 1.0, %v858
    %v860 = vrcp.pop %v757
    %v861 = vmul.f32 1.0, %v860
    %v862 = vrcp.pop %v758
    %v863 = vmul.f32 1.0, %v862
    %v864 = vrcp.pop %v759
    %v865 = vmul.f32 1.0, %v864
    %v866 = vrcp.pop %v760
    %v867 = vmul.f32 1.0, %v866
    %v868 = vrcp.pop %v761
    %v869 = vmul.f32 1.0, %v868
    %v870 = vrcp.pop %v762
    %v871 = vmul.f32 1.0, %v870
    %v872 = vrcp.pop %v763
    %v873 = vmul.f32 1.0, %v872
    %v874 = vrcp.pop %v764
    %v875 = vmul.f32 1.0, %v874
    %v876 = vrcp.pop %v765
    %v877 = vmul.f32 1.0, %v876
    %v878 = vrcp.pop %v766
    %v879 = vmul.f32 1.0, %v878
    %v880 = vrcp.pop %v767
    %v881 = vmul.f32 1.0, %v880
    %v882 = vrcp.pop %v768
    %v883 = vmul.f32 1.0, %v882
    %v884 = vrcp.pop %v769
    %v885 = vmul.f32 1.0, %v884
    %v886 = vrcp.pop %v770
    %v887 = vmul.f32 1.0, %v886
    %v888 = vrcp.pop %v771
    %v889 = vmul.f32 1.0, %v888
    %v890 = vrcp.pop %v772
    %v891 = vmul.f32 1.0, %v890
    %v892 = vrcp.pop %v773
    %v893 = vmul.f32 1.0, %v892
    %v894 = vrcp.pop %v774
    %v895 = vmul.f32 1.0, %v894
    %v896 = vrcp.pop %v775
    %v897 = vmul.f32 1.0, %v896
    %v898 = vrcp.pop %v776
    %v899 = vmul.f32 1.0, %v898
    %v900 = vrcp.pop %v777
    %v901 = vmul.f32 1.0, %v900
    %v902 = vrcp.pop %v778
    %v903 = vmul.f32 1.0, %v902
    %v904 = vrcp.pop %v779
    %v905 = vmul.f32 1.0, %v904
    %v906 = vrcp.pop %v780
    %v907 = vmul.f32 1.0, %v906
    %v908 = vrcp.pop %v781
    %v909 = vmul.f32 1.0, %v908
    %910 = vst [vmem:[#allocation2] sm:$0xff] %v783
    %911 = vst [vmem:[#allocation2 + $0x8] sm:$0xff] %v785
    %912 = vst [vmem:[#allocation2 + $0x10] sm:$0xff] %v787
    %913 = vst [vmem:[#allocation2 + $0x18] sm:$0xff] %v789
    %914 = vst [vmem:[#allocation2 + $0x20] sm:$0xff] %v791
    %915 = vst [vmem:[#allocation2 + $0x28] sm:$0xff] %v793
    %916 = vst [vmem:[#allocation2 + $0x30] sm:$0xff] %v795
    %917 = vst [vmem:[#allocation2 + $0x38] sm:$0xff] %v797
    %918 = vst [vmem:[#allocation2 + $0x40] sm:$0xff] %v799
    %919 = vst [vmem:[#allocation2 + $0x48] sm:$0xff] %v801
    %920 = vst [vmem:[#allocation2 + $0x50] sm:$0xff] %v803
    %921 = vst [vmem:[#allocation2 + $0x58] sm:$0xff] %v805
    %922 = vst [vmem:[#allocation2 + $0x60] sm:$0xff] %v807
    %923 = vst [vmem:[#allocation2 + $0x68] sm:$0xff] %v809
    %924 = vst [vmem:[#allocation2 + $0x70] sm:$0xff] %v811
    %925 = vst [vmem:[#allocation2 + $0x78] sm:$0xff] %v813
    %926 = vst [vmem:[#allocation2 + $0x80] sm:$0xff] %v815
    %927 = vst [vmem:[#allocation2 + $0x88] sm:$0xff] %v817
    %928 = vst [vmem:[#allocation2 + $0x90] sm:$0xff] %v819
    %929 = vst [vmem:[#allocation2 + $0x98] sm:$0xff] %v821
    %930 = vst [vmem:[#allocation2 + $0xa0] sm:$0xff] %v823
    %931 = vst [vmem:[#allocation2 + $0xa8] sm:$0xff] %v825
    %932 = vst [vmem:[#allocation2 + $0xb0] sm:$0xff] %v827
    %933 = vst [vmem:[#allocation2 + $0xb8] sm:$0xff] %v829
    %934 = vst [vmem:[#allocation2 + $0xc0] sm:$0xff] %v831
    %935 = vst [vmem:[#allocation2 + $0xc8] sm:$0xff] %v833
    %936 = vst [vmem:[#allocation2 + $0xd0] sm:$0xff] %v835
    %937 = vst [vmem:[#allocation2 + $0xd8] sm:$0xff] %v837
    %938 = vst [vmem:[#allocation2 + $0xe0] sm:$0xff] %v839
    %939 = vst [vmem:[#allocation2 + $0xe8] sm:$0xff] %v841
    %940 = vst [vmem:[#allocation2 + $0xf0] sm:$0xff] %v843
    %941 = vst [vmem:[#allocation2 + $0xf8] sm:$0xff] %v845
    %942 = vst [vmem:[#allocation2 + $0x100] sm:$0xff] %v847
    %943 = vst [vmem:[#allocation2 + $0x108] sm:$0xff] %v849
    %944 = vst [vmem:[#allocation2 + $0x110] sm:$0xff] %v851
    %945 = vst [vmem:[#allocation2 + $0x118] sm:$0xff] %v853
    %946 = vst [vmem:[#allocation2 + $0x120] sm:$0xff] %v855
    %947 = vst [vmem:[#allocation2 + $0x128] sm:$0xff] %v857
    %948 = vst [vmem:[#allocation2 + $0x130] sm:$0xff] %v859
    %949 = vst [vmem:[#allocation2 + $0x138] sm:$0xff] %v861
    %950 = vst [vmem:[#allocation2 + $0x140] sm:$0xff] %v863
    %951 = vst [vmem:[#allocation2 + $0x148] sm:$0xff] %v865
    %952 = vst [vmem:[#allocation2 + $0x150] sm:$0xff] %v867
    %953 = vst [vmem:[#allocation2 + $0x158] sm:$0xff] %v869
    %954 = vst [vmem:[#allocation2 + $0x160] sm:$0xff] %v871
    %955 = vst [vmem:[#allocation2 + $0x168] sm:$0xff] %v873
    %956 = vst [vmem:[#allocation2 + $0x170] sm:$0xff] %v875
    %957 = vst [vmem:[#allocation2 + $0x178] sm:$0xff] %v877
    %958 = vst [vmem:[#allocation2 + $0x180] sm:$0xff] %v879
    %959 = vst [vmem:[#allocation2 + $0x188] sm:$0xff] %v881
    %960 = vst [vmem:[#allocation2 + $0x190] sm:$0xff] %v883
    %961 = vst [vmem:[#allocation2 + $0x198] sm:$0xff] %v885
    %962 = vst [vmem:[#allocation2 + $0x1a0] sm:$0xff] %v887
    %963 = vst [vmem:[#allocation2 + $0x1a8] sm:$0xff] %v889
    %964 = vst [vmem:[#allocation2 + $0x1b0] sm:$0xff] %v891
    %965 = vst [vmem:[#allocation2 + $0x1b8] sm:$0xff] %v893
    %966 = vst [vmem:[#allocation2 + $0x1c0] sm:$0xff] %v895
    %967 = vst [vmem:[#allocation2 + $0x1c8] sm:$0xff] %v897
    %968 = vst [vmem:[#allocation2 + $0x1d0] sm:$0xff] %v899
    %969 = vst [vmem:[#allocation2 + $0x1d8] sm:$0xff] %v901
    %970 = vst [vmem:[#allocation2 + $0x1e0] sm:$0xff] %v903
    %971 = vst [vmem:[#allocation2 + $0x1e8] sm:$0xff] %v905
    %972 = vst [vmem:[#allocation2 + $0x1f0] sm:$0xff] %v907
    %973 = vst [vmem:[#allocation2 + $0x1f8] sm:$0xff] %v909
    // Predicated region
    $region10: #{gcn_merge_forward.9} parent=1 // pred_check
      _
    $region11: #{gcn_merge_forward.9} parent=1 // pred_check_branch
      %975 = sbr.rel (0) target = $region13
    $region12: #{gcn_merge_forward.9} parent=1 // pred_region
      %s977 = ssub.s32 8192, 8192
      %978 = vsyncadd [#allocation3], %s977
      %s979 = sshll.u32 [#allocation2], 4
      %s980 = int_to_ptr.vmem [resolvable:$true] %s979
      %985 = dma.vmem_to_hbm [thread:$0]  %s980, 8192, %s2, [#allocation3], 256, 256, 16
    $region13: #{gcn_merge_forward.9} parent=1 // pred_fallthru
      _
    // Predicated region
    $region14: #{gcn_merge_forward.9} parent=1 // pred_check
      _
    $region15: #{gcn_merge_forward.9} parent=1 // pred_check_branch
      %987 = sbr.rel (0) target = $region17
    $region16: #{gcn_merge_forward.9} parent=1 // pred_region
      %988 = dma.done [#allocation3], 8192
    $region17: #{gcn_merge_forward.9} parent=1 // pred_fallthru
      _
    %989 = vsyncpa [#allocation3], 1

// kernel: gcn_merge_forward.8
$region0: #{gcn_merge_forward.8}
  #allocation0 [shape = 'u32[]', space=smem, size = 0x4, offset = 0x4, fixed_abs, tag = 'smem constant byte address 0x4 - core index']
  #allocation1 [shape = 'u32[144,128]{1,0:T(1,128)}', space=vmem, size = 0x12000, scoped, tag = 'internal scratch']
  %s0 = inlined_call_operand.vmem [shape: bf16[256,256], index: 0, kind: input, shape index: {}]
  %s1 = inlined_call_operand.vmem [shape: bf16[256,28], index: 1, kind: input, shape index: {}]
  %s2 = inlined_call_operand.vmem [shape: f32[2,256], index: 2, kind: input, shape index: {}]
  %s3 = inlined_call_operand.vmem [shape: f32[1,128], index: 3, kind: input, shape index: {}]
  %s4 = inlined_call_operand.vmem [shape: f32[256,128], index: 4, kind: output, shape index: {}]
  %s5 = sld [smem:[#allocation0]]
  $region49: #{gcn_merge_forward.8} parent=0
    _
  %s7 = ssub.s32 1, %s5
  %s8 = scalar_select 0, %s7, %s5
  loop: start=0, step=1, limit=4
  $region2: #{gcn_merge_forward.8} parent=0 // loop_pre_header
    _
  $region3: #{gcn_merge_forward.8} parent=0 // loop_header
    %s10 = sphi 0, %s14
    %p11 = scmp.ge.s32.totalorder %s10, 4
    %s20 = sphi 0, %s22
    %s23 = sphi 0, %s20
    %s24 = sphi 0, %s23
    %s40 = sphi 0, %s24
    %s44 = sphi 0, %s44
    %s46 = sphi 0, %s44
    %s47 = sphi 0, %s46
    %s61 = sphi 0, %s47
    %s65 = sphi 0, %s65
    %s67 = sphi 0, %s65
    %s68 = sphi 0, %s67
    %s82 = sphi 0, %s68
    %s86 = sphi 0, %s86
    %s88 = sphi 0, %s86
    %s89 = sphi 0, %s88
    %s103 = sphi 0, %s89
    %s109 = sphi 0, %s111
    %s112 = sphi 0, %s109
    %s113 = sphi 0, %s112
    %s129 = sphi 0, %s113
  $region4: #{gcn_merge_forward.8} parent=0 // loop_header_branch
    %13 = sbr.rel (%p11) target = $region8
  $region5: #{gcn_merge_forward.8} parent=0 // loop_body
    %s15 = ssub.s32 %s10, 1
    %s16 = ssub.s32 %s10, 2
    %s17 = sadd.s32 %s10, 1
    %s18 = ssub.s32 %s10, %s17
    %p19 = scmp.eq.s32.totalorder %s18, 0
    %s21 = sadd.s32 %s20, 1
    %s22 = scalar_select %p19, %s20, %s21
    %p25 = pneg %p19
    %p26 = scmp.eq.s32.totalorder %s10, 1
    %p27 = por %p25, %p26
    %p28 = scmp.ne.s32.totalorder %s20, %s23
    %p29 = scmp.eq.s32.totalorder %s10, 0
    %p30 = por %p28, %p29
    %p31 = scmp.ne.s32.totalorder %s20, %s23
    %p32 = scmp.eq.s32.totalorder %s15, 1
    %p33 = por %p31, %p32
    %p34 = scmp.ne.s32.totalorder %s23, %s24
    %p35 = scmp.eq.s32.totalorder %s15, 0
    %p36 = por %p34, %p35
    %p37 = scmp.ne.s32.totalorder %s23, %s24
    %p38 = scmp.eq.s32.totalorder %s16, 1
    %p39 = por %p37, %p38
    %p41 = scmp.ne.s32.totalorder %s24, %s40
    %p42 = scmp.eq.s32.totalorder %s16, 0
    %p43 = por %p41, %p42
    %s45 = sadd.s32 %s44, 1
    %p48 = scmp.eq.s32.totalorder %s10, 1
    %p49 = scmp.ne.s32.totalorder %s44, %s46
    %p50 = scmp.eq.s32.totalorder %s10, 0
    %p51 = por %p49, %p50
    %p52 = scmp.ne.s32.totalorder %s44, %s46
    %p53 = scmp.eq.s32.totalorder %s15, 1
    %p54 = por %p52, %p53
    %p55 = scmp.ne.s32.totalorder %s46, %s47
    %p56 = scmp.eq.s32.totalorder %s15, 0
    %p57 = por %p55, %p56
    %p58 = scmp.ne.s32.totalorder %s46, %s47
    %p59 = scmp.eq.s32.totalorder %s16, 1
    %p60 = por %p58, %p59
    %p62 = scmp.ne.s32.totalorder %s47, %s61
    %p63 = scmp.eq.s32.totalorder %s16, 0
    %p64 = por %p62, %p63
    %s66 = sadd.s32 %s65, 1
    %p69 = scmp.eq.s32.totalorder %s10, 1
    %p70 = scmp.ne.s32.totalorder %s65, %s67
    %p71 = scmp.eq.s32.totalorder %s10, 0
    %p72 = por %p70, %p71
    %p73 = scmp.ne.s32.totalorder %s65, %s67
    %p74 = scmp.eq.s32.totalorder %s15, 1
    %p75 = por %p73, %p74
    %p76 = scmp.ne.s32.totalorder %s67, %s68
    %p77 = scmp.eq.s32.totalorder %s15, 0
    %p78 = por %p76, %p77
    %p79 = scmp.ne.s32.totalorder %s67, %s68
    %p80 = scmp.eq.s32.totalorder %s16, 1
    %p81 = por %p79, %p80
    %p83 = scmp.ne.s32.totalorder %s68, %s82
    %p84 = scmp.eq.s32.totalorder %s16, 0
    %p85 = por %p83, %p84
    %s87 = sadd.s32 %s86, 1
    %p90 = scmp.eq.s32.totalorder %s10, 1
    %p91 = scmp.ne.s32.totalorder %s86, %s88
    %p92 = scmp.eq.s32.totalorder %s10, 0
    %p93 = por %p91, %p92
    %p94 = scmp.ne.s32.totalorder %s86, %s88
    %p95 = scmp.eq.s32.totalorder %s15, 1
    %p96 = por %p94, %p95
    %p97 = scmp.ne.s32.totalorder %s88, %s89
    %p98 = scmp.eq.s32.totalorder %s15, 0
    %p99 = por %p97, %p98
    %p100 = scmp.ne.s32.totalorder %s88, %s89
    %p101 = scmp.eq.s32.totalorder %s16, 1
    %p102 = por %p100, %p101
    %p104 = scmp.ne.s32.totalorder %s89, %s103
    %p105 = scmp.eq.s32.totalorder %s16, 0
    %p106 = por %p104, %p105
    %s107 = ssub.s32 %s10, %s17
    %p108 = scmp.eq.s32.totalorder %s107, 0
    %s110 = sadd.s32 %s109, 1
    %s111 = scalar_select %p108, %s109, %s110
    %p114 = pneg %p108
    %p115 = scmp.eq.s32.totalorder %s10, 1
    %p116 = por %p114, %p115
    %p117 = scmp.ne.s32.totalorder %s109, %s112
    %p118 = scmp.eq.s32.totalorder %s10, 0
    %p119 = por %p117, %p118
    %p120 = scmp.ne.s32.totalorder %s109, %s112
    %p121 = scmp.eq.s32.totalorder %s15, 1
    %p122 = por %p120, %p121
    %p123 = scmp.ne.s32.totalorder %s112, %s113
    %p124 = scmp.eq.s32.totalorder %s15, 0
    %p125 = por %p123, %p124
    %p126 = scmp.ne.s32.totalorder %s112, %s113
    %p127 = scmp.eq.s32.totalorder %s16, 1
    %p128 = por %p126, %p127
    %p130 = scmp.ne.s32.totalorder %s113, %s129
    %p131 = scmp.eq.s32.totalorder %s16, 0
    %p132 = por %p130, %p131
    %p133 = scmp.le.s32.totalorder 1, %s10
    %p134 = scmp.lt.s32.totalorder %s10, 3
    %p135 = pnand %p133, %p134
    %p136 = pneg %p135
    // Predicated region
    $region9: #{gcn_merge_forward.8} parent=5 // pred_check
      _
    $region10: #{gcn_merge_forward.8} parent=5 // pred_check_branch
      %138 = sbr.rel (%p135) target = $region12
    $region11: #{gcn_merge_forward.8} parent=5 // pred_region
      %s139 = ssub.s32 %s10, 1
      // Predicated region
      $region13: #{gcn_merge_forward.8} parent=11 // pred_check
        %p140 = pneg %p57
      $region14: #{gcn_merge_forward.8} parent=11 // pred_check_branch
        %142 = sbr.rel (%p140) target = $region16
      $region15: #{gcn_merge_forward.8} parent=11 // pred_region
        _
      $region16: #{gcn_merge_forward.8} parent=11 // pred_fallthru
        _
      // Predicated region
      $region17: #{gcn_merge_forward.8} parent=11 // pred_check
        %p143 = pneg %p78
      $region18: #{gcn_merge_forward.8} parent=11 // pred_check_branch
        %145 = sbr.rel (%p143) target = $region20
      $region19: #{gcn_merge_forward.8} parent=11 // pred_region
        _
      $region20: #{gcn_merge_forward.8} parent=11 // pred_fallthru
        _
      // Predicated region
      $region21: #{gcn_merge_forward.8} parent=11 // pred_check
        %p146 = pneg %p99
      $region22: #{gcn_merge_forward.8} parent=11 // pred_check_branch
        %148 = sbr.rel (%p146) target = $region24
      $region23: #{gcn_merge_forward.8} parent=11 // pred_region
        _
      $region24: #{gcn_merge_forward.8} parent=11 // pred_fallthru
        _
    $region12: #{gcn_merge_forward.8} parent=5 // pred_fallthru
      _
    %p149 = scmp.lt.s32.totalorder %s10, 2
    // Predicated region
    $region25: #{gcn_merge_forward.8} parent=5 // pred_check
      %p150 = pneg %p149
    $region26: #{gcn_merge_forward.8} parent=5 // pred_check_branch
      %152 = sbr.rel (%p150) target = $region28
    $region27: #{gcn_merge_forward.8} parent=5 // pred_region
      // Predicated region
      $region29: #{gcn_merge_forward.8} parent=27 // pred_check
        %p153 = pneg %p30
      $region30: #{gcn_merge_forward.8} parent=27 // pred_check_branch
        %155 = sbr.rel (%p153) target = $region32
      $region31: #{gcn_merge_forward.8} parent=27 // pred_region
        %s156 = smul.u32 16, %s10
        %p157 = scmp.lt.s32.totalorder %s156, 31
        %s158 = scalar_select %p157, %s156, 31
        %s159 = smul.addr %s158, 2
        %s160 = smul.addr %s159, 4
        %s161 = scalar_lea.vmem %s0, %s160
        %s162 = smul.u32 16, %s10
      $region32: #{gcn_merge_forward.8} parent=27 // pred_fallthru
        _
    $region28: #{gcn_merge_forward.8} parent=5 // pred_fallthru
      _
    %p163 = scmp.le.s32.totalorder 1, %s10
    %p164 = scmp.lt.s32.totalorder %s10, 3
    %p165 = pnand %p163, %p164
    %p166 = pneg %p165
    // Predicated region
    $region33: #{gcn_merge_forward.8} parent=5 // pred_check
      _
    $region34: #{gcn_merge_forward.8} parent=5 // pred_check_branch
      %168 = sbr.rel (%p165) target = $region36
    $region35: #{gcn_merge_forward.8} parent=5 // pred_region
      %s169 = ssub.s32 %s10, 1
      %s170 = smul.u32 16, %s15
      %p171 = scmp.lt.s32.totalorder %s170, 31
      %s172 = scalar_select %p171, %s170, 31
      %s173 = smul.addr %s172, 2
      %s174 = smul.addr %s173, 4
      %s175 = scalar_lea.vmem %s0, %s174
      %p176 = pneg %p36
      %p177 = pneg %p33
      %p178 = pneg %p57
      %p179 = pneg %p54
      %p180 = pneg %p78
      %p181 = pneg %p75
      %p182 = pneg %p99
      %p183 = pneg %p96
      %p184 = pneg %p125
      %p185 = pneg %p122
      %s186 = smul.u32 16, %s15
      %p187 = scmp.lt.s32.totalorder %s186, 31
      %s188 = scalar_select %p187, %s186, 31
      %s189 = smul.addr %s188, 8
      %s190 = scalar_lea.vmem %s4, %s189
      %s191 = smul.u32 16, %s15
      %p192 = scmp.lt.s32.totalorder %s191, 31
      %s193 = scalar_select %p192, %s191, 31
      %s194 = smul.addr %s193, 2
      %s195 = smul.addr %s194, 4
      %s196 = scalar_lea.vmem %s0, %s195
      %s197 = smul.u32 16, %s15
      %s198 = smul.u32 16, %s15
      %p199 = scmp.lt.s32.totalorder %s198, 31
      %s200 = scalar_select %p199, %s198, 31
      %s201 = smul.addr %s200, 8
      %s202 = scalar_lea.vmem %s4, %s201
      %s203 = smul.u32 16, %s15
      %v207 = vld [vmem:[%s196] sm:$0xff]
      %v208 = vld [vmem:[%s196 + $0x8] sm:$0xff]
      %v209 = vld [vmem:[%s196 + $0x10] sm:$0xff]
      %v210 = vld [vmem:[%s196 + $0x18] sm:$0xff]
      %v211 = vld [vmem:[%s196 + $0x20] sm:$0xff]
      %v212 = vld [vmem:[%s196 + $0x28] sm:$0xff]
      %v213 = vld [vmem:[%s196 + $0x30] sm:$0xff]
      %v214 = vld [vmem:[%s196 + $0x38] sm:$0xff]
      %v215 = vld [vmem:[%s196 + $0x40] sm:$0xff]
      %v216 = vld [vmem:[%s196 + $0x48] sm:$0xff]
      %v217 = vld [vmem:[%s196 + $0x50] sm:$0xff]
      %v218 = vld [vmem:[%s196 + $0x58] sm:$0xff]
      %v219 = vld [vmem:[%s196 + $0x60] sm:$0xff]
      %v220 = vld [vmem:[%s196 + $0x68] sm:$0xff]
      %v221 = vld [vmem:[%s196 + $0x70] sm:$0xff]
      %v222 = vld [vmem:[%s196 + $0x78] sm:$0xff]
      %vm223 = vcmp.gt.bf16.partialorder %v207, 0
      %vm224 = vcmp.gt.bf16.partialorder %v208, 0
      %vm225 = vcmp.gt.bf16.partialorder %v209, 0
      %vm226 = vcmp.gt.bf16.partialorder %v210, 0
      %vm227 = vcmp.gt.bf16.partialorder %v211, 0
      %vm228 = vcmp.gt.bf16.partialorder %v212, 0
      %vm229 = vcmp.gt.bf16.partialorder %v213, 0
      %vm230 = vcmp.gt.bf16.partialorder %v214, 0
      %vm231 = vcmp.gt.bf16.partialorder %v215, 0
      %vm232 = vcmp.gt.bf16.partialorder %v216, 0
      %vm233 = vcmp.gt.bf16.partialorder %v217, 0
      %vm234 = vcmp.gt.bf16.partialorder %v218, 0
      %vm235 = vcmp.gt.bf16.partialorder %v219, 0
      %vm236 = vcmp.gt.bf16.partialorder %v220, 0
      %vm237 = vcmp.gt.bf16.partialorder %v221, 0
      %vm238 = vcmp.gt.bf16.partialorder %v222, 0
      %v239 = vld [vmem:[%s1] sm:$0xf]
      %v240 = vld [vmem:[%s1 + $0x4] sm:$0xf]
      %v241 = vld [vmem:[%s1 + $0x8] sm:$0xf]
      %v242 = vld [vmem:[%s1 + $0xc] sm:$0xf]
      %v243 = vld [vmem:[%s1 + $0x10] sm:$0xf]
      %v244 = vld [vmem:[%s1 + $0x14] sm:$0xf]
      %v245 = vld [vmem:[%s1 + $0x18] sm:$0xf]
      %v246 = vld [vmem:[%s1 + $0x1c] sm:$0xf]
      %v247 = vld [vmem:[%s1 + $0x20] sm:$0xf]
      %v248 = vld [vmem:[%s1 + $0x24] sm:$0xf]
      %v249 = vld [vmem:[%s1 + $0x28] sm:$0xf]
      %v250 = vld [vmem:[%s1 + $0x2c] sm:$0xf]
      %v251 = vld [vmem:[%s1 + $0x30] sm:$0xf]
      %v252 = vld [vmem:[%s1 + $0x34] sm:$0xf]
      %v253 = vld [vmem:[%s1 + $0x38] sm:$0xf]
      %v254 = vld [vmem:[%s1 + $0x3c] sm:$0xf]
      %v255 = vld [vmem:[%s1 + $0x40] sm:$0xf]
      %v256 = vld [vmem:[%s1 + $0x44] sm:$0xf]
      %v257 = vld [vmem:[%s1 + $0x48] sm:$0xf]
      %v258 = vld [vmem:[%s1 + $0x4c] sm:$0xf]
      %v259 = vld [vmem:[%s1 + $0x50] sm:$0xf]
      %v260 = vld [vmem:[%s1 + $0x54] sm:$0xf]
      %v261 = vld [vmem:[%s1 + $0x58] sm:$0xf]
      %v262 = vld [vmem:[%s1 + $0x5c] sm:$0xf]
      %v263 = vld [vmem:[%s1 + $0x60] sm:$0xf]
      %v264 = vld [vmem:[%s1 + $0x64] sm:$0xf]
      %v265 = vld [vmem:[%s1 + $0x68] sm:$0xf]
      %v266 = vld [vmem:[%s1 + $0x6c] sm:$0xf]
      %v267 = vld [vmem:[%s1 + $0x70] sm:$0xf]
      %v268 = vld [vmem:[%s1 + $0x74] sm:$0xf]
      %v269 = vld [vmem:[%s1 + $0x78] sm:$0xf]
      %v270 = vld [vmem:[%s1 + $0x7c] sm:$0xf]
      %s271 = smul.u32 %s15, 128
      %s272 = sshra.s32 %s271, 3
      %s273 = sand.u32 %s271, 7
      %s274 = smul.addr %s272, 4
      %s275 = scalar_lea.vmem %s1, %s274
      %v276 = vld [vmem:[%s275] sm:$0xf]
      %v277 = vld [vmem:[%s275 + $0x4] sm:$0xf]
      %v278 = vld [vmem:[%s275 + $0x8] sm:$0xf]
      %v279 = vld [vmem:[%s275 + $0xc] sm:$0xf]
      %v280 = vld [vmem:[%s275 + $0x10] sm:$0xf]
      %v281 = vld [vmem:[%s275 + $0x14] sm:$0xf]
      %v282 = vld [vmem:[%s275 + $0x18] sm:$0xf]
      %v283 = vld [vmem:[%s275 + $0x1c] sm:$0xf]
      %v284 = vld [vmem:[%s275 + $0x20] sm:$0xf]
      %v285 = vld [vmem:[%s275 + $0x24] sm:$0xf]
      %v286 = vld [vmem:[%s275 + $0x28] sm:$0xf]
      %v287 = vld [vmem:[%s275 + $0x2c] sm:$0xf]
      %v288 = vld [vmem:[%s275 + $0x30] sm:$0xf]
      %v289 = vld [vmem:[%s275 + $0x34] sm:$0xf]
      %v290 = vld [vmem:[%s275 + $0x38] sm:$0xf]
      %v291 = vld [vmem:[%s275 + $0x3c] sm:$0xf]
      %v308 = vunpack.c.l.b16 %v207
      %v309 = vunpack.c.h.b16 %v207
      %v310 = vunpack.c.l.b16 %v208
      %v311 = vunpack.c.h.b16 %v208
      %v312 = vunpack.c.l.b16 %v209
      %v313 = vunpack.c.h.b16 %v209
      %v314 = vunpack.c.l.b16 %v210
      %v315 = vunpack.c.h.b16 %v210
      %v316 = vunpack.c.l.b16 %v211
      %v317 = vunpack.c.h.b16 %v211
      %v318 = vunpack.c.l.b16 %v212
      %v319 = vunpack.c.h.b16 %v212
      %v320 = vunpack.c.l.b16 %v213
      %v321 = vunpack.c.h.b16 %v213
      %v322 = vunpack.c.l.b16 %v214
      %v323 = vunpack.c.h.b16 %v214
      %v324 = vunpack.c.l.b16 %v215
      %v325 = vunpack.c.h.b16 %v215
      %v326 = vunpack.c.l.b16 %v216
      %v327 = vunpack.c.h.b16 %v216
      %v328 = vunpack.c.l.b16 %v217
      %v329 = vunpack.c.h.b16 %v217
      %v330 = vunpack.c.l.b16 %v218
      %v331 = vunpack.c.h.b16 %v218
      %v332 = vunpack.c.l.b16 %v219
      %v333 = vunpack.c.h.b16 %v219
      %v334 = vunpack.c.l.b16 %v220
      %v335 = vunpack.c.h.b16 %v220
      %v336 = vunpack.c.l.b16 %v221
      %v337 = vunpack.c.h.b16 %v221
      %v338 = vunpack.c.l.b16 %v222
      %v339 = vunpack.c.h.b16 %v222
      %v340 = vpack.c.b16 %v310, %v308
      %v341 = vpack.c.b16 %v311, %v309
      %v342 = vpack.c.b16 %v314, %v312
      %v343 = vpack.c.b16 %v315, %v313
      %v344 = vpack.c.b16 %v318, %v316
      %v345 = vpack.c.b16 %v319, %v317
      %v346 = vpack.c.b16 %v322, %v320
      %v347 = vpack.c.b16 %v323, %v321
      %v348 = vpack.c.b16 %v326, %v324
      %v349 = vpack.c.b16 %v327, %v325
      %v350 = vpack.c.b16 %v330, %v328
      %v351 = vpack.c.b16 %v331, %v329
      %v352 = vpack.c.b16 %v334, %v332
      %v353 = vpack.c.b16 %v335, %v333
      %v354 = vpack.c.b16 %v338, %v336
      %v355 = vpack.c.b16 %v339, %v337
      %v404 = vunpack.c.l.b16 %v239
      %v405 = vunpack.c.l.b16 %v240
      %v406 = vunpack.c.l.b16 %v241
      %v407 = vunpack.c.l.b16 %v242
      %v408 = vunpack.c.l.b16 %v243
      %v409 = vunpack.c.l.b16 %v244
      %v410 = vunpack.c.l.b16 %v245
      %v411 = vunpack.c.l.b16 %v246
      %v412 = vunpack.c.l.b16 %v247
      %v413 = vunpack.c.l.b16 %v248
      %v414 = vunpack.c.l.b16 %v249
      %v415 = vunpack.c.l.b16 %v250
      %v416 = vunpack.c.l.b16 %v251
      %v417 = vunpack.c.l.b16 %v252
      %v418 = vunpack.c.l.b16 %v253
      %v419 = vunpack.c.l.b16 %v254
      %v420 = vunpack.c.l.b16 %v255
      %v421 = vunpack.c.l.b16 %v256
      %v422 = vunpack.c.l.b16 %v257
      %v423 = vunpack.c.l.b16 %v258
      %v424 = vunpack.c.l.b16 %v259
      %v425 = vunpack.c.l.b16 %v260
      %v426 = vunpack.c.l.b16 %v261
      %v427 = vunpack.c.l.b16 %v262
      %v428 = vunpack.c.l.b16 %v263
      %v429 = vunpack.c.l.b16 %v264
      %v430 = vunpack.c.l.b16 %v265
      %v431 = vunpack.c.l.b16 %v266
      %v432 = vunpack.c.l.b16 %v267
      %v433 = vunpack.c.l.b16 %v268
      %v434 = vunpack.c.l.b16 %v269
      %v435 = vunpack.c.l.b16 %v270
      %v436 = vpack.c.b16 %v405, %v404
      %v437 = vpack.c.b16 %v407, %v406
      %v438 = vpack.c.b16 %v409, %v408
      %v439 = vpack.c.b16 %v411, %v410
      %v440 = vpack.c.b16 %v413, %v412
      %v441 = vpack.c.b16 %v415, %v414
      %v442 = vpack.c.b16 %v417, %v416
      %v443 = vpack.c.b16 %v419, %v418
      %v444 = vpack.c.b16 %v421, %v420
      %v445 = vpack.c.b16 %v423, %v422
      %v446 = vpack.c.b16 %v425, %v424
      %v447 = vpack.c.b16 %v427, %v426
      %v448 = vpack.c.b16 %v429, %v428
      %v449 = vpack.c.b16 %v431, %v430
      %v450 = vpack.c.b16 %v433, %v432
      %v451 = vpack.c.b16 %v435, %v434
      %468 = vmatprep.subr.bf16.mxu0 0
      %469 = vmatpush1.bf16.msra.mxu0 %v436
      %470 = vmatprep.subr.bf16.mxu0 0
      %471 = vmatpush1.bf16.msra.mxu0 %v437
      %472 = vmatprep.subr.bf16.mxu0 0
      %473 = vmatpush1.bf16.msra.mxu0 %v438
      %474 = vmatprep.subr.bf16.mxu0 0
      %475 = vmatpush1.bf16.msra.mxu0 %v439
      %476 = vmatprep.subr.bf16.mxu0 0
      %477 = vmatpush1.bf16.msra.mxu0 %v440
      %478 = vmatprep.subr.bf16.mxu0 0
      %479 = vmatpush1.bf16.msra.mxu0 %v441
      %480 = vmatprep.subr.bf16.mxu0 0
      %481 = vmatpush1.bf16.msra.mxu0 %v442
      %482 = vmatprep.subr.bf16.mxu0 0
      %483 = vmatpush1.bf16.msra.mxu0 %v443
      %484 = vmatprep.subr.bf16.mxu0 0
      %485 = vmatpush1.bf16.msra.mxu0 %v444
      %486 = vmatprep.subr.bf16.mxu0 0
      %487 = vmatpush1.bf16.msra.mxu0 %v445
      %488 = vmatprep.subr.bf16.mxu0 0
      %489 = vmatpush1.bf16.msra.mxu0 %v446
      %490 = vmatprep.subr.bf16.mxu0 0
      %491 = vmatpush1.bf16.msra.mxu0 %v447
      %492 = vmatprep.subr.bf16.mxu0 0
      %493 = vmatpush1.bf16.msra.mxu0 %v448
      %494 = vmatprep.subr.bf16.mxu0 0
      %495 = vmatpush1.bf16.msra.mxu0 %v449
      %496 = vmatprep.subr.bf16.mxu0 0
      %497 = vmatpush1.bf16.msra.mxu0 %v450
      %498 = vmatprep.subr.bf16.mxu0 0
      %499 = vmatpush1.bf16.msra.mxu0 %v451
      %500 = vmatprep.mubr.bf16.mxu0 %v341
      %501 = vmatmul.mubr.bf16.gmra.mrb[0].mxu0 %v340
      %v502 = vpop.f32.mrb[0].mxu0
      %v503 = vadd.f32 0.0, %v502
      %v504 = vpop.f32.mrb[0].mxu0
      %v505 = vpop.f32.mrb[0].mxu0
      %v506 = vadd.f32 0.0, %v505
      %v507 = vpop.f32.mrb[0].mxu0
      %508 = vmatprep.mubr.bf16.mxu0 %v343
      %509 = vmatmul.mubr.bf16.gmra.mrb[0].mxu0 %v342
      %v510 = vpop.f32.mrb[0].mxu0
      %v511 = vadd.f32 0.0, %v510
      %v512 = vpop.f32.mrb[0].mxu0
      %v513 = vpop.f32.mrb[0].mxu0
      %v514 = vadd.f32 0.0, %v513
      %v515 = vpop.f32.mrb[0].mxu0
      %516 = vmatprep.mubr.bf16.mxu0 %v345
      %517 = vmatmul.mubr.bf16.gmra.mrb[0].mxu0 %v344
      %v518 = vpop.f32.mrb[0].mxu0
      %v519 = vadd.f32 0.0, %v518
      %v520 = vpop.f32.mrb[0].mxu0
      %v521 = vpop.f32.mrb[0].mxu0
      %v522 = vadd.f32 0.0, %v521
      %v523 = vpop.f32.mrb[0].mxu0
      %524 = vmatprep.mubr.bf16.mxu0 %v347
      %525 = vmatmul.mubr.bf16.gmra.mrb[0].mxu0 %v346
      %v526 = vpop.f32.mrb[0].mxu0
      %v527 = vadd.f32 0.0, %v526
      %v528 = vpop.f32.mrb[0].mxu0
      %v529 = vpop.f32.mrb[0].mxu0
      %v530 = vadd.f32 0.0, %v529
      %v531 = vpop.f32.mrb[0].mxu0
      %532 = vmatprep.mubr.bf16.mxu0 %v349
      %533 = vmatmul.mubr.bf16.gmra.mrb[0].mxu0 %v348
      %v534 = vpop.f32.mrb[0].mxu0
      %v535 = vadd.f32 0.0, %v534
      %v536 = vpop.f32.mrb[0].mxu0
      %v537 = vpop.f32.mrb[0].mxu0
      %v538 = vadd.f32 0.0, %v537
      %v539 = vpop.f32.mrb[0].mxu0
      %540 = vmatprep.mubr.bf16.mxu0 %v351
      %541 = vmatmul.mubr.bf16.gmra.mrb[0].mxu0 %v350
      %v542 = vpop.f32.mrb[0].mxu0
      %v543 = vadd.f32 0.0, %v542
      %v544 = vpop.f32.mrb[0].mxu0
      %v545 = vpop.f32.mrb[0].mxu0
      %v546 = vadd.f32 0.0, %v545
      %v547 = vpop.f32.mrb[0].mxu0
      %548 = vmatprep.mubr.bf16.mxu0 %v353
      %549 = vmatmul.mubr.bf16.gmra.mrb[0].mxu0 %v352
      %v550 = vpop.f32.mrb[0].mxu0
      %v551 = vadd.f32 0.0, %v550
      %v552 = vpop.f32.mrb[0].mxu0
      %v553 = vpop.f32.mrb[0].mxu0
      %v554 = vadd.f32 0.0, %v553
      %v555 = vpop.f32.mrb[0].mxu0
      %556 = vmatprep.mubr.bf16.mxu0 %v355
      %557 = vmatmul.mubr.bf16.gmra.mrb[0].mxu0 %v354
      %v558 = vpop.f32.mrb[0].mxu0
      %v559 = vadd.f32 0.0, %v558
      %v560 = vpop.f32.mrb[0].mxu0
      %v561 = vpop.f32.mrb[0].mxu0
      %v562 = vadd.f32 0.0, %v561
      %v563 = vpop.f32.mrb[0].mxu0
      %564 = vdwg.mxu0
      %v565 = vld [vmem:[%s2] ss:$2 sm:$0x3]
      %v566 = vunpack.c.l.bf16 %v276
      %v567 = vunpack.c.l.bf16 %v277
      %v568 = vunpack.c.l.bf16 %v278
      %v569 = vunpack.c.l.bf16 %v279
      %v570 = vunpack.c.l.bf16 %v280
      %v571 = vunpack.c.l.bf16 %v281
      %v572 = vunpack.c.l.bf16 %v282
      %v573 = vunpack.c.l.bf16 %v283
      %v574 = vunpack.c.l.bf16 %v284
      %v575 = vunpack.c.l.bf16 %v285
      %v576 = vunpack.c.l.bf16 %v286
      %v577 = vunpack.c.l.bf16 %v287
      %v578 = vunpack.c.l.bf16 %v288
      %v579 = vunpack.c.l.bf16 %v289
      %v580 = vunpack.c.l.bf16 %v290
      %v581 = vunpack.c.l.bf16 %v291
      %583 = vset.pattern.permute.xlu0 26
      %584 = vperm.xlu0 %583, %v566
      %v585 = vpop.permute.xlu0 %584
      %588 = vset.pattern.permute.xlu0 26
      %589 = vperm.xlu0 %588, %v567
      %v590 = vpop.permute.xlu0 %589
      %593 = vset.pattern.permute.xlu0 26
      %594 = vperm.xlu0 %593, %v568
      %v595 = vpop.permute.xlu0 %594
      %598 = vset.pattern.permute.xlu0 26
      %599 = vperm.xlu0 %598, %v569
      %v600 = vpop.permute.xlu0 %599
      %603 = vset.pattern.permute.xlu0 26
      %604 = vperm.xlu0 %603, %v570
      %v605 = vpop.permute.xlu0 %604
      %608 = vset.pattern.permute.xlu0 26
      %609 = vperm.xlu0 %608, %v571
      %v610 = vpop.permute.xlu0 %609
      %613 = vset.pattern.permute.xlu0 26
      %614 = vperm.xlu0 %613, %v572
      %v615 = vpop.permute.xlu0 %614
      %618 = vset.pattern.permute.xlu0 26
      %619 = vperm.xlu0 %618, %v573
      %v620 = vpop.permute.xlu0 %619
      %623 = vset.pattern.permute.xlu0 26
      %624 = vperm.xlu0 %623, %v574
      %v625 = vpop.permute.xlu0 %624
      %628 = vset.pattern.permute.xlu0 26
      %629 = vperm.xlu0 %628, %v575
      %v630 = vpop.permute.xlu0 %629
      %633 = vset.pattern.permute.xlu0 26
      %634 = vperm.xlu0 %633, %v576
      %v635 = vpop.permute.xlu0 %634
      %638 = vset.pattern.permute.xlu0 26
      %639 = vperm.xlu0 %638, %v577
      %v640 = vpop.permute.xlu0 %639
      %643 = vset.pattern.permute.xlu0 26
      %644 = vperm.xlu0 %643, %v578
      %v645 = vpop.permute.xlu0 %644
      %648 = vset.pattern.permute.xlu0 26
      %649 = vperm.xlu0 %648, %v579
      %v650 = vpop.permute.xlu0 %649
      %653 = vset.pattern.permute.xlu0 26
      %654 = vperm.xlu0 %653, %v580
      %v655 = vpop.permute.xlu0 %654
      %658 = vset.pattern.permute.xlu0 26
      %659 = vperm.xlu0 %658, %v581
      %v660 = vpop.permute.xlu0 %659
      %v663 = vlaneseq
      %v664 = vshrl.u32 %v663, 7
      %v665 = vsub.s32 0, %v664
      %v666 = vrot.slane %v565, %v665
      %v667 = vlaneseq
      %v668 = vshrl.u32 %v667, 7
      %v669 = vsub.s32 1, %v668
      %v670 = vrot.slane %v565, %v669
      %v673 = vadd.f32 %v585, %v666
      %v674 = vadd.f32 %v585, %v670
      %v675 = vadd.f32 %v590, %v666
      %v676 = vadd.f32 %v590, %v670
      %v677 = vadd.f32 %v595, %v666
      %v678 = vadd.f32 %v595, %v670
      %v679 = vadd.f32 %v600, %v666
      %v680 = vadd.f32 %v600, %v670
      %v681 = vadd.f32 %v605, %v666
      %v682 = vadd.f32 %v605, %v670
      %v683 = vadd.f32 %v610, %v666
      %v684 = vadd.f32 %v610, %v670
      %v685 = vadd.f32 %v615, %v666
      %v686 = vadd.f32 %v615, %v670
      %v687 = vadd.f32 %v620, %v666
      %v688 = vadd.f32 %v620, %v670
      %v689 = vadd.f32 %v625, %v666
      %v690 = vadd.f32 %v625, %v670
      %v691 = vadd.f32 %v630, %v666
      %v692 = vadd.f32 %v630, %v670
      %v693 = vadd.f32 %v635, %v666
      %v694 = vadd.f32 %v635, %v670
      %v695 = vadd.f32 %v640, %v666
      %v696 = vadd.f32 %v640, %v670
      %v697 = vadd.f32 %v645, %v666
      %v698 = vadd.f32 %v645, %v670
      %v699 = vadd.f32 %v650, %v666
      %v700 = vadd.f32 %v650, %v670
      %v701 = vadd.f32 %v655, %v666
      %v702 = vadd.f32 %v655, %v670
      %v703 = vadd.f32 %v660, %v666
      %v704 = vadd.f32 %v660, %v670
      %vm705 = vcmp.gt.f32.partialorder %v673, 0.0
      %vm706 = vcmp.gt.f32.partialorder %v674, 0.0
      %vm707 = vcmp.gt.f32.partialorder %v675, 0.0
      %vm708 = vcmp.gt.f32.partialorder %v676, 0.0
      %vm709 = vcmp.gt.f32.partialorder %v677, 0.0
      %vm710 = vcmp.gt.f32.partialorder %v678, 0.0
      %vm711 = vcmp.gt.f32.partialorder %v679, 0.0
      %vm712 = vcmp.gt.f32.partialorder %v680, 0.0
      %vm713 = vcmp.gt.f32.partialorder %v681, 0.0
      %vm714 = vcmp.gt.f32.partialorder %v682, 0.0
      %vm715 = vcmp.gt.f32.partialorder %v683, 0.0
      %vm716 = vcmp.gt.f32.partialorder %v684, 0.0
      %vm717 = vcmp.gt.f32.partialorder %v685, 0.0
      %vm718 = vcmp.gt.f32.partialorder %v686, 0.0
      %vm719 = vcmp.gt.f32.partialorder %v687, 0.0
      %vm720 = vcmp.gt.f32.partialorder %v688, 0.0
      %vm721 = vcmp.gt.f32.partialorder %v689, 0.0
      %vm722 = vcmp.gt.f32.partialorder %v690, 0.0
      %vm723 = vcmp.gt.f32.partialorder %v691, 0.0
      %vm724 = vcmp.gt.f32.partialorder %v692, 0.0
      %vm725 = vcmp.gt.f32.partialorder %v693, 0.0
      %vm726 = vcmp.gt.f32.partialorder %v694, 0.0
      %vm727 = vcmp.gt.f32.partialorder %v695, 0.0
      %vm728 = vcmp.gt.f32.partialorder %v696, 0.0
      %vm729 = vcmp.gt.f32.partialorder %v697, 0.0
      %vm730 = vcmp.gt.f32.partialorder %v698, 0.0
      %vm731 = vcmp.gt.f32.partialorder %v699, 0.0
      %vm732 = vcmp.gt.f32.partialorder %v700, 0.0
      %vm733 = vcmp.gt.f32.partialorder %v701, 0.0
      %vm734 = vcmp.gt.f32.partialorder %v702, 0.0
      %vm735 = vcmp.gt.f32.partialorder %v703, 0.0
      %vm736 = vcmp.gt.f32.partialorder %v704, 0.0
      %v737 = vmul.f32 %v673, 0.2
      %v738 = vmul.f32 %v674, 0.2
      %v739 = vmul.f32 %v675, 0.2
      %v740 = vmul.f32 %v676, 0.2
      %v741 = vmul.f32 %v677, 0.2
      %v742 = vmul.f32 %v678, 0.2
      %v743 = vmul.f32 %v679, 0.2
      %v744 = vmul.f32 %v680, 0.2
      %v745 = vmul.f32 %v681, 0.2
      %v746 = vmul.f32 %v682, 0.2
      %v747 = vmul.f32 %v683, 0.2
      %v748 = vmul.f32 %v684, 0.2
      %v749 = vmul.f32 %v685, 0.2
      %v750 = vmul.f32 %v686, 0.2
      %v751 = vmul.f32 %v687, 0.2
      %v752 = vmul.f32 %v688, 0.2
      %v753 = vmul.f32 %v689, 0.2
      %v754 = vmul.f32 %v690, 0.2
      %v755 = vmul.f32 %v691, 0.2
      %v756 = vmul.f32 %v692, 0.2
      %v757 = vmul.f32 %v693, 0.2
      %v758 = vmul.f32 %v694, 0.2
      %v759 = vmul.f32 %v695, 0.2
      %v760 = vmul.f32 %v696, 0.2
      %v761 = vmul.f32 %v697, 0.2
      %v762 = vmul.f32 %v698, 0.2
      %v763 = vmul.f32 %v699, 0.2
      %v764 = vmul.f32 %v700, 0.2
      %v765 = vmul.f32 %v701, 0.2
      %v766 = vmul.f32 %v702, 0.2
      %v767 = vmul.f32 %v703, 0.2
      %v768 = vmul.f32 %v704, 0.2
      %v769 = vsel %vm705, %v673, %v737
      %v770 = vsel %vm706, %v674, %v738
      %v771 = vsel %vm707, %v675, %v739
      %v772 = vsel %vm708, %v676, %v740
      %v773 = vsel %vm709, %v677, %v741
      %v774 = vsel %vm710, %v678, %v742
      %v775 = vsel %vm711, %v679, %v743
      %v776 = vsel %vm712, %v680, %v744
      %v777 = vsel %vm713, %v681, %v745
      %v778 = vsel %vm714, %v682, %v746
      %v779 = vsel %vm715, %v683, %v747
      %v780 = vsel %vm716, %v684, %v748
      %v781 = vsel %vm717, %v685, %v749
      %v782 = vsel %vm718, %v686, %v750
      %v783 = vsel %vm719, %v687, %v751
      %v784 = vsel %vm720, %v688, %v752
      %v785 = vsel %vm721, %v689, %v753
      %v786 = vsel %vm722, %v690, %v754
      %v787 = vsel %vm723, %v691, %v755
      %v788 = vsel %vm724, %v692, %v756
      %v789 = vsel %vm725, %v693, %v757
      %v790 = vsel %vm726, %v694, %v758
      %v791 = vsel %vm727, %v695, %v759
      %v792 = vsel %vm728, %v696, %v760
      %v793 = vsel %vm729, %v697, %v761
      %v794 = vsel %vm730, %v698, %v762
      %v795 = vsel %vm731, %v699, %v763
      %v796 = vsel %vm732, %v700, %v764
      %v797 = vsel %vm733, %v701, %v765
      %v798 = vsel %vm734, %v702, %v766
      %v799 = vsel %vm735, %v703, %v767
      %v800 = vsel %vm736, %v704, %v768
      %v801 = vsel %vm223, 65537, 0
      %v802 = vsel %vm224, 65537, 0
      %v803 = vsel %vm225, 65537, 0
      %v804 = vsel %vm226, 65537, 0
      %v805 = vsel %vm227, 65537, 0
      %v806 = vsel %vm228, 65537, 0
      %v807 = vsel %vm229, 65537, 0
      %v808 = vsel %vm230, 65537, 0
      %v809 = vsel %vm231, 65537, 0
      %v810 = vsel %vm232, 65537, 0
      %v811 = vsel %vm233, 65537, 0
      %v812 = vsel %vm234, 65537, 0
      %v813 = vsel %vm235, 65537, 0
      %v814 = vsel %vm236, 65537, 0
      %v815 = vsel %vm237, 65537, 0
      %v816 = vsel %vm238, 65537, 0
      %v817 = vunpack.c.l.b16 %v801
      %v818 = vunpack.c.h.b16 %v801
      %v819 = vunpack.c.l.b16 %v802
      %v820 = vunpack.c.h.b16 %v802
      %v821 = vunpack.c.l.b16 %v803
      %v822 = vunpack.c.h.b16 %v803
      %v823 = vunpack.c.l.b16 %v804
      %v824 = vunpack.c.h.b16 %v804
      %v825 = vunpack.c.l.b16 %v805
      %v826 = vunpack.c.h.b16 %v805
      %v827 = vunpack.c.l.b16 %v806
      %v828 = vunpack.c.h.b16 %v806
      %v829 = vunpack.c.l.b16 %v807
      %v830 = vunpack.c.h.b16 %v807
      %v831 = vunpack.c.l.b16 %v808
      %v832 = vunpack.c.h.b16 %v808
      %v833 = vunpack.c.l.b16 %v809
      %v834 = vunpack.c.h.b16 %v809
      %v835 = vunpack.c.l.b16 %v810
      %v836 = vunpack.c.h.b16 %v810
      %v837 = vunpack.c.l.b16 %v811
      %v838 = vunpack.c.h.b16 %v811
      %v839 = vunpack.c.l.b16 %v812
      %v840 = vunpack.c.h.b16 %v812
      %v841 = vunpack.c.l.b16 %v813
      %v842 = vunpack.c.h.b16 %v813
      %v843 = vunpack.c.l.b16 %v814
      %v844 = vunpack.c.h.b16 %v814
      %v845 = vunpack.c.l.b16 %v815
      %v846 = vunpack.c.h.b16 %v815
      %v847 = vunpack.c.l.b16 %v816
      %v848 = vunpack.c.h.b16 %v816
      %vm849 = vcmp.ne.s32.totalorder %v817, 0
      %vm850 = vcmp.ne.s32.totalorder %v818, 0
      %vm851 = vcmp.ne.s32.totalorder %v819, 0
      %vm852 = vcmp.ne.s32.totalorder %v820, 0
      %vm853 = vcmp.ne.s32.totalorder %v821, 0
      %vm854 = vcmp.ne.s32.totalorder %v822, 0
      %vm855 = vcmp.ne.s32.totalorder %v823, 0
      %vm856 = vcmp.ne.s32.totalorder %v824, 0
      %vm857 = vcmp.ne.s32.totalorder %v825, 0
      %vm858 = vcmp.ne.s32.totalorder %v826, 0
      %vm859 = vcmp.ne.s32.totalorder %v827, 0
      %vm860 = vcmp.ne.s32.totalorder %v828, 0
      %vm861 = vcmp.ne.s32.totalorder %v829, 0
      %vm862 = vcmp.ne.s32.totalorder %v830, 0
      %vm863 = vcmp.ne.s32.totalorder %v831, 0
      %vm864 = vcmp.ne.s32.totalorder %v832, 0
      %vm865 = vcmp.ne.s32.totalorder %v833, 0
      %vm866 = vcmp.ne.s32.totalorder %v834, 0
      %vm867 = vcmp.ne.s32.totalorder %v835, 0
      %vm868 = vcmp.ne.s32.totalorder %v836, 0
      %vm869 = vcmp.ne.s32.totalorder %v837, 0
      %vm870 = vcmp.ne.s32.totalorder %v838, 0
      %vm871 = vcmp.ne.s32.totalorder %v839, 0
      %vm872 = vcmp.ne.s32.totalorder %v840, 0
      %vm873 = vcmp.ne.s32.totalorder %v841, 0
      %vm874 = vcmp.ne.s32.totalorder %v842, 0
      %vm875 = vcmp.ne.s32.totalorder %v843, 0
      %vm876 = vcmp.ne.s32.totalorder %v844, 0
      %vm877 = vcmp.ne.s32.totalorder %v845, 0
      %vm878 = vcmp.ne.s32.totalorder %v846, 0
      %vm879 = vcmp.ne.s32.totalorder %v847, 0
      %vm880 = vcmp.ne.s32.totalorder %v848, 0
      %v881 = vsel %vm849, %v769, -1e+30
      %v882 = vsel %vm850, %v770, -1e+30
      %v883 = vsel %vm851, %v771, -1e+30
      %v884 = vsel %vm852, %v772, -1e+30
      %v885 = vsel %vm853, %v773, -1e+30
      %v886 = vsel %vm854, %v774, -1e+30
      %v887 = vsel %vm855, %v775, -1e+30
      %v888 = vsel %vm856, %v776, -1e+30
      %v889 = vsel %vm857, %v777, -1e+30
      %v890 = vsel %vm858, %v778, -1e+30
      %v891 = vsel %vm859, %v779, -1e+30
      %v892 = vsel %vm860, %v780, -1e+30
      %v893 = vsel %vm861, %v781, -1e+30
      %v894 = vsel %vm862, %v782, -1e+30
      %v895 = vsel %vm863, %v783, -1e+30
      %v896 = vsel %vm864, %v784, -1e+30
      %v897 = vsel %vm865, %v785, -1e+30
      %v898 = vsel %vm866, %v786, -1e+30
      %v899 = vsel %vm867, %v787, -1e+30
      %v900 = vsel %vm868, %v788, -1e+30
      %v901 = vsel %vm869, %v789, -1e+30
      %v902 = vsel %vm870, %v790, -1e+30
      %v903 = vsel %vm871, %v791, -1e+30
      %v904 = vsel %vm872, %v792, -1e+30
      %v905 = vsel %vm873, %v793, -1e+30
      %v906 = vsel %vm874, %v794, -1e+30
      %v907 = vsel %vm875, %v795, -1e+30
      %v908 = vsel %vm876, %v796, -1e+30
      %v909 = vsel %vm877, %v797, -1e+30
      %v910 = vsel %vm878, %v798, -1e+30
      %v911 = vsel %vm879, %v799, -1e+30
      %v912 = vsel %vm880, %v800, -1e+30
      %v913 = vmax.f32 %v881, %v882
      %914 = vmax.xlane.f32.xlu0 %v913
      %v915 = vpop.xlane.xlu0 %914
      %v916 = vmax.f32 %v883, %v884
      %917 = vmax.xlane.f32.xlu0 %v916
      %v918 = vpop.xlane.xlu0 %917
      %v919 = vmax.f32 %v885, %v886
      %920 = vmax.xlane.f32.xlu0 %v919
      %v921 = vpop.xlane.xlu0 %920
      %v922 = vmax.f32 %v887, %v888
      %923 = vmax.xlane.f32.xlu0 %v922
      %v924 = vpop.xlane.xlu0 %923
      %v925 = vmax.f32 %v889, %v890
      %926 = vmax.xlane.f32.xlu0 %v925
      %v927 = vpop.xlane.xlu0 %926
      %v928 = vmax.f32 %v891, %v892
      %929 = vmax.xlane.f32.xlu0 %v928
      %v930 = vpop.xlane.xlu0 %929
      %v931 = vmax.f32 %v893, %v894
      %932 = vmax.xlane.f32.xlu0 %v931
      %v933 = vpop.xlane.xlu0 %932
      %v934 = vmax.f32 %v895, %v896
      %935 = vmax.xlane.f32.xlu0 %v934
      %v936 = vpop.xlane.xlu0 %935
      %v937 = vmax.f32 %v897, %v898
      %938 = vmax.xlane.f32.xlu0 %v937
      %v939 = vpop.xlane.xlu0 %938
      %v940 = vmax.f32 %v899, %v900
      %941 = vmax.xlane.f32.xlu0 %v940
      %v942 = vpop.xlane.xlu0 %941
      %v943 = vmax.f32 %v901, %v902
      %944 = vmax.xlane.f32.xlu0 %v943
      %v945 = vpop.xlane.xlu0 %944
      %v946 = vmax.f32 %v903, %v904
      %947 = vmax.xlane.f32.xlu0 %v946
      %v948 = vpop.xlane.xlu0 %947
      %v949 = vmax.f32 %v905, %v906
      %950 = vmax.xlane.f32.xlu0 %v949
      %v951 = vpop.xlane.xlu0 %950
      %v952 = vmax.f32 %v907, %v908
      %953 = vmax.xlane.f32.xlu0 %v952
      %v954 = vpop.xlane.xlu0 %953
      %v955 = vmax.f32 %v909, %v910
      %956 = vmax.xlane.f32.xlu0 %v955
      %v957 = vpop.xlane.xlu0 %956
      %v958 = vmax.f32 %v911, %v912
      %959 = vmax.xlane.f32.xlu0 %v958
      %v960 = vpop.xlane.xlu0 %959
      %v961 = vsub.f32 %v881, %v915
      %v962 = vsub.f32 %v882, %v915
      %v963 = vsub.f32 %v883, %v918
      %v964 = vsub.f32 %v884, %v918
      %v965 = vsub.f32 %v885, %v921
      %v966 = vsub.f32 %v886, %v921
      %v967 = vsub.f32 %v887, %v924
      %v968 = vsub.f32 %v888, %v924
      %v969 = vsub.f32 %v889, %v927
      %v970 = vsub.f32 %v890, %v927
      %v971 = vsub.f32 %v891, %v930
      %v972 = vsub.f32 %v892, %v930
      %v973 = vsub.f32 %v893, %v933
      %v974 = vsub.f32 %v894, %v933
      %v975 = vsub.f32 %v895, %v936
      %v976 = vsub.f32 %v896, %v936
      %v977 = vsub.f32 %v897, %v939
      %v978 = vsub.f32 %v898, %v939
      %v979 = vsub.f32 %v899, %v942
      %v980 = vsub.f32 %v900, %v942
      %v981 = vsub.f32 %v901, %v945
      %v982 = vsub.f32 %v902, %v945
      %v983 = vsub.f32 %v903, %v948
      %v984 = vsub.f32 %v904, %v948
      %v985 = vsub.f32 %v905, %v951
      %v986 = vsub.f32 %v906, %v951
      %v987 = vsub.f32 %v907, %v954
      %v988 = vsub.f32 %v908, %v954
      %v989 = vsub.f32 %v909, %v957
      %v990 = vsub.f32 %v910, %v957
      %v991 = vsub.f32 %v911, %v960
      %v992 = vsub.f32 %v912, %v960
      %v993 = vmul.f32 %v961, 1.442695
      %v994 = vpow.pop %v993
      %v995 = vmul.f32 %v962, 1.442695
      %v996 = vpow.pop %v995
      %v997 = vmul.f32 %v963, 1.442695
      %v998 = vpow.pop %v997
      %v999 = vmul.f32 %v964, 1.442695
      %v1000 = vpow.pop %v999
      %v1001 = vmul.f32 %v965, 1.442695
      %v1002 = vpow.pop %v1001
      %v1003 = vmul.f32 %v966, 1.442695
      %v1004 = vpow.pop %v1003
      %v1005 = vmul.f32 %v967, 1.442695
      %v1006 = vpow.pop %v1005
      %v1007 = vmul.f32 %v968, 1.442695
      %v1008 = vpow.pop %v1007
      %v1009 = vmul.f32 %v969, 1.442695
      %v1010 = vpow.pop %v1009
      %v1011 = vmul.f32 %v970, 1.442695
      %v1012 = vpow.pop %v1011
      %v1013 = vmul.f32 %v971, 1.442695
      %v1014 = vpow.pop %v1013
      %v1015 = vmul.f32 %v972, 1.442695
      %v1016 = vpow.pop %v1015
      %v1017 = vmul.f32 %v973, 1.442695
      %v1018 = vpow.pop %v1017
      %v1019 = vmul.f32 %v974, 1.442695
      %v1020 = vpow.pop %v1019
      %v1021 = vmul.f32 %v975, 1.442695
      %v1022 = vpow.pop %v1021
      %v1023 = vmul.f32 %v976, 1.442695
      %v1024 = vpow.pop %v1023
      %v1025 = vmul.f32 %v977, 1.442695
      %v1026 = vpow.pop %v1025
      %v1027 = vmul.f32 %v978, 1.442695
      %v1028 = vpow.pop %v1027
      %v1029 = vmul.f32 %v979, 1.442695
      %v1030 = vpow.pop %v1029
      %v1031 = vmul.f32 %v980, 1.442695
      %v1032 = vpow.pop %v1031
      %v1033 = vmul.f32 %v981, 1.442695
      %v1034 = vpow.pop %v1033
      %v1035 = vmul.f32 %v982, 1.442695
      %v1036 = vpow.pop %v1035
      %v1037 = vmul.f32 %v983, 1.442695
      %v1038 = vpow.pop %v1037
      %v1039 = vmul.f32 %v984, 1.442695
      %v1040 = vpow.pop %v1039
      %v1041 = vmul.f32 %v985, 1.442695
      %v1042 = vpow.pop %v1041
      %v1043 = vmul.f32 %v986, 1.442695
      %v1044 = vpow.pop %v1043
      %v1045 = vmul.f32 %v987, 1.442695
      %v1046 = vpow.pop %v1045
      %v1047 = vmul.f32 %v988, 1.442695
      %v1048 = vpow.pop %v1047
      %v1049 = vmul.f32 %v989, 1.442695
      %v1050 = vpow.pop %v1049
      %v1051 = vmul.f32 %v990, 1.442695
      %v1052 = vpow.pop %v1051
      %v1053 = vmul.f32 %v991, 1.442695
      %v1054 = vpow.pop %v1053
      %v1055 = vmul.f32 %v992, 1.442695
      %v1056 = vpow.pop %v1055
      %v1057 = vadd.f32 %v994, %v996
      %1058 = vadd.xlane.f32.xlu0 %v1057
      %v1059 = vpop.xlane.xlu0 %1058
      %v1060 = vadd.f32 %v998, %v1000
      %1061 = vadd.xlane.f32.xlu0 %v1060
      %v1062 = vpop.xlane.xlu0 %1061
      %v1063 = vadd.f32 %v1002, %v1004
      %1064 = vadd.xlane.f32.xlu0 %v1063
      %v1065 = vpop.xlane.xlu0 %1064
      %v1066 = vadd.f32 %v1006, %v1008
      %1067 = vadd.xlane.f32.xlu0 %v1066
      %v1068 = vpop.xlane.xlu0 %1067
      %v1069 = vadd.f32 %v1010, %v1012
      %1070 = vadd.xlane.f32.xlu0 %v1069
      %v1071 = vpop.xlane.xlu0 %1070
      %v1072 = vadd.f32 %v1014, %v1016
      %1073 = vadd.xlane.f32.xlu0 %v1072
      %v1074 = vpop.xlane.xlu0 %1073
      %v1075 = vadd.f32 %v1018, %v1020
      %1076 = vadd.xlane.f32.xlu0 %v1075
      %v1077 = vpop.xlane.xlu0 %1076
      %v1078 = vadd.f32 %v1022, %v1024
      %1079 = vadd.xlane.f32.xlu0 %v1078
      %v1080 = vpop.xlane.xlu0 %1079
      %v1081 = vadd.f32 %v1026, %v1028
      %1082 = vadd.xlane.f32.xlu0 %v1081
      %v1083 = vpop.xlane.xlu0 %1082
      %v1084 = vadd.f32 %v1030, %v1032
      %1085 = vadd.xlane.f32.xlu0 %v1084
      %v1086 = vpop.xlane.xlu0 %1085
      %v1087 = vadd.f32 %v1034, %v1036
      %1088 = vadd.xlane.f32.xlu0 %v1087
      %v1089 = vpop.xlane.xlu0 %1088
      %v1090 = vadd.f32 %v1038, %v1040
      %1091 = vadd.xlane.f32.xlu0 %v1090
      %v1092 = vpop.xlane.xlu0 %1091
      %v1093 = vadd.f32 %v1042, %v1044
      %1094 = vadd.xlane.f32.xlu0 %v1093
      %v1095 = vpop.xlane.xlu0 %1094
      %v1096 = vadd.f32 %v1046, %v1048
      %1097 = vadd.xlane.f32.xlu0 %v1096
      %v1098 = vpop.xlane.xlu0 %1097
      %v1099 = vadd.f32 %v1050, %v1052
      %1100 = vadd.xlane.f32.xlu0 %v1099
      %v1101 = vpop.xlane.xlu0 %1100
      %v1102 = vadd.f32 %v1054, %v1056
      %1103 = vadd.xlane.f32.xlu0 %v1102
      %v1104 = vpop.xlane.xlu0 %1103
      %v1105 = vmax.f32 %v1059, 1e-20
      %v1106 = vmax.f32 %v1062, 1e-20
      %v1107 = vmax.f32 %v1065, 1e-20
      %v1108 = vmax.f32 %v1068, 1e-20
      %v1109 = vmax.f32 %v1071, 1e-20
      %v1110 = vmax.f32 %v1074, 1e-20
      %v1111 = vmax.f32 %v1077, 1e-20
      %v1112 = vmax.f32 %v1080, 1e-20
      %v1113 = vmax.f32 %v1083, 1e-20
      %v1114 = vmax.f32 %v1086, 1e-20
      %v1115 = vmax.f32 %v1089, 1e-20
      %v1116 = vmax.f32 %v1092, 1e-20
      %v1117 = vmax.f32 %v1095, 1e-20
      %v1118 = vmax.f32 %v1098, 1e-20
      %v1119 = vmax.f32 %v1101, 1e-20
      %v1120 = vmax.f32 %v1104, 1e-20
      %v1121 = vrcp.pop %v1105
      %v1122 = vrcp.pop %v1106
      %v1123 = vrcp.pop %v1107
      %v1124 = vrcp.pop %v1108
      %v1125 = vrcp.pop %v1109
      %v1126 = vrcp.pop %v1110
      %v1127 = vrcp.pop %v1111
      %v1128 = vrcp.pop %v1112
      %v1129 = vrcp.pop %v1113
      %v1130 = vrcp.pop %v1114
      %v1131 = vrcp.pop %v1115
      %v1132 = vrcp.pop %v1116
      %v1133 = vrcp.pop %v1117
      %v1134 = vrcp.pop %v1118
      %v1135 = vrcp.pop %v1119
      %v1136 = vrcp.pop %v1120
      %v1137 = vmul.f32 %v994, %v1121
      %v1138 = vmul.f32 %v996, %v1121
      %v1139 = vmul.f32 %v998, %v1122
      %v1140 = vmul.f32 %v1000, %v1122
      %v1141 = vmul.f32 %v1002, %v1123
      %v1142 = vmul.f32 %v1004, %v1123
      %v1143 = vmul.f32 %v1006, %v1124
      %v1144 = vmul.f32 %v1008, %v1124
      %v1145 = vmul.f32 %v1010, %v1125
      %v1146 = vmul.f32 %v1012, %v1125
      %v1147 = vmul.f32 %v1014, %v1126
      %v1148 = vmul.f32 %v1016, %v1126
      %v1149 = vmul.f32 %v1018, %v1127
      %v1150 = vmul.f32 %v1020, %v1127
      %v1151 = vmul.f32 %v1022, %v1128
      %v1152 = vmul.f32 %v1024, %v1128
      %v1153 = vmul.f32 %v1026, %v1129
      %v1154 = vmul.f32 %v1028, %v1129
      %v1155 = vmul.f32 %v1030, %v1130
      %v1156 = vmul.f32 %v1032, %v1130
      %v1157 = vmul.f32 %v1034, %v1131
      %v1158 = vmul.f32 %v1036, %v1131
      %v1159 = vmul.f32 %v1038, %v1132
      %v1160 = vmul.f32 %v1040, %v1132
      %v1161 = vmul.f32 %v1042, %v1133
      %v1162 = vmul.f32 %v1044, %v1133
      %v1163 = vmul.f32 %v1046, %v1134
      %v1164 = vmul.f32 %v1048, %v1134
      %v1165 = vmul.f32 %v1050, %v1135
      %v1166 = vmul.f32 %v1052, %v1135
      %v1167 = vmul.f32 %v1054, %v1136
      %v1168 = vmul.f32 %v1056, %v1136
      %v1169 = vpack.c.bf16 %v1139, %v1137
      %v1170 = vpack.c.bf16 %v1140, %v1138
      %v1171 = vpack.c.bf16 %v1143, %v1141
      %v1172 = vpack.c.bf16 %v1144, %v1142
      %v1173 = vpack.c.bf16 %v1147, %v1145
      %v1174 = vpack.c.bf16 %v1148, %v1146
      %v1175 = vpack.c.bf16 %v1151, %v1149
      %v1176 = vpack.c.bf16 %v1152, %v1150
      %v1177 = vpack.c.bf16 %v1155, %v1153
      %v1178 = vpack.c.bf16 %v1156, %v1154
      %v1179 = vpack.c.bf16 %v1159, %v1157
      %v1180 = vpack.c.bf16 %v1160, %v1158
      %v1181 = vpack.c.bf16 %v1163, %v1161
      %v1182 = vpack.c.bf16 %v1164, %v1162
      %v1183 = vpack.c.bf16 %v1167, %v1165
      %v1184 = vpack.c.bf16 %v1168, %v1166
      %s1185 = scalar_lea.vmem %s2, 1
      %v1186 = vld [vmem:[%s1185] ss:$2 sm:$0x3]
      %1187 = vset.pattern.permute.xlu0 27
      %1188 = vperm.xlu0 %1187, %v566
      %v1189 = vpop.permute.xlu0 %1188
      %1191 = vset.pattern.permute.xlu0 27
      %1192 = vperm.xlu0 %1191, %v567
      %v1193 = vpop.permute.xlu0 %1192
      %1195 = vset.pattern.permute.xlu0 27
      %1196 = vperm.xlu0 %1195, %v568
      %v1197 = vpop.permute.xlu0 %1196
      %1199 = vset.pattern.permute.xlu0 27
      %1200 = vperm.xlu0 %1199, %v569
      %v1201 = vpop.permute.xlu0 %1200
      %1203 = vset.pattern.permute.xlu0 27
      %1204 = vperm.xlu0 %1203, %v570
      %v1205 = vpop.permute.xlu0 %1204
      %1207 = vset.pattern.permute.xlu0 27
      %1208 = vperm.xlu0 %1207, %v571
      %v1209 = vpop.permute.xlu0 %1208
      %1211 = vset.pattern.permute.xlu0 27
      %1212 = vperm.xlu0 %1211, %v572
      %v1213 = vpop.permute.xlu0 %1212
      %1215 = vset.pattern.permute.xlu0 27
      %1216 = vperm.xlu0 %1215, %v573
      %v1217 = vpop.permute.xlu0 %1216
      %1219 = vset.pattern.permute.xlu0 27
      %1220 = vperm.xlu0 %1219, %v574
      %v1221 = vpop.permute.xlu0 %1220
      %1223 = vset.pattern.permute.xlu0 27
      %1224 = vperm.xlu0 %1223, %v575
      %v1225 = vpop.permute.xlu0 %1224
      %1227 = vset.pattern.permute.xlu0 27
      %1228 = vperm.xlu0 %1227, %v576
      %v1229 = vpop.permute.xlu0 %1228
      %1231 = vset.pattern.permute.xlu0 27
      %1232 = vperm.xlu0 %1231, %v577
      %v1233 = vpop.permute.xlu0 %1232
      %1235 = vset.pattern.permute.xlu0 27
      %1236 = vperm.xlu0 %1235, %v578
      %v1237 = vpop.permute.xlu0 %1236
      %1239 = vset.pattern.permute.xlu0 27
      %1240 = vperm.xlu0 %1239, %v579
      %v1241 = vpop.permute.xlu0 %1240
      %1243 = vset.pattern.permute.xlu0 27
      %1244 = vperm.xlu0 %1243, %v580
      %v1245 = vpop.permute.xlu0 %1244
      %1247 = vset.pattern.permute.xlu0 27
      %1248 = vperm.xlu0 %1247, %v581
      %v1249 = vpop.permute.xlu0 %1248
      %v1252 = vlaneseq
      %v1253 = vshrl.u32 %v1252, 7
      %v1254 = vsub.s32 0, %v1253
      %v1255 = vrot.slane %v1186, %v1254
      %v1256 = vlaneseq
      %v1257 = vshrl.u32 %v1256, 7
      %v1258 = vsub.s32 1, %v1257
      %v1259 = vrot.slane %v1186, %v1258
      %v1262 = vadd.f32 %v1189, %v1255
      %v1263 = vadd.f32 %v1189, %v1259
      %v1264 = vadd.f32 %v1193, %v1255
      %v1265 = vadd.f32 %v1193, %v1259
      %v1266 = vadd.f32 %v1197, %v1255
      %v1267 = vadd.f32 %v1197, %v1259
      %v1268 = vadd.f32 %v1201, %v1255
      %v1269 = vadd.f32 %v1201, %v1259
      %v1270 = vadd.f32 %v1205, %v1255
      %v1271 = vadd.f32 %v1205, %v1259
      %v1272 = vadd.f32 %v1209, %v1255
      %v1273 = vadd.f32 %v1209, %v1259
      %v1274 = vadd.f32 %v1213, %v1255
      %v1275 = vadd.f32 %v1213, %v1259
      %v1276 = vadd.f32 %v1217, %v1255
      %v1277 = vadd.f32 %v1217, %v1259
      %v1278 = vadd.f32 %v1221, %v1255
      %v1279 = vadd.f32 %v1221, %v1259
      %v1280 = vadd.f32 %v1225, %v1255
      %v1281 = vadd.f32 %v1225, %v1259
      %v1282 = vadd.f32 %v1229, %v1255
      %v1283 = vadd.f32 %v1229, %v1259
      %v1284 = vadd.f32 %v1233, %v1255
      %v1285 = vadd.f32 %v1233, %v1259
      %v1286 = vadd.f32 %v1237, %v1255
      %v1287 = vadd.f32 %v1237, %v1259
      %v1288 = vadd.f32 %v1241, %v1255
      %v1289 = vadd.f32 %v1241, %v1259
      %v1290 = vadd.f32 %v1245, %v1255
      %v1291 = vadd.f32 %v1245, %v1259
      %v1292 = vadd.f32 %v1249, %v1255
      %v1293 = vadd.f32 %v1249, %v1259
      %vm1294 = vcmp.gt.f32.partialorder %v1262, 0.0
      %vm1295 = vcmp.gt.f32.partialorder %v1263, 0.0
      %vm1296 = vcmp.gt.f32.partialorder %v1264, 0.0
      %vm1297 = vcmp.gt.f32.partialorder %v1265, 0.0
      %vm1298 = vcmp.gt.f32.partialorder %v1266, 0.0
      %vm1299 = vcmp.gt.f32.partialorder %v1267, 0.0
      %vm1300 = vcmp.gt.f32.partialorder %v1268, 0.0
      %vm1301 = vcmp.gt.f32.partialorder %v1269, 0.0
      %vm1302 = vcmp.gt.f32.partialorder %v1270, 0.0
      %vm1303 = vcmp.gt.f32.partialorder %v1271, 0.0
      %vm1304 = vcmp.gt.f32.partialorder %v1272, 0.0
      %vm1305 = vcmp.gt.f32.partialorder %v1273, 0.0
      %vm1306 = vcmp.gt.f32.partialorder %v1274, 0.0
      %vm1307 = vcmp.gt.f32.partialorder %v1275, 0.0
      %vm1308 = vcmp.gt.f32.partialorder %v1276, 0.0
      %vm1309 = vcmp.gt.f32.partialorder %v1277, 0.0
      %vm1310 = vcmp.gt.f32.partialorder %v1278, 0.0
      %vm1311 = vcmp.gt.f32.partialorder %v1279, 0.0
      %vm1312 = vcmp.gt.f32.partialorder %v1280, 0.0
      %vm1313 = vcmp.gt.f32.partialorder %v1281, 0.0
      %vm1314 = vcmp.gt.f32.partialorder %v1282, 0.0
      %vm1315 = vcmp.gt.f32.partialorder %v1283, 0.0
      %vm1316 = vcmp.gt.f32.partialorder %v1284, 0.0
      %vm1317 = vcmp.gt.f32.partialorder %v1285, 0.0
      %vm1318 = vcmp.gt.f32.partialorder %v1286, 0.0
      %vm1319 = vcmp.gt.f32.partialorder %v1287, 0.0
      %vm1320 = vcmp.gt.f32.partialorder %v1288, 0.0
      %vm1321 = vcmp.gt.f32.partialorder %v1289, 0.0
      %vm1322 = vcmp.gt.f32.partialorder %v1290, 0.0
      %vm1323 = vcmp.gt.f32.partialorder %v1291, 0.0
      %vm1324 = vcmp.gt.f32.partialorder %v1292, 0.0
      %vm1325 = vcmp.gt.f32.partialorder %v1293, 0.0
      %v1326 = vmul.f32 %v1262, 0.2
      %v1327 = vmul.f32 %v1263, 0.2
      %v1328 = vmul.f32 %v1264, 0.2
      %v1329 = vmul.f32 %v1265, 0.2
      %v1330 = vmul.f32 %v1266, 0.2
      %v1331 = vmul.f32 %v1267, 0.2
      %v1332 = vmul.f32 %v1268, 0.2
      %v1333 = vmul.f32 %v1269, 0.2
      %v1334 = vmul.f32 %v1270, 0.2
      %v1335 = vmul.f32 %v1271, 0.2
      %v1336 = vmul.f32 %v1272, 0.2
      %v1337 = vmul.f32 %v1273, 0.2
      %v1338 = vmul.f32 %v1274, 0.2
      %v1339 = vmul.f32 %v1275, 0.2
      %v1340 = vmul.f32 %v1276, 0.2
      %v1341 = vmul.f32 %v1277, 0.2
      %v1342 = vmul.f32 %v1278, 0.2
      %v1343 = vmul.f32 %v1279, 0.2
      %v1344 = vmul.f32 %v1280, 0.2
      %v1345 = vmul.f32 %v1281, 0.2
      %v1346 = vmul.f32 %v1282, 0.2
      %v1347 = vmul.f32 %v1283, 0.2
      %v1348 = vmul.f32 %v1284, 0.2
      %v1349 = vmul.f32 %v1285, 0.2
      %v1350 = vmul.f32 %v1286, 0.2
      %v1351 = vmul.f32 %v1287, 0.2
      %v1352 = vmul.f32 %v1288, 0.2
      %v1353 = vmul.f32 %v1289, 0.2
      %v1354 = vmul.f32 %v1290, 0.2
      %v1355 = vmul.f32 %v1291, 0.2
      %v1356 = vmul.f32 %v1292, 0.2
      %v1357 = vmul.f32 %v1293, 0.2
      %v1358 = vsel %vm1294, %v1262, %v1326
      %v1359 = vsel %vm1295, %v1263, %v1327
      %v1360 = vsel %vm1296, %v1264, %v1328
      %v1361 = vsel %vm1297, %v1265, %v1329
      %v1362 = vsel %vm1298, %v1266, %v1330
      %v1363 = vsel %vm1299, %v1267, %v1331
      %v1364 = vsel %vm1300, %v1268, %v1332
      %v1365 = vsel %vm1301, %v1269, %v1333
      %v1366 = vsel %vm1302, %v1270, %v1334
      %v1367 = vsel %vm1303, %v1271, %v1335
      %v1368 = vsel %vm1304, %v1272, %v1336
      %v1369 = vsel %vm1305, %v1273, %v1337
      %v1370 = vsel %vm1306, %v1274, %v1338
      %v1371 = vsel %vm1307, %v1275, %v1339
      %v1372 = vsel %vm1308, %v1276, %v1340
      %v1373 = vsel %vm1309, %v1277, %v1341
      %v1374 = vsel %vm1310, %v1278, %v1342
      %v1375 = vsel %vm1311, %v1279, %v1343
      %v1376 = vsel %vm1312, %v1280, %v1344
      %v1377 = vsel %vm1313, %v1281, %v1345
      %v1378 = vsel %vm1314, %v1282, %v1346
      %v1379 = vsel %vm1315, %v1283, %v1347
      %v1380 = vsel %vm1316, %v1284, %v1348
      %v1381 = vsel %vm1317, %v1285, %v1349
      %v1382 = vsel %vm1318, %v1286, %v1350
      %v1383 = vsel %vm1319, %v1287, %v1351
      %v1384 = vsel %vm1320, %v1288, %v1352
      %v1385 = vsel %vm1321, %v1289, %v1353
      %v1386 = vsel %vm1322, %v1290, %v1354
      %v1387 = vsel %vm1323, %v1291, %v1355
      %v1388 = vsel %vm1324, %v1292, %v1356
      %v1389 = vsel %vm1325, %v1293, %v1357
      %v1390 = vsel %vm849, %v1358, -1e+30
      %v1391 = vsel %vm850, %v1359, -1e+30
      %v1392 = vsel %vm851, %v1360, -1e+30
      %v1393 = vsel %vm852, %v1361, -1e+30
      %v1394 = vsel %vm853, %v1362, -1e+30
      %v1395 = vsel %vm854, %v1363, -1e+30
      %v1396 = vsel %vm855, %v1364, -1e+30
      %v1397 = vsel %vm856, %v1365, -1e+30
      %v1398 = vsel %vm857, %v1366, -1e+30
      %v1399 = vsel %vm858, %v1367, -1e+30
      %v1400 = vsel %vm859, %v1368, -1e+30
      %v1401 = vsel %vm860, %v1369, -1e+30
      %v1402 = vsel %vm861, %v1370, -1e+30
      %v1403 = vsel %vm862, %v1371, -1e+30
      %v1404 = vsel %vm863, %v1372, -1e+30
      %v1405 = vsel %vm864, %v1373, -1e+30
      %v1406 = vsel %vm865, %v1374, -1e+30
      %v1407 = vsel %vm866, %v1375, -1e+30
      %v1408 = vsel %vm867, %v1376, -1e+30
      %v1409 = vsel %vm868, %v1377, -1e+30
      %v1410 = vsel %vm869, %v1378, -1e+30
      %v1411 = vsel %vm870, %v1379, -1e+30
      %v1412 = vsel %vm871, %v1380, -1e+30
      %v1413 = vsel %vm872, %v1381, -1e+30
      %v1414 = vsel %vm873, %v1382, -1e+30
      %v1415 = vsel %vm874, %v1383, -1e+30
      %v1416 = vsel %vm875, %v1384, -1e+30
      %v1417 = vsel %vm876, %v1385, -1e+30
      %v1418 = vsel %vm877, %v1386, -1e+30
      %v1419 = vsel %vm878, %v1387, -1e+30
      %v1420 = vsel %vm879, %v1388, -1e+30
      %v1421 = vsel %vm880, %v1389, -1e+30
      %v1422 = vmax.f32 %v1390, %v1391
      %1423 = vmax.xlane.f32.xlu0 %v1422
      %v1424 = vpop.xlane.xlu0 %1423
      %v1425 = vmax.f32 %v1392, %v1393
      %1426 = vmax.xlane.f32.xlu0 %v1425
      %v1427 = vpop.xlane.xlu0 %1426
      %v1428 = vmax.f32 %v1394, %v1395
      %1429 = vmax.xlane.f32.xlu0 %v1428
      %v1430 = vpop.xlane.xlu0 %1429
      %v1431 = vmax.f32 %v1396, %v1397
      %1432 = vmax.xlane.f32.xlu0 %v1431
      %v1433 = vpop.xlane.xlu0 %1432
      %v1434 = vmax.f32 %v1398, %v1399
      %1435 = vmax.xlane.f32.xlu0 %v1434
      %v1436 = vpop.xlane.xlu0 %1435
      %v1437 = vmax.f32 %v1400, %v1401
      %1438 = vmax.xlane.f32.xlu0 %v1437
      %v1439 = vpop.xlane.xlu0 %1438
      %v1440 = vmax.f32 %v1402, %v1403
      %1441 = vmax.xlane.f32.xlu0 %v1440
      %v1442 = vpop.xlane.xlu0 %1441
      %v1443 = vmax.f32 %v1404, %v1405
      %1444 = vmax.xlane.f32.xlu0 %v1443
      %v1445 = vpop.xlane.xlu0 %1444
      %v1446 = vmax.f32 %v1406, %v1407
      %1447 = vmax.xlane.f32.xlu0 %v1446
      %v1448 = vpop.xlane.xlu0 %1447
      %v1449 = vmax.f32 %v1408, %v1409
      %1450 = vmax.xlane.f32.xlu0 %v1449
      %v1451 = vpop.xlane.xlu0 %1450
      %v1452 = vmax.f32 %v1410, %v1411
      %1453 = vmax.xlane.f32.xlu0 %v1452
      %v1454 = vpop.xlane.xlu0 %1453
      %v1455 = vmax.f32 %v1412, %v1413
      %1456 = vmax.xlane.f32.xlu0 %v1455
      %v1457 = vpop.xlane.xlu0 %1456
      %v1458 = vmax.f32 %v1414, %v1415
      %1459 = vmax.xlane.f32.xlu0 %v1458
      %v1460 = vpop.xlane.xlu0 %1459
      %v1461 = vmax.f32 %v1416, %v1417
      %1462 = vmax.xlane.f32.xlu0 %v1461
      %v1463 = vpop.xlane.xlu0 %1462
      %v1464 = vmax.f32 %v1418, %v1419
      %1465 = vmax.xlane.f32.xlu0 %v1464
      %v1466 = vpop.xlane.xlu0 %1465
      %v1467 = vmax.f32 %v1420, %v1421
      %1468 = vmax.xlane.f32.xlu0 %v1467
      %v1469 = vpop.xlane.xlu0 %1468
      %v1470 = vsub.f32 %v1390, %v1424
      %v1471 = vsub.f32 %v1391, %v1424
      %v1472 = vsub.f32 %v1392, %v1427
      %v1473 = vsub.f32 %v1393, %v1427
      %v1474 = vsub.f32 %v1394, %v1430
      %v1475 = vsub.f32 %v1395, %v1430
      %v1476 = vsub.f32 %v1396, %v1433
      %v1477 = vsub.f32 %v1397, %v1433
      %v1478 = vsub.f32 %v1398, %v1436
      %v1479 = vsub.f32 %v1399, %v1436
      %v1480 = vsub.f32 %v1400, %v1439
      %v1481 = vsub.f32 %v1401, %v1439
      %v1482 = vsub.f32 %v1402, %v1442
      %v1483 = vsub.f32 %v1403, %v1442
      %v1484 = vsub.f32 %v1404, %v1445
      %v1485 = vsub.f32 %v1405, %v1445
      %v1486 = vsub.f32 %v1406, %v1448
      %v1487 = vsub.f32 %v1407, %v1448
      %v1488 = vsub.f32 %v1408, %v1451
      %v1489 = vsub.f32 %v1409, %v1451
      %v1490 = vsub.f32 %v1410, %v1454
      %v1491 = vsub.f32 %v1411, %v1454
      %v1492 = vsub.f32 %v1412, %v1457
      %v1493 = vsub.f32 %v1413, %v1457
      %v1494 = vsub.f32 %v1414, %v1460
      %v1495 = vsub.f32 %v1415, %v1460
      %v1496 = vsub.f32 %v1416, %v1463
      %v1497 = vsub.f32 %v1417, %v1463
      %v1498 = vsub.f32 %v1418, %v1466
      %v1499 = vsub.f32 %v1419, %v1466
      %v1500 = vsub.f32 %v1420, %v1469
      %v1501 = vsub.f32 %v1421, %v1469
      %v1502 = vmul.f32 %v1470, 1.442695
      %v1503 = vpow.pop %v1502
      %v1504 = vmul.f32 %v1471, 1.442695
      %v1505 = vpow.pop %v1504
      %v1506 = vmul.f32 %v1472, 1.442695
      %v1507 = vpow.pop %v1506
      %v1508 = vmul.f32 %v1473, 1.442695
      %v1509 = vpow.pop %v1508
      %v1510 = vmul.f32 %v1474, 1.442695
      %v1511 = vpow.pop %v1510
      %v1512 = vmul.f32 %v1475, 1.442695
      %v1513 = vpow.pop %v1512
      %v1514 = vmul.f32 %v1476, 1.442695
      %v1515 = vpow.pop %v1514
      %v1516 = vmul.f32 %v1477, 1.442695
      %v1517 = vpow.pop %v1516
      %v1518 = vmul.f32 %v1478, 1.442695
      %v1519 = vpow.pop %v1518
      %v1520 = vmul.f32 %v1479, 1.442695
      %v1521 = vpow.pop %v1520
      %v1522 = vmul.f32 %v1480, 1.442695
      %v1523 = vpow.pop %v1522
      %v1524 = vmul.f32 %v1481, 1.442695
      %v1525 = vpow.pop %v1524
      %v1526 = vmul.f32 %v1482, 1.442695
      %v1527 = vpow.pop %v1526
      %v1528 = vmul.f32 %v1483, 1.442695
      %v1529 = vpow.pop %v1528
      %v1530 = vmul.f32 %v1484, 1.442695
      %v1531 = vpow.pop %v1530
      %v1532 = vmul.f32 %v1485, 1.442695
      %v1533 = vpow.pop %v1532
      %v1534 = vmul.f32 %v1486, 1.442695
      %v1535 = vpow.pop %v1534
      %v1536 = vmul.f32 %v1487, 1.442695
      %v1537 = vpow.pop %v1536
      %v1538 = vmul.f32 %v1488, 1.442695
      %v1539 = vpow.pop %v1538
      %v1540 = vmul.f32 %v1489, 1.442695
      %v1541 = vpow.pop %v1540
      %v1542 = vmul.f32 %v1490, 1.442695
      %v1543 = vpow.pop %v1542
      %v1544 = vmul.f32 %v1491, 1.442695
      %v1545 = vpow.pop %v1544
      %v1546 = vmul.f32 %v1492, 1.442695
      %v1547 = vpow.pop %v1546
      %v1548 = vmul.f32 %v1493, 1.442695
      %v1549 = vpow.pop %v1548
      %v1550 = vmul.f32 %v1494, 1.442695
      %v1551 = vpow.pop %v1550
      %v1552 = vmul.f32 %v1495, 1.442695
      %v1553 = vpow.pop %v1552
      %v1554 = vmul.f32 %v1496, 1.442695
      %v1555 = vpow.pop %v1554
      %v1556 = vmul.f32 %v1497, 1.442695
      %v1557 = vpow.pop %v1556
      %v1558 = vmul.f32 %v1498, 1.442695
      %v1559 = vpow.pop %v1558
      %v1560 = vmul.f32 %v1499, 1.442695
      %v1561 = vpow.pop %v1560
      %v1562 = vmul.f32 %v1500, 1.442695
      %v1563 = vpow.pop %v1562
      %v1564 = vmul.f32 %v1501, 1.442695
      %v1565 = vpow.pop %v1564
      %v1566 = vadd.f32 %v1503, %v1505
      %1567 = vadd.xlane.f32.xlu0 %v1566
      %v1568 = vpop.xlane.xlu0 %1567
      %v1569 = vadd.f32 %v1507, %v1509
      %1570 = vadd.xlane.f32.xlu0 %v1569
      %v1571 = vpop.xlane.xlu0 %1570
      %v1572 = vadd.f32 %v1511, %v1513
      %1573 = vadd.xlane.f32.xlu0 %v1572
      %v1574 = vpop.xlane.xlu0 %1573
      %v1575 = vadd.f32 %v1515, %v1517
      %1576 = vadd.xlane.f32.xlu0 %v1575
      %v1577 = vpop.xlane.xlu0 %1576
      %v1578 = vadd.f32 %v1519, %v1521
      %1579 = vadd.xlane.f32.xlu0 %v1578
      %v1580 = vpop.xlane.xlu0 %1579
      %v1581 = vadd.f32 %v1523, %v1525
      %1582 = vadd.xlane.f32.xlu0 %v1581
      %v1583 = vpop.xlane.xlu0 %1582
      %v1584 = vadd.f32 %v1527, %v1529
      %1585 = vadd.xlane.f32.xlu0 %v1584
      %v1586 = vpop.xlane.xlu0 %1585
      %v1587 = vadd.f32 %v1531, %v1533
      %1588 = vadd.xlane.f32.xlu0 %v1587
      %v1589 = vpop.xlane.xlu0 %1588
      %v1590 = vadd.f32 %v1535, %v1537
      %1591 = vadd.xlane.f32.xlu0 %v1590
      %v1592 = vpop.xlane.xlu0 %1591
      %v1593 = vadd.f32 %v1539, %v1541
      %1594 = vadd.xlane.f32.xlu0 %v1593
      %v1595 = vpop.xlane.xlu0 %1594
      %v1596 = vadd.f32 %v1543, %v1545
      %1597 = vadd.xlane.f32.xlu0 %v1596
      %v1598 = vpop.xlane.xlu0 %1597
      %v1599 = vadd.f32 %v1547, %v1549
      %1600 = vadd.xlane.f32.xlu0 %v1599
      %v1601 = vpop.xlane.xlu0 %1600
      %v1602 = vadd.f32 %v1551, %v1553
      %1603 = vadd.xlane.f32.xlu0 %v1602
      %v1604 = vpop.xlane.xlu0 %1603
      %v1605 = vadd.f32 %v1555, %v1557
      %1606 = vadd.xlane.f32.xlu0 %v1605
      %v1607 = vpop.xlane.xlu0 %1606
      %v1608 = vadd.f32 %v1559, %v1561
      %1609 = vadd.xlane.f32.xlu0 %v1608
      %v1610 = vpop.xlane.xlu0 %1609
      %v1611 = vadd.f32 %v1563, %v1565
      %1612 = vadd.xlane.f32.xlu0 %v1611
      %v1613 = vpop.xlane.xlu0 %1612
      %v1614 = vmax.f32 %v1568, 1e-20
      %v1615 = vmax.f32 %v1571, 1e-20
      %v1616 = vmax.f32 %v1574, 1e-20
      %v1617 = vmax.f32 %v1577, 1e-20
      %v1618 = vmax.f32 %v1580, 1e-20
      %v1619 = vmax.f32 %v1583, 1e-20
      %v1620 = vmax.f32 %v1586, 1e-20
      %v1621 = vmax.f32 %v1589, 1e-20
      %v1622 = vmax.f32 %v1592, 1e-20
      %v1623 = vmax.f32 %v1595, 1e-20
      %v1624 = vmax.f32 %v1598, 1e-20
      %v1625 = vmax.f32 %v1601, 1e-20
      %v1626 = vmax.f32 %v1604, 1e-20
      %v1627 = vmax.f32 %v1607, 1e-20
      %v1628 = vmax.f32 %v1610, 1e-20
      %v1629 = vmax.f32 %v1613, 1e-20
      %v1630 = vrcp.pop %v1614
      %v1631 = vrcp.pop %v1615
      %v1632 = vrcp.pop %v1616
      %v1633 = vrcp.pop %v1617
      %v1634 = vrcp.pop %v1618
      %v1635 = vrcp.pop %v1619
      %v1636 = vrcp.pop %v1620
      %v1637 = vrcp.pop %v1621
      %v1638 = vrcp.pop %v1622
      %v1639 = vrcp.pop %v1623
      %v1640 = vrcp.pop %v1624
      %v1641 = vrcp.pop %v1625
      %v1642 = vrcp.pop %v1626
      %v1643 = vrcp.pop %v1627
      %v1644 = vrcp.pop %v1628
      %v1645 = vrcp.pop %v1629
      %v1646 = vmul.f32 %v1503, %v1630
      %v1647 = vmul.f32 %v1505, %v1630
      %v1648 = vmul.f32 %v1507, %v1631
      %v1649 = vmul.f32 %v1509, %v1631
      %v1650 = vmul.f32 %v1511, %v1632
      %v1651 = vmul.f32 %v1513, %v1632
      %v1652 = vmul.f32 %v1515, %v1633
      %v1653 = vmul.f32 %v1517, %v1633
      %v1654 = vmul.f32 %v1519, %v1634
      %v1655 = vmul.f32 %v1521, %v1634
      %v1656 = vmul.f32 %v1523, %v1635
      %v1657 = vmul.f32 %v1525, %v1635
      %v1658 = vmul.f32 %v1527, %v1636
      %v1659 = vmul.f32 %v1529, %v1636
      %v1660 = vmul.f32 %v1531, %v1637
      %v1661 = vmul.f32 %v1533, %v1637
      %v1662 = vmul.f32 %v1535, %v1638
      %v1663 = vmul.f32 %v1537, %v1638
      %v1664 = vmul.f32 %v1539, %v1639
      %v1665 = vmul.f32 %v1541, %v1639
      %v1666 = vmul.f32 %v1543, %v1640
      %v1667 = vmul.f32 %v1545, %v1640
      %v1668 = vmul.f32 %v1547, %v1641
      %v1669 = vmul.f32 %v1549, %v1641
      %v1670 = vmul.f32 %v1551, %v1642
      %v1671 = vmul.f32 %v1553, %v1642
      %v1672 = vmul.f32 %v1555, %v1643
      %v1673 = vmul.f32 %v1557, %v1643
      %v1674 = vmul.f32 %v1559, %v1644
      %v1675 = vmul.f32 %v1561, %v1644
      %v1676 = vmul.f32 %v1563, %v1645
      %v1677 = vmul.f32 %v1565, %v1645
      %v1678 = vpack.c.bf16 %v1648, %v1646
      %v1679 = vpack.c.bf16 %v1649, %v1647
      %v1680 = vpack.c.bf16 %v1652, %v1650
      %v1681 = vpack.c.bf16 %v1653, %v1651
      %v1682 = vpack.c.bf16 %v1656, %v1654
      %v1683 = vpack.c.bf16 %v1657, %v1655
      %v1684 = vpack.c.bf16 %v1660, %v1658
      %v1685 = vpack.c.bf16 %v1661, %v1659
      %v1686 = vpack.c.bf16 %v1664, %v1662
      %v1687 = vpack.c.bf16 %v1665, %v1663
      %v1688 = vpack.c.bf16 %v1668, %v1666
      %v1689 = vpack.c.bf16 %v1669, %v1667
      %v1690 = vpack.c.bf16 %v1672, %v1670
      %v1691 = vpack.c.bf16 %v1673, %v1671
      %v1692 = vpack.c.bf16 %v1676, %v1674
      %v1693 = vpack.c.bf16 %v1677, %v1675
      %1694 = vrot.lane.b32.xlu0 %v436, 112
      %v1695 = vpop.permute.xlu0 %1694
      %1696 = vrot.lane.b32.xlu0 %v437, 112
      %v1697 = vpop.permute.xlu0 %1696
      %1698 = vrot.lane.b32.xlu0 %v438, 112
      %v1699 = vpop.permute.xlu0 %1698
      %1700 = vrot.lane.b32.xlu0 %v439, 112
      %v1701 = vpop.permute.xlu0 %1700
      %1702 = vrot.lane.b32.xlu0 %v440, 112
      %v1703 = vpop.permute.xlu0 %1702
      %1704 = vrot.lane.b32.xlu0 %v441, 112
      %v1705 = vpop.permute.xlu0 %1704
      %1706 = vrot.lane.b32.xlu0 %v442, 112
      %v1707 = vpop.permute.xlu0 %1706
      %1708 = vrot.lane.b32.xlu0 %v443, 112
      %v1709 = vpop.permute.xlu0 %1708
      %1710 = vrot.lane.b32.xlu0 %v444, 112
      %v1711 = vpop.permute.xlu0 %1710
      %1712 = vrot.lane.b32.xlu0 %v445, 112
      %v1713 = vpop.permute.xlu0 %1712
      %1714 = vrot.lane.b32.xlu0 %v446, 112
      %v1715 = vpop.permute.xlu0 %1714
      %1716 = vrot.lane.b32.xlu0 %v447, 112
      %v1717 = vpop.permute.xlu0 %1716
      %1718 = vrot.lane.b32.xlu0 %v448, 112
      %v1719 = vpop.permute.xlu0 %1718
      %1720 = vrot.lane.b32.xlu0 %v449, 112
      %v1721 = vpop.permute.xlu0 %1720
      %1722 = vrot.lane.b32.xlu0 %v450, 112
      %v1723 = vpop.permute.xlu0 %1722
      %1724 = vrot.lane.b32.xlu0 %v451, 112
      %v1725 = vpop.permute.xlu0 %1724
      %1742 = vmatprep.subr.bf16.mxu0 0
      %1743 = vmatpush1.bf16.msra.mxu0 %v1695
      %1744 = vmatprep.subr.bf16.mxu0 0
      %1745 = vmatpush1.bf16.msra.mxu0 %v1697
      %1746 = vmatprep.subr.bf16.mxu0 0
      %1747 = vmatpush1.bf16.msra.mxu0 %v1699
      %1748 = vmatprep.subr.bf16.mxu0 0
      %1749 = vmatpush1.bf16.msra.mxu0 %v1701
      %1750 = vmatprep.subr.bf16.mxu0 0
      %1751 = vmatpush1.bf16.msra.mxu0 %v1703
      %1752 = vmatprep.subr.bf16.mxu0 0
      %1753 = vmatpush1.bf16.msra.mxu0 %v1705
      %1754 = vmatprep.subr.bf16.mxu0 0
      %1755 = vmatpush1.bf16.msra.mxu0 %v1707
      %1756 = vmatprep.subr.bf16.mxu0 0
      %1757 = vmatpush1.bf16.msra.mxu0 %v1709
      %1758 = vmatprep.subr.bf16.mxu0 0
      %1759 = vmatpush1.bf16.msra.mxu0 %v1711
      %1760 = vmatprep.subr.bf16.mxu0 0
      %1761 = vmatpush1.bf16.msra.mxu0 %v1713
      %1762 = vmatprep.subr.bf16.mxu0 0
      %1763 = vmatpush1.bf16.msra.mxu0 %v1715
      %1764 = vmatprep.subr.bf16.mxu0 0
      %1765 = vmatpush1.bf16.msra.mxu0 %v1717
      %1766 = vmatprep.subr.bf16.mxu0 0
      %1767 = vmatpush1.bf16.msra.mxu0 %v1719
      %1768 = vmatprep.subr.bf16.mxu0 0
      %1769 = vmatpush1.bf16.msra.mxu0 %v1721
      %1770 = vmatprep.subr.bf16.mxu0 0
      %1771 = vmatpush1.bf16.msra.mxu0 %v1723
      %1772 = vmatprep.subr.bf16.mxu0 0
      %1773 = vmatpush1.bf16.msra.mxu0 %v1725
      %1774 = vmatprep.mubr.bf16.mxu0 %v1679
      %1775 = vmatmul.mubr.bf16.gmra.mrb[0].mxu0 %v1678
      %v1776 = vpop.f32.mrb[0].mxu0
      %v1777 = vadd.f32 0.0, %v1776
      %v1778 = vpop.f32.mrb[0].mxu0
      %v1779 = vpop.f32.mrb[0].mxu0
      %v1780 = vadd.f32 0.0, %v1779
      %v1781 = vpop.f32.mrb[0].mxu0
      %1782 = vmatprep.mubr.bf16.mxu0 %v1681
      %1783 = vmatmul.mubr.bf16.gmra.mrb[0].mxu0 %v1680
      %v1784 = vpop.f32.mrb[0].mxu0
      %v1785 = vadd.f32 0.0, %v1784
      %v1786 = vpop.f32.mrb[0].mxu0
      %v1787 = vpop.f32.mrb[0].mxu0
      %v1788 = vadd.f32 0.0, %v1787
      %v1789 = vpop.f32.mrb[0].mxu0
      %1790 = vmatprep.mubr.bf16.mxu0 %v1683
      %1791 = vmatmul.mubr.bf16.gmra.mrb[0].mxu0 %v1682
      %v1792 = vpop.f32.mrb[0].mxu0
      %v1793 = vadd.f32 0.0, %v1792
      %v1794 = vpop.f32.mrb[0].mxu0
      %v1795 = vpop.f32.mrb[0].mxu0
      %v1796 = vadd.f32 0.0, %v1795
      %v1797 = vpop.f32.mrb[0].mxu0
      %1798 = vmatprep.mubr.bf16.mxu0 %v1685
      %1799 = vmatmul.mubr.bf16.gmra.mrb[0].mxu0 %v1684
      %v1800 = vpop.f32.mrb[0].mxu0
      %v1801 = vadd.f32 0.0, %v1800
      %v1802 = vpop.f32.mrb[0].mxu0
      %v1803 = vpop.f32.mrb[0].mxu0
      %v1804 = vadd.f32 0.0, %v1803
      %v1805 = vpop.f32.mrb[0].mxu0
      %1806 = vmatprep.mubr.bf16.mxu0 %v1687
      %1807 = vmatmul.mubr.bf16.gmra.mrb[0].mxu0 %v1686
      %v1808 = vpop.f32.mrb[0].mxu0
      %v1809 = vadd.f32 0.0, %v1808
      %v1810 = vpop.f32.mrb[0].mxu0
      %v1811 = vpop.f32.mrb[0].mxu0
      %v1812 = vadd.f32 0.0, %v1811
      %v1813 = vpop.f32.mrb[0].mxu0
      %1814 = vmatprep.mubr.bf16.mxu0 %v1689
      %1815 = vmatmul.mubr.bf16.gmra.mrb[0].mxu0 %v1688
      %v1816 = vpop.f32.mrb[0].mxu0
      %v1817 = vadd.f32 0.0, %v1816
      %v1818 = vpop.f32.mrb[0].mxu0
      %v1819 = vpop.f32.mrb[0].mxu0
      %v1820 = vadd.f32 0.0, %v1819
      %v1821 = vpop.f32.mrb[0].mxu0
      %1822 = vmatprep.mubr.bf16.mxu0 %v1691
      %1823 = vmatmul.mubr.bf16.gmra.mrb[0].mxu0 %v1690
      %v1824 = vpop.f32.mrb[0].mxu0
      %v1825 = vadd.f32 0.0, %v1824
      %v1826 = vpop.f32.mrb[0].mxu0
      %v1827 = vpop.f32.mrb[0].mxu0
      %v1828 = vadd.f32 0.0, %v1827
      %v1829 = vpop.f32.mrb[0].mxu0
      %1830 = vmatprep.mubr.bf16.mxu0 %v1693
      %1831 = vmatmul.mubr.bf16.gmra.mrb[0].mxu0 %v1692
      %v1832 = vpop.f32.mrb[0].mxu0
      %v1833 = vadd.f32 0.0, %v1832
      %v1834 = vpop.f32.mrb[0].mxu0
      %v1835 = vpop.f32.mrb[0].mxu0
      %v1836 = vadd.f32 0.0, %v1835
      %v1837 = vpop.f32.mrb[0].mxu0
      %1838 = vdwg.mxu0
      %1839 = vrot.lane.b32.xlu0 %v436, 120
      %v1840 = vpop.permute.xlu0 %1839
      %1841 = vrot.lane.b32.xlu0 %v437, 120
      %v1842 = vpop.permute.xlu0 %1841
      %1843 = vrot.lane.b32.xlu0 %v438, 120
      %v1844 = vpop.permute.xlu0 %1843
      %1845 = vrot.lane.b32.xlu0 %v439, 120
      %v1846 = vpop.permute.xlu0 %1845
      %1847 = vrot.lane.b32.xlu0 %v440, 120
      %v1848 = vpop.permute.xlu0 %1847
      %1849 = vrot.lane.b32.xlu0 %v441, 120
      %v1850 = vpop.permute.xlu0 %1849
      %1851 = vrot.lane.b32.xlu0 %v442, 120
      %v1852 = vpop.permute.xlu0 %1851
      %1853 = vrot.lane.b32.xlu0 %v443, 120
      %v1854 = vpop.permute.xlu0 %1853
      %1855 = vrot.lane.b32.xlu0 %v444, 120
      %v1856 = vpop.permute.xlu0 %1855
      %1857 = vrot.lane.b32.xlu0 %v445, 120
      %v1858 = vpop.permute.xlu0 %1857
      %1859 = vrot.lane.b32.xlu0 %v446, 120
      %v1860 = vpop.permute.xlu0 %1859
      %1861 = vrot.lane.b32.xlu0 %v447, 120
      %v1862 = vpop.permute.xlu0 %1861
      %1863 = vrot.lane.b32.xlu0 %v448, 120
      %v1864 = vpop.permute.xlu0 %1863
      %1865 = vrot.lane.b32.xlu0 %v449, 120
      %v1866 = vpop.permute.xlu0 %1865
      %1867 = vrot.lane.b32.xlu0 %v450, 120
      %v1868 = vpop.permute.xlu0 %1867
      %1869 = vrot.lane.b32.xlu0 %v451, 120
      %v1870 = vpop.permute.xlu0 %1869
      %1887 = vmatprep.subr.bf16.mxu0 0
      %1888 = vmatpush1.bf16.msra.mxu0 %v1840
      %1889 = vmatprep.subr.bf16.mxu0 0
      %1890 = vmatpush1.bf16.msra.mxu0 %v1842
      %1891 = vmatprep.subr.bf16.mxu0 0
      %1892 = vmatpush1.bf16.msra.mxu0 %v1844
      %1893 = vmatprep.subr.bf16.mxu0 0
      %1894 = vmatpush1.bf16.msra.mxu0 %v1846
      %1895 = vmatprep.subr.bf16.mxu0 0
      %1896 = vmatpush1.bf16.msra.mxu0 %v1848
      %1897 = vmatprep.subr.bf16.mxu0 0
      %1898 = vmatpush1.bf16.msra.mxu0 %v1850
      %1899 = vmatprep.subr.bf16.mxu0 0
      %1900 = vmatpush1.bf16.msra.mxu0 %v1852
      %1901 = vmatprep.subr.bf16.mxu0 0
      %1902 = vmatpush1.bf16.msra.mxu0 %v1854
      %1903 = vmatprep.subr.bf16.mxu0 0
      %1904 = vmatpush1.bf16.msra.mxu0 %v1856
      %1905 = vmatprep.subr.bf16.mxu0 0
      %1906 = vmatpush1.bf16.msra.mxu0 %v1858
      %1907 = vmatprep.subr.bf16.mxu0 0
      %1908 = vmatpush1.bf16.msra.mxu0 %v1860
      %1909 = vmatprep.subr.bf16.mxu0 0
      %1910 = vmatpush1.bf16.msra.mxu0 %v1862
      %1911 = vmatprep.subr.bf16.mxu0 0
      %1912 = vmatpush1.bf16.msra.mxu0 %v1864
      %1913 = vmatprep.subr.bf16.mxu0 0
      %1914 = vmatpush1.bf16.msra.mxu0 %v1866
      %1915 = vmatprep.subr.bf16.mxu0 0
      %1916 = vmatpush1.bf16.msra.mxu0 %v1868
      %1917 = vmatprep.subr.bf16.mxu0 0
      %1918 = vmatpush1.bf16.msra.mxu0 %v1870
      %1919 = vmatprep.mubr.bf16.mxu0 %v1170
      %1920 = vmatmul.mubr.bf16.gmra.mrb[0].mxu0 %v1169
      %v1921 = vpop.f32.mrb[0].mxu0
      %v1922 = vadd.f32 %v1777, %v1921
      %v1923 = vpop.f32.mrb[0].mxu0
      %v1924 = vpop.f32.mrb[0].mxu0
      %v1925 = vadd.f32 %v1780, %v1924
      %v1926 = vpop.f32.mrb[0].mxu0
      %1927 = vmatprep.mubr.bf16.mxu0 %v1172
      %1928 = vmatmul.mubr.bf16.gmra.mrb[0].mxu0 %v1171
      %v1929 = vpop.f32.mrb[0].mxu0
      %v1930 = vadd.f32 %v1785, %v1929
      %v1931 = vpop.f32.mrb[0].mxu0
      %v1932 = vpop.f32.mrb[0].mxu0
      %v1933 = vadd.f32 %v1788, %v1932
      %v1934 = vpop.f32.mrb[0].mxu0
      %1935 = vmatprep.mubr.bf16.mxu0 %v1174
      %1936 = vmatmul.mubr.bf16.gmra.mrb[0].mxu0 %v1173
      %v1937 = vpop.f32.mrb[0].mxu0
      %v1938 = vadd.f32 %v1793, %v1937
      %v1939 = vpop.f32.mrb[0].mxu0
      %v1940 = vpop.f32.mrb[0].mxu0
      %v1941 = vadd.f32 %v1796, %v1940
      %v1942 = vpop.f32.mrb[0].mxu0
      %1943 = vmatprep.mubr.bf16.mxu0 %v1176
      %1944 = vmatmul.mubr.bf16.gmra.mrb[0].mxu0 %v1175
      %v1945 = vpop.f32.mrb[0].mxu0
      %v1946 = vadd.f32 %v1801, %v1945
      %v1947 = vpop.f32.mrb[0].mxu0
      %v1948 = vpop.f32.mrb[0].mxu0
      %v1949 = vadd.f32 %v1804, %v1948
      %v1950 = vpop.f32.mrb[0].mxu0
      %1951 = vmatprep.mubr.bf16.mxu0 %v1178
      %1952 = vmatmul.mubr.bf16.gmra.mrb[0].mxu0 %v1177
      %v1953 = vpop.f32.mrb[0].mxu0
      %v1954 = vadd.f32 %v1809, %v1953
      %v1955 = vpop.f32.mrb[0].mxu0
      %v1956 = vpop.f32.mrb[0].mxu0
      %v1957 = vadd.f32 %v1812, %v1956
      %v1958 = vpop.f32.mrb[0].mxu0
      %1959 = vmatprep.mubr.bf16.mxu0 %v1180
      %1960 = vmatmul.mubr.bf16.gmra.mrb[0].mxu0 %v1179
      %v1961 = vpop.f32.mrb[0].mxu0
      %v1962 = vadd.f32 %v1817, %v1961
      %v1963 = vpop.f32.mrb[0].mxu0
      %v1964 = vpop.f32.mrb[0].mxu0
      %v1965 = vadd.f32 %v1820, %v1964
      %v1966 = vpop.f32.mrb[0].mxu0
      %1967 = vmatprep.mubr.bf16.mxu0 %v1182
      %1968 = vmatmul.mubr.bf16.gmra.mrb[0].mxu0 %v1181
      %v1969 = vpop.f32.mrb[0].mxu0
      %v1970 = vadd.f32 %v1825, %v1969
      %v1971 = vpop.f32.mrb[0].mxu0
      %v1972 = vpop.f32.mrb[0].mxu0
      %v1973 = vadd.f32 %v1828, %v1972
      %v1974 = vpop.f32.mrb[0].mxu0
      %1975 = vmatprep.mubr.bf16.mxu0 %v1184
      %1976 = vmatmul.mubr.bf16.gmra.mrb[0].mxu0 %v1183
      %v1977 = vpop.f32.mrb[0].mxu0
      %v1978 = vadd.f32 %v1833, %v1977
      %v1979 = vpop.f32.mrb[0].mxu0
      %v1980 = vpop.f32.mrb[0].mxu0
      %v1981 = vadd.f32 %v1836, %v1980
      %v1982 = vpop.f32.mrb[0].mxu0
      %1983 = vdwg.mxu0
      %v1984 = vmul.f32 %v1922, 0.5
      %v1985 = vmul.f32 %v1925, 0.5
      %v1986 = vmul.f32 %v1930, 0.5
      %v1987 = vmul.f32 %v1933, 0.5
      %v1988 = vmul.f32 %v1938, 0.5
      %v1989 = vmul.f32 %v1941, 0.5
      %v1990 = vmul.f32 %v1946, 0.5
      %v1991 = vmul.f32 %v1949, 0.5
      %v1992 = vmul.f32 %v1954, 0.5
      %v1993 = vmul.f32 %v1957, 0.5
      %v1994 = vmul.f32 %v1962, 0.5
      %v1995 = vmul.f32 %v1965, 0.5
      %v1996 = vmul.f32 %v1970, 0.5
      %v1997 = vmul.f32 %v1973, 0.5
      %v1998 = vmul.f32 %v1978, 0.5
      %v1999 = vmul.f32 %v1981, 0.5
      %2016 = vrot.lane.b32.xlu0 %v1984, 8
      %v2017 = vpop.permute.xlu0 %2016
      %2018 = vrot.lane.b32.xlu0 %v1985, 8
      %v2019 = vpop.permute.xlu0 %2018
      %2020 = vrot.lane.b32.xlu0 %v1986, 8
      %v2021 = vpop.permute.xlu0 %2020
      %2022 = vrot.lane.b32.xlu0 %v1987, 8
      %v2023 = vpop.permute.xlu0 %2022
      %2024 = vrot.lane.b32.xlu0 %v1988, 8
      %v2025 = vpop.permute.xlu0 %2024
      %2026 = vrot.lane.b32.xlu0 %v1989, 8
      %v2027 = vpop.permute.xlu0 %2026
      %2028 = vrot.lane.b32.xlu0 %v1990, 8
      %v2029 = vpop.permute.xlu0 %2028
      %2030 = vrot.lane.b32.xlu0 %v1991, 8
      %v2031 = vpop.permute.xlu0 %2030
      %2032 = vrot.lane.b32.xlu0 %v1992, 8
      %v2033 = vpop.permute.xlu0 %2032
      %2034 = vrot.lane.b32.xlu0 %v1993, 8
      %v2035 = vpop.permute.xlu0 %2034
      %2036 = vrot.lane.b32.xlu0 %v1994, 8
      %v2037 = vpop.permute.xlu0 %2036
      %2038 = vrot.lane.b32.xlu0 %v1995, 8
      %v2039 = vpop.permute.xlu0 %2038
      %2040 = vrot.lane.b32.xlu0 %v1996, 8
      %v2041 = vpop.permute.xlu0 %2040
      %2042 = vrot.lane.b32.xlu0 %v1997, 8
      %v2043 = vpop.permute.xlu0 %2042
      %2044 = vrot.lane.b32.xlu0 %v1998, 8
      %v2045 = vpop.permute.xlu0 %2044
      %2046 = vrot.lane.b32.xlu0 %v1999, 8
      %v2047 = vpop.permute.xlu0 %2046
      %vm2064 = vcmask 64512
      %v2065 = vsel %vm2064, %v503, %v2017
      %v2066 = vsel %vm2064, %v506, %v2019
      %v2067 = vsel %vm2064, %v511, %v2021
      %v2068 = vsel %vm2064, %v514, %v2023
      %v2069 = vsel %vm2064, %v519, %v2025
      %v2070 = vsel %vm2064, %v522, %v2027
      %v2071 = vsel %vm2064, %v527, %v2029
      %v2072 = vsel %vm2064, %v530, %v2031
      %v2073 = vsel %vm2064, %v535, %v2033
      %v2074 = vsel %vm2064, %v538, %v2035
      %v2075 = vsel %vm2064, %v543, %v2037
      %v2076 = vsel %vm2064, %v546, %v2039
      %v2077 = vsel %vm2064, %v551, %v2041
      %v2078 = vsel %vm2064, %v554, %v2043
      %v2079 = vsel %vm2064, %v559, %v2045
      %v2080 = vsel %vm2064, %v562, %v2047
      %vm2081 = vcmask 130048
      %v2082 = vsel %vm2081, %v2065, 0.0
      %v2083 = vsel %vm2081, %v2066, 0.0
      %v2084 = vsel %vm2081, %v2067, 0.0
      %v2085 = vsel %vm2081, %v2068, 0.0
      %v2086 = vsel %vm2081, %v2069, 0.0
      %v2087 = vsel %vm2081, %v2070, 0.0
      %v2088 = vsel %vm2081, %v2071, 0.0
      %v2089 = vsel %vm2081, %v2072, 0.0
      %v2090 = vsel %vm2081, %v2073, 0.0
      %v2091 = vsel %vm2081, %v2074, 0.0
      %v2092 = vsel %vm2081, %v2075, 0.0
      %v2093 = vsel %vm2081, %v2076, 0.0
      %v2094 = vsel %vm2081, %v2077, 0.0
      %v2095 = vsel %vm2081, %v2078, 0.0
      %v2096 = vsel %vm2081, %v2079, 0.0
      %v2097 = vsel %vm2081, %v2080, 0.0
      %v2098 = vld [vmem:[%s3] sm:$0x1]
      %v2100 = vlaneseq
      %v2101 = vshrl.u32 %v2100, 7
      %v2102 = vsub.s32 0, %v2101
      %v2103 = vrot.slane %v2098, %v2102
      %v2105 = vadd.f32 %v2082, %v2103
      %v2106 = vadd.f32 %v2083, %v2103
      %v2107 = vadd.f32 %v2084, %v2103
      %v2108 = vadd.f32 %v2085, %v2103
      %v2109 = vadd.f32 %v2086, %v2103
      %v2110 = vadd.f32 %v2087, %v2103
      %v2111 = vadd.f32 %v2088, %v2103
      %v2112 = vadd.f32 %v2089, %v2103
      %v2113 = vadd.f32 %v2090, %v2103
      %v2114 = vadd.f32 %v2091, %v2103
      %v2115 = vadd.f32 %v2092, %v2103
      %v2116 = vadd.f32 %v2093, %v2103
      %v2117 = vadd.f32 %v2094, %v2103
      %v2118 = vadd.f32 %v2095, %v2103
      %v2119 = vadd.f32 %v2096, %v2103
      %v2120 = vadd.f32 %v2097, %v2103
      %2121 = vst [vmem:[%s202] sm:$0xff] %v2105
      %2122 = vst [vmem:[%s202 + $0x8] sm:$0xff] %v2106
      %2123 = vst [vmem:[%s202 + $0x10] sm:$0xff] %v2107
      %2124 = vst [vmem:[%s202 + $0x18] sm:$0xff] %v2108
      %2125 = vst [vmem:[%s202 + $0x20] sm:$0xff] %v2109
      %2126 = vst [vmem:[%s202 + $0x28] sm:$0xff] %v2110
      %2127 = vst [vmem:[%s202 + $0x30] sm:$0xff] %v2111
      %2128 = vst [vmem:[%s202 + $0x38] sm:$0xff] %v2112
      %2129 = vst [vmem:[%s202 + $0x40] sm:$0xff] %v2113
      %2130 = vst [vmem:[%s202 + $0x48] sm:$0xff] %v2114
      %2131 = vst [vmem:[%s202 + $0x50] sm:$0xff] %v2115
      %2132 = vst [vmem:[%s202 + $0x58] sm:$0xff] %v2116
      %2133 = vst [vmem:[%s202 + $0x60] sm:$0xff] %v2117
      %2134 = vst [vmem:[%s202 + $0x68] sm:$0xff] %v2118
      %2135 = vst [vmem:[%s202 + $0x70] sm:$0xff] %v2119
      %2136 = vst [vmem:[%s202 + $0x78] sm:$0xff] %v2120
      %s2137 = smul.u32 16, %s15
      %p2138 = scmp.lt.s32.totalorder %s2137, 31
      %s2139 = scalar_select %p2138, %s2137, 31
      %s2140 = smul.addr %s2139, 8
      %s2141 = scalar_lea.vmem %s4, %s2140
      // Predicated region
      $region37: #{gcn_merge_forward.8} parent=35 // pred_check
        %p2142 = pneg %p122
      $region38: #{gcn_merge_forward.8} parent=35 // pred_check_branch
        %2144 = sbr.rel (%p2142) target = $region40
      $region39: #{gcn_merge_forward.8} parent=35 // pred_region
        %s2145 = smul.u32 16, %s15
      $region40: #{gcn_merge_forward.8} parent=35 // pred_fallthru
        _
    $region36: #{gcn_merge_forward.8} parent=5 // pred_fallthru
      _
    %p2146 = scmp.le.s32.totalorder 2, %s10
    // Predicated region
    $region41: #{gcn_merge_forward.8} parent=5 // pred_check
      %p2147 = pneg %p2146
    $region42: #{gcn_merge_forward.8} parent=5 // pred_check_branch
      %2149 = sbr.rel (%p2147) target = $region44
    $region43: #{gcn_merge_forward.8} parent=5 // pred_region
      %s2150 = ssub.s32 %s10, 2
      // Predicated region
      $region45: #{gcn_merge_forward.8} parent=43 // pred_check
        %p2151 = pneg %p128
      $region46: #{gcn_merge_forward.8} parent=43 // pred_check_branch
        %2153 = sbr.rel (%p2151) target = $region48
      $region47: #{gcn_merge_forward.8} parent=43 // pred_region
        %s2154 = smul.u32 16, %s16
        %p2155 = scmp.lt.s32.totalorder %s2154, 31
        %s2156 = scalar_select %p2155, %s2154, 31
        %s2157 = smul.addr %s2156, 8
        %s2158 = scalar_lea.vmem %s4, %s2157
      $region48: #{gcn_merge_forward.8} parent=43 // pred_fallthru
        _
    $region44: #{gcn_merge_forward.8} parent=5 // pred_fallthru
      _
  $region6: #{gcn_merge_forward.8} parent=0 // loop_footer
    %s14 = sadd.s32 1, %s10
  $region7: #{gcn_merge_forward.8} parent=0 // loop_footer_branch
    %9 = sbr.rel target = $region3
  $region8: #{gcn_merge_forward.8} parent=0 // loop_exit
    _

</llo_original>
